<compile_context>
chip_gen: v7x
topology: tpu7x:2x2x1
jax: 0.10.0
libtpu: 0.0.40
codegen_flags: <defaults>
</compile_context>

<pallas_src>
import math

import jax
import jax.numpy as jnp
from jax.experimental import pallas as pl
from jax.experimental.pallas import tpu as pltpu

# Small, module-consistent sizes.
BATCH = 2
SEQ = 8
NUM_HIDDENS = 32
FFN_NUM_HIDDENS = 64
NUM_HEADS = 4
NUM_BLKS = 2
LN_EPS = 1e-5  # PyTorch nn.LayerNorm default eps


def _layernorm(z, gamma, beta):
    mean = jnp.mean(z, axis=-1, keepdims=True)
    var = jnp.mean((z - mean) ** 2, axis=-1, keepdims=True)  # biased var, as PyTorch
    return (z - mean) * jax.lax.rsqrt(var + LN_EPS) * gamma + beta


def encoder_kernel(x_ref, wqkv_ref, wo_ref, g1_ref, be1_ref,
                   w1_ref, b1_ref, w2_ref, b2_ref, g2_ref, be2_ref, out_ref):
    """Full NUM_BLKS-block encoder stack on the flattened (B*S, D) token matrix."""
    x = x_ref[...]                            # (BS, D) f32 residual stream
    BS, D = x.shape
    H = NUM_HEADS
    dh = D // H
    B = BS // SEQ
    scale = 1.0 / math.sqrt(dh)

    for blk in range(NUM_BLKS):               # static unroll; all weights VMEM-resident
        wqkv = wqkv_ref[blk]                  # (D, 3D)  bf16, = [Wq | Wk | Wv]
        wo = wo_ref[blk]                      # (D, D)   bf16

        # ---- Multi-head self-attention ------------------------------------
        # Fused QKV projection on all B*S rows: one wide MXU push (16 x 32 @ 32 x 96).
        qkv = jnp.dot(x.astype(jnp.bfloat16), wqkv,
                      preferred_element_type=jnp.float32)            # (BS, 3D) f32

        # Head split: (BS, 3D) -> (B, S, 3H, dh) -> (B, 3H, S, dh).  One transpose
        # per block (merged over the whole batch), then cheap leading-dim merges.
        qkv = jnp.swapaxes(qkv.reshape(B, SEQ, 3 * H, dh), 1, 2)     # (B, 3H, S, dh)
        q = (qkv[:, 0:H] * scale).reshape(B * H, SEQ, dh)            # (BH, S, dh) f32
        k = qkv[:, H:2 * H].reshape(B * H, SEQ, dh)
        v = qkv[:, 2 * H:3 * H].reshape(B * H, SEQ, dh)

        # Scaled dot-product attention, batched over B*H in one contraction each.
        s = jnp.einsum('hqd,hkd->hqk',
                       q.astype(jnp.bfloat16), k.astype(jnp.bfloat16),
                       preferred_element_type=jnp.float32)           # (BH, S, S) f32
        s = s - jnp.max(s, axis=-1, keepdims=True)
        e = jnp.exp(s)
        p_attn = e * pl.reciprocal(jnp.sum(e, axis=-1, keepdims=True), approx=True)

        o = jnp.einsum('hqk,hkd->hqd',
                       p_attn.astype(jnp.bfloat16), v.astype(jnp.bfloat16),
                       preferred_element_type=jnp.float32)           # (BH, S, dh) f32
        # Head concat: (BH, S, dh) -> (B, S, H, dh) -> (BS, D).  One transpose per block.
        o = jnp.swapaxes(o.reshape(B, H, SEQ, dh), 1, 2).reshape(BS, D)
        attn_out = jnp.dot(o.astype(jnp.bfloat16), wo,
                           preferred_element_type=jnp.float32)       # (BS, D) f32

        # ---- AddNorm 1 (dropout omitted: eval mode) -------------------------
        y = _layernorm(x + attn_out, g1_ref[blk], be1_ref[blk])

        # ---- Position-wise FFN: Dense(D->F) -> ReLU -> Dense(F->D) ----------
        hdn = jnp.maximum(
            jnp.dot(y.astype(jnp.bfloat16), w1_ref[blk],
                    preferred_element_type=jnp.float32) + b1_ref[blk], 0.0)
        f = jnp.dot(hdn.astype(jnp.bfloat16), w2_ref[blk],
                    preferred_element_type=jnp.float32) + b2_ref[blk]

        # ---- AddNorm 2 -> residual stream for the next block ----------------
        x = _layernorm(y + f, g2_ref[blk], be2_ref[blk])

    out_ref[...] = x


def vision_transformer_encoder(x, params):
    """Forward of VisionTransformerEncoder: one pallas_call, no grid, for the stack."""
    B, S, D = x.shape
    x2d = x.reshape(B * S, D)                  # fold batch into matmul rows (free)

    param_order = ("wqkv", "wo", "g1", "be1", "w1", "b1", "w2", "b2", "g2", "be2")
    args = [params[name] for name in param_order]

    vmem = pl.BlockSpec(memory_space=pltpu.MemorySpace.VMEM)
    out2d = pl.pallas_call(
        encoder_kernel,
        out_shape=jax.ShapeDtypeStruct((B * S, D), jnp.float32),
        in_specs=[vmem] * (1 + len(args)),
        out_specs=vmem,
    )(x2d, *args)
    return out2d.reshape(B, S, D)


def init_params(key):
    """Deterministic synthetic parameters, stacked over the block dimension."""
    D, F = NUM_HIDDENS, FFN_NUM_HIDDENS
    assert D % NUM_HEADS == 0, "num_hiddens must be divisible by num_heads"
    std = 0.05
    wqkv, wo, w1, w2 = [], [], [], []
    for i in range(NUM_BLKS):
        k = jax.random.fold_in(key, i)
        ks = jax.random.split(k, 6)
        wq = jax.random.normal(ks[0], (D, D), jnp.float32) * std
        wk = jax.random.normal(ks[1], (D, D), jnp.float32) * std
        wv = jax.random.normal(ks[2], (D, D), jnp.float32) * std
        wqkv.append(jnp.concatenate([wq, wk, wv], axis=1))           # (D, 3D)
        wo.append(jax.random.normal(ks[3], (D, D), jnp.float32) * std)
        w1.append(jax.random.normal(ks[4], (D, F), jnp.float32) * std)
        w2.append(jax.random.normal(ks[5], (F, D), jnp.float32) * std)
    # Matmul weights in bf16 (MXU-native); LN params and biases stay f32.
    return dict(
        wqkv=jnp.stack(wqkv).astype(jnp.bfloat16),                   # (NB, D, 3D)
        wo=jnp.stack(wo).astype(jnp.bfloat16),                       # (NB, D, D)
        g1=jnp.ones((NUM_BLKS, 1, D), jnp.float32),
        be1=jnp.zeros((NUM_BLKS, 1, D), jnp.float32),
        w1=jnp.stack(w1).astype(jnp.bfloat16),                       # (NB, D, F)
        b1=jnp.zeros((NUM_BLKS, 1, F), jnp.float32),
        w2=jnp.stack(w2).astype(jnp.bfloat16),                       # (NB, F, D)
        b2=jnp.zeros((NUM_BLKS, 1, D), jnp.float32),
        g2=jnp.ones((NUM_BLKS, 1, D), jnp.float32),
        be2=jnp.zeros((NUM_BLKS, 1, D), jnp.float32),
    )


if __name__ == "__main__":
    key = jax.random.PRNGKey(0)
    x_key, p_key = jax.random.split(key)

    x = jax.random.normal(x_key, (BATCH, SEQ, NUM_HIDDENS), jnp.float32)
    params = init_params(p_key)

    out = vision_transformer_encoder(x, params)
    out = jax.block_until_ready(out)

    assert out.shape == (BATCH, SEQ, NUM_HIDDENS)
    assert jnp.isfinite(out).all()
    print("KERNEL_OK")
</pallas_src>

<mosaic_0001>
module attributes {stable_mosaic.version = 11 : i64} {
  func.func @encoder_kernel(%arg0: memref<16x32xf32, #tpu.memory_space<vmem>>, %arg1: memref<2x32x96xbf16, #tpu.memory_space<vmem>>, %arg2: memref<2x32x32xbf16, #tpu.memory_space<vmem>>, %arg3: memref<2x1x32xf32, #tpu.memory_space<vmem>>, %arg4: memref<2x1x32xf32, #tpu.memory_space<vmem>>, %arg5: memref<2x32x64xbf16, #tpu.memory_space<vmem>>, %arg6: memref<2x1x64xf32, #tpu.memory_space<vmem>>, %arg7: memref<2x64x32xbf16, #tpu.memory_space<vmem>>, %arg8: memref<2x1x32xf32, #tpu.memory_space<vmem>>, %arg9: memref<2x1x32xf32, #tpu.memory_space<vmem>>, %arg10: memref<2x1x32xf32, #tpu.memory_space<vmem>>, %arg11: memref<16x32xf32, #tpu.memory_space<vmem>>) attributes {dimension_semantics = [], scalar_prefetch = 0 : i64, scratch_operands = 0 : i64, tpu.core_type = #tpu.core_type<tc>} {
    %c0 = arith.constant 0 : index
    %c0_0 = arith.constant 0 : index
    %0 = vector.load %arg0[%c0, %c0_0] : memref<16x32xf32, #tpu.memory_space<vmem>>, vector<16x32xf32>
    %c0_1 = arith.constant 0 : index
    %c0_2 = arith.constant 0 : index
    %c0_3 = arith.constant 0 : index
    %1 = vector.load %arg1[%c0_1, %c0_2, %c0_3] : memref<2x32x96xbf16, #tpu.memory_space<vmem>>, vector<1x32x96xbf16>
    %2 = vector.shape_cast %1 : vector<1x32x96xbf16> to vector<32x96xbf16>
    %c0_4 = arith.constant 0 : index
    %c0_5 = arith.constant 0 : index
    %c0_6 = arith.constant 0 : index
    %3 = vector.load %arg2[%c0_4, %c0_5, %c0_6] : memref<2x32x32xbf16, #tpu.memory_space<vmem>>, vector<1x32x32xbf16>
    %4 = vector.shape_cast %3 : vector<1x32x32xbf16> to vector<32x32xbf16>
    %5 = arith.truncf %0 : vector<16x32xf32> to vector<16x32xbf16>
    %cst = arith.constant dense<0.000000e+00> : vector<16x96xf32>
    %6 = tpu.matmul %5, %2, %cst {dimension_numbers = #tpu.dot_dimension_numbers<[1], [0], [0], [1], [0, 0, 1, 1], [], []>} : vector<16x32xbf16>, vector<32x96xbf16>, vector<16x96xf32> -> vector<16x96xf32>
    %7 = vector.shape_cast %6 : vector<16x96xf32> to vector<2x8x12x8xf32>
    %8 = tpu.transpose %7, [0, 2, 1, 3] : vector<2x8x12x8xf32> -> vector<2x12x8x8xf32>
    %9 = vector.extract_strided_slice %8 {offsets = [0, 0, 0, 0], sizes = [2, 4, 8, 8], strides = [1, 1, 1, 1]} : vector<2x12x8x8xf32> to vector<2x4x8x8xf32>
    %cst_7 = arith.constant 0.353553385 : f32
    %10 = vector.broadcast %cst_7 : f32 to vector<2x4x8x8xf32>
    %11 = arith.mulf %9, %10 : vector<2x4x8x8xf32>
    %12 = vector.shape_cast %11 : vector<2x4x8x8xf32> to vector<8x8x8xf32>
    %13 = vector.extract_strided_slice %8 {offsets = [0, 4, 0, 0], sizes = [2, 4, 8, 8], strides = [1, 1, 1, 1]} : vector<2x12x8x8xf32> to vector<2x4x8x8xf32>
    %14 = vector.shape_cast %13 : vector<2x4x8x8xf32> to vector<8x8x8xf32>
    %15 = vector.extract_strided_slice %8 {offsets = [0, 8, 0, 0], sizes = [2, 4, 8, 8], strides = [1, 1, 1, 1]} : vector<2x12x8x8xf32> to vector<2x4x8x8xf32>
    %16 = vector.shape_cast %15 : vector<2x4x8x8xf32> to vector<8x8x8xf32>
    %17 = arith.truncf %12 : vector<8x8x8xf32> to vector<8x8x8xbf16>
    %18 = arith.truncf %14 : vector<8x8x8xf32> to vector<8x8x8xbf16>
    "tpu.trace_start"() <{level = 10 : i32, message = "hqd,hkd->hqk"}> : () -> ()
    %cst_8 = arith.constant dense<0.000000e+00> : vector<8x8x8xf32>
    %19 = tpu.matmul %17, %18, %cst_8 {dimension_numbers = #tpu.dot_dimension_numbers<[2], [2], [1], [1], [0, 0, 0, 1, 1, 1], [0], [0]>} : vector<8x8x8xbf16>, vector<8x8x8xbf16>, vector<8x8x8xf32> -> vector<8x8x8xf32>
    "tpu.trace_stop"() : () -> ()
    %cst_9 = arith.constant dense<0xFF800000> : vector<8x8xf32>
    %20 = vector.multi_reduction <maximumf>, %19, %cst_9 [2] : vector<8x8x8xf32> to vector<8x8xf32>
    %21 = vector.shape_cast %20 : vector<8x8xf32> to vector<8x8x1xf32>
    %22 = vector.broadcast %21 : vector<8x8x1xf32> to vector<8x8x8xf32>
    %23 = arith.subf %19, %22 : vector<8x8x8xf32>
    %24 = math.exp %23 : vector<8x8x8xf32>
    %cst_10 = arith.constant dense<0.000000e+00> : vector<8x8xf32>
    %25 = vector.multi_reduction <add>, %24, %cst_10 [2] : vector<8x8x8xf32> to vector<8x8xf32>
    %26 = vector.shape_cast %25 : vector<8x8xf32> to vector<8x8x1xf32>
    %27 = tpu.reciprocal %26 {approx = true} : vector<8x8x1xf32> -> vector<8x8x1xf32>
    %28 = vector.broadcast %27 : vector<8x8x1xf32> to vector<8x8x8xf32>
    %29 = arith.mulf %24, %28 : vector<8x8x8xf32>
    %30 = arith.truncf %29 : vector<8x8x8xf32> to vector<8x8x8xbf16>
    %31 = arith.truncf %16 : vector<8x8x8xf32> to vector<8x8x8xbf16>
    "tpu.trace_start"() <{level = 10 : i32, message = "hqk,hkd->hqd"}> : () -> ()
    %cst_11 = arith.constant dense<0.000000e+00> : vector<8x8x8xf32>
    %32 = tpu.matmul %30, %31, %cst_11 {dimension_numbers = #tpu.dot_dimension_numbers<[2], [1], [1], [2], [0, 0, 0, 1, 1, 2], [0], [0]>} : vector<8x8x8xbf16>, vector<8x8x8xbf16>, vector<8x8x8xf32> -> vector<8x8x8xf32>
    "tpu.trace_stop"() : () -> ()
    %33 = vector.shape_cast %32 : vector<8x8x8xf32> to vector<2x4x8x8xf32>
    %34 = tpu.transpose %33, [0, 2, 1, 3] : vector<2x4x8x8xf32> -> vector<2x8x4x8xf32>
    %35 = vector.shape_cast %34 : vector<2x8x4x8xf32> to vector<16x32xf32>
    %36 = arith.truncf %35 : vector<16x32xf32> to vector<16x32xbf16>
    %cst_12 = arith.constant dense<0.000000e+00> : vector<16x32xf32>
    %37 = tpu.matmul %36, %4, %cst_12 {dimension_numbers = #tpu.dot_dimension_numbers<[1], [0], [0], [1], [0, 0, 1, 1], [], []>} : vector<16x32xbf16>, vector<32x32xbf16>, vector<16x32xf32> -> vector<16x32xf32>
    %38 = arith.addf %0, %37 : vector<16x32xf32>
    %c0_13 = arith.constant 0 : index
    %c0_14 = arith.constant 0 : index
    %c0_15 = arith.constant 0 : index
    %39 = vector.load %arg3[%c0_13, %c0_14, %c0_15] : memref<2x1x32xf32, #tpu.memory_space<vmem>>, vector<1x1x32xf32>
    %40 = vector.shape_cast %39 : vector<1x1x32xf32> to vector<1x32xf32>
    %c0_16 = arith.constant 0 : index
    %c0_17 = arith.constant 0 : index
    %c0_18 = arith.constant 0 : index
    %41 = vector.load %arg4[%c0_16, %c0_17, %c0_18] : memref<2x1x32xf32, #tpu.memory_space<vmem>>, vector<1x1x32xf32>
    %42 = vector.shape_cast %41 : vector<1x1x32xf32> to vector<1x32xf32>
    %cst_19 = arith.constant dense<0.000000e+00> : vector<16xf32>
    %43 = vector.multi_reduction <add>, %38, %cst_19 [1] : vector<16x32xf32> to vector<16xf32>
    %44 = vector.shape_cast %43 : vector<16xf32> to vector<16x1xf32>
    %cst_20 = arith.constant 3.200000e+01 : f32
    %45 = vector.broadcast %cst_20 : f32 to vector<16x1xf32>
    %46 = arith.divf %44, %45 : vector<16x1xf32>
    %47 = vector.broadcast %46 : vector<16x1xf32> to vector<16x32xf32>
    %48 = arith.subf %38, %47 : vector<16x32xf32>
    %49 = arith.mulf %48, %48 : vector<16x32xf32>
    %cst_21 = arith.constant dense<0.000000e+00> : vector<16xf32>
    %50 = vector.multi_reduction <add>, %49, %cst_21 [1] : vector<16x32xf32> to vector<16xf32>
    %51 = vector.shape_cast %50 : vector<16xf32> to vector<16x1xf32>
    %cst_22 = arith.constant 3.200000e+01 : f32
    %52 = vector.broadcast %cst_22 : f32 to vector<16x1xf32>
    %53 = arith.divf %51, %52 : vector<16x1xf32>
    %54 = vector.broadcast %46 : vector<16x1xf32> to vector<16x32xf32>
    %55 = arith.subf %38, %54 : vector<16x32xf32>
    %cst_23 = arith.constant 9.99999974E-6 : f32
    %56 = vector.broadcast %cst_23 : f32 to vector<16x1xf32>
    %57 = arith.addf %53, %56 : vector<16x1xf32>
    %58 = math.rsqrt %57 : vector<16x1xf32>
    %59 = vector.broadcast %58 : vector<16x1xf32> to vector<16x32xf32>
    %60 = arith.mulf %55, %59 : vector<16x32xf32>
    %61 = vector.broadcast %40 : vector<1x32xf32> to vector<16x32xf32>
    %62 = arith.mulf %60, %61 : vector<16x32xf32>
    %63 = vector.broadcast %42 : vector<1x32xf32> to vector<16x32xf32>
    %64 = arith.addf %62, %63 : vector<16x32xf32>
    %65 = arith.truncf %64 : vector<16x32xf32> to vector<16x32xbf16>
    %c0_24 = arith.constant 0 : index
    %c0_25 = arith.constant 0 : index
    %c0_26 = arith.constant 0 : index
    %66 = vector.load %arg5[%c0_24, %c0_25, %c0_26] : memref<2x32x64xbf16, #tpu.memory_space<vmem>>, vector<1x32x64xbf16>
    %67 = vector.shape_cast %66 : vector<1x32x64xbf16> to vector<32x64xbf16>
    %cst_27 = arith.constant dense<0.000000e+00> : vector<16x64xf32>
    %68 = tpu.matmul %65, %67, %cst_27 {dimension_numbers = #tpu.dot_dimension_numbers<[1], [0], [0], [1], [0, 0, 1, 1], [], []>} : vector<16x32xbf16>, vector<32x64xbf16>, vector<16x64xf32> -> vector<16x64xf32>
    %c0_28 = arith.constant 0 : index
    %c0_29 = arith.constant 0 : index
    %c0_30 = arith.constant 0 : index
    %69 = vector.load %arg6[%c0_28, %c0_29, %c0_30] : memref<2x1x64xf32, #tpu.memory_space<vmem>>, vector<1x1x64xf32>
    %70 = vector.shape_cast %69 : vector<1x1x64xf32> to vector<1x64xf32>
    %71 = vector.broadcast %70 : vector<1x64xf32> to vector<16x64xf32>
    %72 = arith.addf %68, %71 : vector<16x64xf32>
    %cst_31 = arith.constant 0.000000e+00 : f32
    %73 = vector.broadcast %cst_31 : f32 to vector<16x64xf32>
    %74 = arith.maximumf %72, %73 : vector<16x64xf32>
    %75 = arith.truncf %74 : vector<16x64xf32> to vector<16x64xbf16>
    %c0_32 = arith.constant 0 : index
    %c0_33 = arith.constant 0 : index
    %c0_34 = arith.constant 0 : index
    %76 = vector.load %arg7[%c0_32, %c0_33, %c0_34] : memref<2x64x32xbf16, #tpu.memory_space<vmem>>, vector<1x64x32xbf16>
    %77 = vector.shape_cast %76 : vector<1x64x32xbf16> to vector<64x32xbf16>
    %cst_35 = arith.constant dense<0.000000e+00> : vector<16x32xf32>
    %78 = tpu.matmul %75, %77, %cst_35 {dimension_numbers = #tpu.dot_dimension_numbers<[1], [0], [0], [1], [0, 0, 1, 1], [], []>} : vector<16x64xbf16>, vector<64x32xbf16>, vector<16x32xf32> -> vector<16x32xf32>
    %c0_36 = arith.constant 0 : index
    %c0_37 = arith.constant 0 : index
    %c0_38 = arith.constant 0 : index
    %79 = vector.load %arg8[%c0_36, %c0_37, %c0_38] : memref<2x1x32xf32, #tpu.memory_space<vmem>>, vector<1x1x32xf32>
    %80 = vector.shape_cast %79 : vector<1x1x32xf32> to vector<1x32xf32>
    %81 = vector.broadcast %80 : vector<1x32xf32> to vector<16x32xf32>
    %82 = arith.addf %78, %81 : vector<16x32xf32>
    %83 = arith.addf %64, %82 : vector<16x32xf32>
    %c0_39 = arith.constant 0 : index
    %c0_40 = arith.constant 0 : index
    %c0_41 = arith.constant 0 : index
    %84 = vector.load %arg9[%c0_39, %c0_40, %c0_41] : memref<2x1x32xf32, #tpu.memory_space<vmem>>, vector<1x1x32xf32>
    %85 = vector.shape_cast %84 : vector<1x1x32xf32> to vector<1x32xf32>
    %c0_42 = arith.constant 0 : index
    %c0_43 = arith.constant 0 : index
    %c0_44 = arith.constant 0 : index
    %86 = vector.load %arg10[%c0_42, %c0_43, %c0_44] : memref<2x1x32xf32, #tpu.memory_space<vmem>>, vector<1x1x32xf32>
    %87 = vector.shape_cast %86 : vector<1x1x32xf32> to vector<1x32xf32>
    %cst_45 = arith.constant dense<0.000000e+00> : vector<16xf32>
    %88 = vector.multi_reduction <add>, %83, %cst_45 [1] : vector<16x32xf32> to vector<16xf32>
    %89 = vector.shape_cast %88 : vector<16xf32> to vector<16x1xf32>
    %cst_46 = arith.constant 3.200000e+01 : f32
    %90 = vector.broadcast %cst_46 : f32 to vector<16x1xf32>
    %91 = arith.divf %89, %90 : vector<16x1xf32>
    %92 = vector.broadcast %91 : vector<16x1xf32> to vector<16x32xf32>
    %93 = arith.subf %83, %92 : vector<16x32xf32>
    %94 = arith.mulf %93, %93 : vector<16x32xf32>
    %cst_47 = arith.constant dense<0.000000e+00> : vector<16xf32>
    %95 = vector.multi_reduction <add>, %94, %cst_47 [1] : vector<16x32xf32> to vector<16xf32>
    %96 = vector.shape_cast %95 : vector<16xf32> to vector<16x1xf32>
    %cst_48 = arith.constant 3.200000e+01 : f32
    %97 = vector.broadcast %cst_48 : f32 to vector<16x1xf32>
    %98 = arith.divf %96, %97 : vector<16x1xf32>
    %99 = vector.broadcast %91 : vector<16x1xf32> to vector<16x32xf32>
    %100 = arith.subf %83, %99 : vector<16x32xf32>
    %cst_49 = arith.constant 9.99999974E-6 : f32
    %101 = vector.broadcast %cst_49 : f32 to vector<16x1xf32>
    %102 = arith.addf %98, %101 : vector<16x1xf32>
    %103 = math.rsqrt %102 : vector<16x1xf32>
    %104 = vector.broadcast %103 : vector<16x1xf32> to vector<16x32xf32>
    %105 = arith.mulf %100, %104 : vector<16x32xf32>
    %106 = vector.broadcast %85 : vector<1x32xf32> to vector<16x32xf32>
    %107 = arith.mulf %105, %106 : vector<16x32xf32>
    %108 = vector.broadcast %87 : vector<1x32xf32> to vector<16x32xf32>
    %109 = arith.addf %107, %108 : vector<16x32xf32>
    %c1 = arith.constant 1 : index
    %c0_50 = arith.constant 0 : index
    %c0_51 = arith.constant 0 : index
    %110 = vector.load %arg1[%c1, %c0_50, %c0_51] : memref<2x32x96xbf16, #tpu.memory_space<vmem>>, vector<1x32x96xbf16>
    %111 = vector.shape_cast %110 : vector<1x32x96xbf16> to vector<32x96xbf16>
    %c1_52 = arith.constant 1 : index
    %c0_53 = arith.constant 0 : index
    %c0_54 = arith.constant 0 : index
    %112 = vector.load %arg2[%c1_52, %c0_53, %c0_54] : memref<2x32x32xbf16, #tpu.memory_space<vmem>>, vector<1x32x32xbf16>
    %113 = vector.shape_cast %112 : vector<1x32x32xbf16> to vector<32x32xbf16>
    %114 = arith.truncf %109 : vector<16x32xf32> to vector<16x32xbf16>
    %cst_55 = arith.constant dense<0.000000e+00> : vector<16x96xf32>
    %115 = tpu.matmul %114, %111, %cst_55 {dimension_numbers = #tpu.dot_dimension_numbers<[1], [0], [0], [1], [0, 0, 1, 1], [], []>} : vector<16x32xbf16>, vector<32x96xbf16>, vector<16x96xf32> -> vector<16x96xf32>
    %116 = vector.shape_cast %115 : vector<16x96xf32> to vector<2x8x12x8xf32>
    %117 = tpu.transpose %116, [0, 2, 1, 3] : vector<2x8x12x8xf32> -> vector<2x12x8x8xf32>
    %118 = vector.extract_strided_slice %117 {offsets = [0, 0, 0, 0], sizes = [2, 4, 8, 8], strides = [1, 1, 1, 1]} : vector<2x12x8x8xf32> to vector<2x4x8x8xf32>
    %cst_56 = arith.constant 0.353553385 : f32
    %119 = vector.broadcast %cst_56 : f32 to vector<2x4x8x8xf32>
    %120 = arith.mulf %118, %119 : vector<2x4x8x8xf32>
    %121 = vector.shape_cast %120 : vector<2x4x8x8xf32> to vector<8x8x8xf32>
    %122 = vector.extract_strided_slice %117 {offsets = [0, 4, 0, 0], sizes = [2, 4, 8, 8], strides = [1, 1, 1, 1]} : vector<2x12x8x8xf32> to vector<2x4x8x8xf32>
    %123 = vector.shape_cast %122 : vector<2x4x8x8xf32> to vector<8x8x8xf32>
    %124 = vector.extract_strided_slice %117 {offsets = [0, 8, 0, 0], sizes = [2, 4, 8, 8], strides = [1, 1, 1, 1]} : vector<2x12x8x8xf32> to vector<2x4x8x8xf32>
    %125 = vector.shape_cast %124 : vector<2x4x8x8xf32> to vector<8x8x8xf32>
    %126 = arith.truncf %121 : vector<8x8x8xf32> to vector<8x8x8xbf16>
    %127 = arith.truncf %123 : vector<8x8x8xf32> to vector<8x8x8xbf16>
    "tpu.trace_start"() <{level = 10 : i32, message = "hqd,hkd->hqk"}> : () -> ()
    %cst_57 = arith.constant dense<0.000000e+00> : vector<8x8x8xf32>
    %128 = tpu.matmul %126, %127, %cst_57 {dimension_numbers = #tpu.dot_dimension_numbers<[2], [2], [1], [1], [0, 0, 0, 1, 1, 1], [0], [0]>} : vector<8x8x8xbf16>, vector<8x8x8xbf16>, vector<8x8x8xf32> -> vector<8x8x8xf32>
    "tpu.trace_stop"() : () -> ()
    %cst_58 = arith.constant dense<0xFF800000> : vector<8x8xf32>
    %129 = vector.multi_reduction <maximumf>, %128, %cst_58 [2] : vector<8x8x8xf32> to vector<8x8xf32>
    %130 = vector.shape_cast %129 : vector<8x8xf32> to vector<8x8x1xf32>
    %131 = vector.broadcast %130 : vector<8x8x1xf32> to vector<8x8x8xf32>
    %132 = arith.subf %128, %131 : vector<8x8x8xf32>
    %133 = math.exp %132 : vector<8x8x8xf32>
    %cst_59 = arith.constant dense<0.000000e+00> : vector<8x8xf32>
    %134 = vector.multi_reduction <add>, %133, %cst_59 [2] : vector<8x8x8xf32> to vector<8x8xf32>
    %135 = vector.shape_cast %134 : vector<8x8xf32> to vector<8x8x1xf32>
    %136 = tpu.reciprocal %135 {approx = true} : vector<8x8x1xf32> -> vector<8x8x1xf32>
    %137 = vector.broadcast %136 : vector<8x8x1xf32> to vector<8x8x8xf32>
    %138 = arith.mulf %133, %137 : vector<8x8x8xf32>
    %139 = arith.truncf %138 : vector<8x8x8xf32> to vector<8x8x8xbf16>
    %140 = arith.truncf %125 : vector<8x8x8xf32> to vector<8x8x8xbf16>
    "tpu.trace_start"() <{level = 10 : i32, message = "hqk,hkd->hqd"}> : () -> ()
    %cst_60 = arith.constant dense<0.000000e+00> : vector<8x8x8xf32>
    %141 = tpu.matmul %139, %140, %cst_60 {dimension_numbers = #tpu.dot_dimension_numbers<[2], [1], [1], [2], [0, 0, 0, 1, 1, 2], [0], [0]>} : vector<8x8x8xbf16>, vector<8x8x8xbf16>, vector<8x8x8xf32> -> vector<8x8x8xf32>
    "tpu.trace_stop"() : () -> ()
    %142 = vector.shape_cast %141 : vector<8x8x8xf32> to vector<2x4x8x8xf32>
    %143 = tpu.transpose %142, [0, 2, 1, 3] : vector<2x4x8x8xf32> -> vector<2x8x4x8xf32>
    %144 = vector.shape_cast %143 : vector<2x8x4x8xf32> to vector<16x32xf32>
    %145 = arith.truncf %144 : vector<16x32xf32> to vector<16x32xbf16>
    %cst_61 = arith.constant dense<0.000000e+00> : vector<16x32xf32>
    %146 = tpu.matmul %145, %113, %cst_61 {dimension_numbers = #tpu.dot_dimension_numbers<[1], [0], [0], [1], [0, 0, 1, 1], [], []>} : vector<16x32xbf16>, vector<32x32xbf16>, vector<16x32xf32> -> vector<16x32xf32>
    %147 = arith.addf %109, %146 : vector<16x32xf32>
    %c1_62 = arith.constant 1 : index
    %c0_63 = arith.constant 0 : index
    %c0_64 = arith.constant 0 : index
    %148 = vector.load %arg3[%c1_62, %c0_63, %c0_64] : memref<2x1x32xf32, #tpu.memory_space<vmem>>, vector<1x1x32xf32>
    %149 = vector.shape_cast %148 : vector<1x1x32xf32> to vector<1x32xf32>
    %c1_65 = arith.constant 1 : index
    %c0_66 = arith.constant 0 : index
    %c0_67 = arith.constant 0 : index
    %150 = vector.load %arg4[%c1_65, %c0_66, %c0_67] : memref<2x1x32xf32, #tpu.memory_space<vmem>>, vector<1x1x32xf32>
    %151 = vector.shape_cast %150 : vector<1x1x32xf32> to vector<1x32xf32>
    %cst_68 = arith.constant dense<0.000000e+00> : vector<16xf32>
    %152 = vector.multi_reduction <add>, %147, %cst_68 [1] : vector<16x32xf32> to vector<16xf32>
    %153 = vector.shape_cast %152 : vector<16xf32> to vector<16x1xf32>
    %cst_69 = arith.constant 3.200000e+01 : f32
    %154 = vector.broadcast %cst_69 : f32 to vector<16x1xf32>
    %155 = arith.divf %153, %154 : vector<16x1xf32>
    %156 = vector.broadcast %155 : vector<16x1xf32> to vector<16x32xf32>
    %157 = arith.subf %147, %156 : vector<16x32xf32>
    %158 = arith.mulf %157, %157 : vector<16x32xf32>
    %cst_70 = arith.constant dense<0.000000e+00> : vector<16xf32>
    %159 = vector.multi_reduction <add>, %158, %cst_70 [1] : vector<16x32xf32> to vector<16xf32>
    %160 = vector.shape_cast %159 : vector<16xf32> to vector<16x1xf32>
    %cst_71 = arith.constant 3.200000e+01 : f32
    %161 = vector.broadcast %cst_71 : f32 to vector<16x1xf32>
    %162 = arith.divf %160, %161 : vector<16x1xf32>
    %163 = vector.broadcast %155 : vector<16x1xf32> to vector<16x32xf32>
    %164 = arith.subf %147, %163 : vector<16x32xf32>
    %cst_72 = arith.constant 9.99999974E-6 : f32
    %165 = vector.broadcast %cst_72 : f32 to vector<16x1xf32>
    %166 = arith.addf %162, %165 : vector<16x1xf32>
    %167 = math.rsqrt %166 : vector<16x1xf32>
    %168 = vector.broadcast %167 : vector<16x1xf32> to vector<16x32xf32>
    %169 = arith.mulf %164, %168 : vector<16x32xf32>
    %170 = vector.broadcast %149 : vector<1x32xf32> to vector<16x32xf32>
    %171 = arith.mulf %169, %170 : vector<16x32xf32>
    %172 = vector.broadcast %151 : vector<1x32xf32> to vector<16x32xf32>
    %173 = arith.addf %171, %172 : vector<16x32xf32>
    %174 = arith.truncf %173 : vector<16x32xf32> to vector<16x32xbf16>
    %c1_73 = arith.constant 1 : index
    %c0_74 = arith.constant 0 : index
    %c0_75 = arith.constant 0 : index
    %175 = vector.load %arg5[%c1_73, %c0_74, %c0_75] : memref<2x32x64xbf16, #tpu.memory_space<vmem>>, vector<1x32x64xbf16>
    %176 = vector.shape_cast %175 : vector<1x32x64xbf16> to vector<32x64xbf16>
    %cst_76 = arith.constant dense<0.000000e+00> : vector<16x64xf32>
    %177 = tpu.matmul %174, %176, %cst_76 {dimension_numbers = #tpu.dot_dimension_numbers<[1], [0], [0], [1], [0, 0, 1, 1], [], []>} : vector<16x32xbf16>, vector<32x64xbf16>, vector<16x64xf32> -> vector<16x64xf32>
    %c1_77 = arith.constant 1 : index
    %c0_78 = arith.constant 0 : index
    %c0_79 = arith.constant 0 : index
    %178 = vector.load %arg6[%c1_77, %c0_78, %c0_79] : memref<2x1x64xf32, #tpu.memory_space<vmem>>, vector<1x1x64xf32>
    %179 = vector.shape_cast %178 : vector<1x1x64xf32> to vector<1x64xf32>
    %180 = vector.broadcast %179 : vector<1x64xf32> to vector<16x64xf32>
    %181 = arith.addf %177, %180 : vector<16x64xf32>
    %cst_80 = arith.constant 0.000000e+00 : f32
    %182 = vector.broadcast %cst_80 : f32 to vector<16x64xf32>
    %183 = arith.maximumf %181, %182 : vector<16x64xf32>
    %184 = arith.truncf %183 : vector<16x64xf32> to vector<16x64xbf16>
    %c1_81 = arith.constant 1 : index
    %c0_82 = arith.constant 0 : index
    %c0_83 = arith.constant 0 : index
    %185 = vector.load %arg7[%c1_81, %c0_82, %c0_83] : memref<2x64x32xbf16, #tpu.memory_space<vmem>>, vector<1x64x32xbf16>
    %186 = vector.shape_cast %185 : vector<1x64x32xbf16> to vector<64x32xbf16>
    %cst_84 = arith.constant dense<0.000000e+00> : vector<16x32xf32>
    %187 = tpu.matmul %184, %186, %cst_84 {dimension_numbers = #tpu.dot_dimension_numbers<[1], [0], [0], [1], [0, 0, 1, 1], [], []>} : vector<16x64xbf16>, vector<64x32xbf16>, vector<16x32xf32> -> vector<16x32xf32>
    %c1_85 = arith.constant 1 : index
    %c0_86 = arith.constant 0 : index
    %c0_87 = arith.constant 0 : index
    %188 = vector.load %arg8[%c1_85, %c0_86, %c0_87] : memref<2x1x32xf32, #tpu.memory_space<vmem>>, vector<1x1x32xf32>
    %189 = vector.shape_cast %188 : vector<1x1x32xf32> to vector<1x32xf32>
    %190 = vector.broadcast %189 : vector<1x32xf32> to vector<16x32xf32>
    %191 = arith.addf %187, %190 : vector<16x32xf32>
    %192 = arith.addf %173, %191 : vector<16x32xf32>
    %c1_88 = arith.constant 1 : index
    %c0_89 = arith.constant 0 : index
    %c0_90 = arith.constant 0 : index
    %193 = vector.load %arg9[%c1_88, %c0_89, %c0_90] : memref<2x1x32xf32, #tpu.memory_space<vmem>>, vector<1x1x32xf32>
    %194 = vector.shape_cast %193 : vector<1x1x32xf32> to vector<1x32xf32>
    %c1_91 = arith.constant 1 : index
    %c0_92 = arith.constant 0 : index
    %c0_93 = arith.constant 0 : index
    %195 = vector.load %arg10[%c1_91, %c0_92, %c0_93] : memref<2x1x32xf32, #tpu.memory_space<vmem>>, vector<1x1x32xf32>
    %196 = vector.shape_cast %195 : vector<1x1x32xf32> to vector<1x32xf32>
    %cst_94 = arith.constant dense<0.000000e+00> : vector<16xf32>
    %197 = vector.multi_reduction <add>, %192, %cst_94 [1] : vector<16x32xf32> to vector<16xf32>
    %198 = vector.shape_cast %197 : vector<16xf32> to vector<16x1xf32>
    %cst_95 = arith.constant 3.200000e+01 : f32
    %199 = vector.broadcast %cst_95 : f32 to vector<16x1xf32>
    %200 = arith.divf %198, %199 : vector<16x1xf32>
    %201 = vector.broadcast %200 : vector<16x1xf32> to vector<16x32xf32>
    %202 = arith.subf %192, %201 : vector<16x32xf32>
    %203 = arith.mulf %202, %202 : vector<16x32xf32>
    %cst_96 = arith.constant dense<0.000000e+00> : vector<16xf32>
    %204 = vector.multi_reduction <add>, %203, %cst_96 [1] : vector<16x32xf32> to vector<16xf32>
    %205 = vector.shape_cast %204 : vector<16xf32> to vector<16x1xf32>
    %cst_97 = arith.constant 3.200000e+01 : f32
    %206 = vector.broadcast %cst_97 : f32 to vector<16x1xf32>
    %207 = arith.divf %205, %206 : vector<16x1xf32>
    %208 = vector.broadcast %200 : vector<16x1xf32> to vector<16x32xf32>
    %209 = arith.subf %192, %208 : vector<16x32xf32>
    %cst_98 = arith.constant 9.99999974E-6 : f32
    %210 = vector.broadcast %cst_98 : f32 to vector<16x1xf32>
    %211 = arith.addf %207, %210 : vector<16x1xf32>
    %212 = math.rsqrt %211 : vector<16x1xf32>
    %213 = vector.broadcast %212 : vector<16x1xf32> to vector<16x32xf32>
    %214 = arith.mulf %209, %213 : vector<16x32xf32>
    %215 = vector.broadcast %194 : vector<1x32xf32> to vector<16x32xf32>
    %216 = arith.mulf %214, %215 : vector<16x32xf32>
    %217 = vector.broadcast %196 : vector<1x32xf32> to vector<16x32xf32>
    %218 = arith.addf %216, %217 : vector<16x32xf32>
    %c0_99 = arith.constant 0 : index
    %c0_100 = arith.constant 0 : index
    %219 = vector.load %arg11[%c0_99, %c0_100] : memref<16x32xf32, #tpu.memory_space<vmem>>, vector<16x32xf32>
    tpu.vector_store %arg11[%c0_99, %c0_100], %218 {strides = array<i32>} : memref<16x32xf32, #tpu.memory_space<vmem>>, vector<16x32xf32>,
    return
  }
}

</mosaic_0001>

<llo_original>
// kernel: tpu_custom_call.1
$region0: #{tpu_custom_call.1}
  #allocation0 [shape = 'u32[]', space=smem, size = 0x4, offset = 0x4, fixed_abs, tag = 'smem constant byte address 0x4 - core index']
  #allocation1 [shape = 'u32[144,128]{1,0:T(1,128)}', space=vmem, size = 0x12000, scoped, tag = 'internal scratch']
  %s0 = inlined_call_operand.hbm [shape: f32[16,32], index: 0, kind: input, shape index: {}]
  %s1 = inlined_call_operand.vmem [shape: bf16[2,32,96], index: 1, kind: input, shape index: {}]
  %s2 = inlined_call_operand.vmem [shape: bf16[2,32,32], index: 2, kind: input, shape index: {}]
  %s3 = inlined_call_operand.vmem [shape: f32[2,1,32], index: 3, kind: input, shape index: {}]
  %s4 = inlined_call_operand.vmem [shape: f32[2,1,32], index: 4, kind: input, shape index: {}]
  %s5 = inlined_call_operand.vmem [shape: bf16[2,32,64], index: 5, kind: input, shape index: {}]
  %s6 = inlined_call_operand.vmem [shape: f32[2,1,64], index: 6, kind: input, shape index: {}]
  %s7 = inlined_call_operand.vmem [shape: bf16[2,64,32], index: 7, kind: input, shape index: {}]
  %s8 = inlined_call_operand.vmem [shape: f32[2,1,32], index: 8, kind: input, shape index: {}]
  %s9 = inlined_call_operand.vmem [shape: f32[2,1,32], index: 9, kind: input, shape index: {}]
  %s10 = inlined_call_operand.vmem [shape: f32[2,1,32], index: 10, kind: input, shape index: {}]
  %s11 = inlined_call_operand.hbm [shape: f32[16,32], index: 11, kind: output, shape index: {}]
  %s12 = sld [smem:[#allocation0]]
  $region58: #{tpu_custom_call.1} parent=0
    _
  %s14 = ssub.s32 1, %s12
  %s15 = scalar_select 0, %s14, %s12
  $region1: #{tpu_custom_call.1} parent=0
    #allocation2 [shape = 'u8[8192]{0}', space=vmem, size = 0x2000, scoped, tag = 'input window, operand 0, single buffered']
    #allocation3 [shape = 's32[1]{0}', space=sflag, size = 0x4, scoped, tag = 'scoped memory for tpu_custom_call.1']
    #allocation4 [shape = 's32[1]{0}', space=sflag, size = 0x4, scoped, tag = 'scoped memory for tpu_custom_call.1']
    #allocation5 [shape = 'u8[8192]{0}', space=vmem, size = 0x2000, scoped, tag = 'output window, operand 0, single buffered']
    %16 = vsyncpa [#allocation3], 0
    %17 = vsyncpa [#allocation4], 0
    // Predicated region
    $region2: #{tpu_custom_call.1} parent=1 // pred_check
      _
    $region3: #{tpu_custom_call.1} parent=1 // pred_check_branch
      %19 = sbr.rel (0) target = $region5
    $region4: #{tpu_custom_call.1} parent=1 // pred_region
      %s21 = ssub.s32 256, 256
      %22 = vsyncadd [#allocation3], %s21
      %s23 = sshll.u32 [#allocation2], 4
      %s24 = int_to_ptr.vmem [resolvable:$true] %s23
      %29 = dma.hbm_to_vmem [thread:$0]  %s0, 256, %s24, [#allocation3], 128, 128, 8
    $region5: #{tpu_custom_call.1} parent=1 // pred_fallthru
      _
    // Predicated region
    $region6: #{tpu_custom_call.1} parent=1 // pred_check
      _
    $region7: #{tpu_custom_call.1} parent=1 // pred_check_branch
      %31 = sbr.rel (0) target = $region9
    $region8: #{tpu_custom_call.1} parent=1 // pred_region
      _
    $region9: #{tpu_custom_call.1} parent=1 // pred_fallthru
      _
    // Predicated region
    $region10: #{tpu_custom_call.1} parent=1 // pred_check
      _
    $region11: #{tpu_custom_call.1} parent=1 // pred_check_branch
      %33 = sbr.rel (0) target = $region13
    $region12: #{tpu_custom_call.1} parent=1 // pred_region
      _
    $region13: #{tpu_custom_call.1} parent=1 // pred_fallthru
      _
    // Predicated region
    $region14: #{tpu_custom_call.1} parent=1 // pred_check
      _
    $region15: #{tpu_custom_call.1} parent=1 // pred_check_branch
      %35 = sbr.rel (0) target = $region17
    $region16: #{tpu_custom_call.1} parent=1 // pred_region
      _
    $region17: #{tpu_custom_call.1} parent=1 // pred_fallthru
      _
    // Predicated region
    $region18: #{tpu_custom_call.1} parent=1 // pred_check
      _
    $region19: #{tpu_custom_call.1} parent=1 // pred_check_branch
      %37 = sbr.rel (0) target = $region21
    $region20: #{tpu_custom_call.1} parent=1 // pred_region
      _
    $region21: #{tpu_custom_call.1} parent=1 // pred_fallthru
      _
    // Predicated region
    $region22: #{tpu_custom_call.1} parent=1 // pred_check
      _
    $region23: #{tpu_custom_call.1} parent=1 // pred_check_branch
      %39 = sbr.rel (0) target = $region25
    $region24: #{tpu_custom_call.1} parent=1 // pred_region
      _
    $region25: #{tpu_custom_call.1} parent=1 // pred_fallthru
      _
    // Predicated region
    $region26: #{tpu_custom_call.1} parent=1 // pred_check
      _
    $region27: #{tpu_custom_call.1} parent=1 // pred_check_branch
      %41 = sbr.rel (0) target = $region29
    $region28: #{tpu_custom_call.1} parent=1 // pred_region
      _
    $region29: #{tpu_custom_call.1} parent=1 // pred_fallthru
      _
    // Predicated region
    $region30: #{tpu_custom_call.1} parent=1 // pred_check
      _
    $region31: #{tpu_custom_call.1} parent=1 // pred_check_branch
      %43 = sbr.rel (0) target = $region33
    $region32: #{tpu_custom_call.1} parent=1 // pred_region
      _
    $region33: #{tpu_custom_call.1} parent=1 // pred_fallthru
      _
    // Predicated region
    $region34: #{tpu_custom_call.1} parent=1 // pred_check
      _
    $region35: #{tpu_custom_call.1} parent=1 // pred_check_branch
      %45 = sbr.rel (0) target = $region37
    $region36: #{tpu_custom_call.1} parent=1 // pred_region
      _
    $region37: #{tpu_custom_call.1} parent=1 // pred_fallthru
      _
    // Predicated region
    $region38: #{tpu_custom_call.1} parent=1 // pred_check
      _
    $region39: #{tpu_custom_call.1} parent=1 // pred_check_branch
      %47 = sbr.rel (0) target = $region41
    $region40: #{tpu_custom_call.1} parent=1 // pred_region
      _
    $region41: #{tpu_custom_call.1} parent=1 // pred_fallthru
      _
    // Predicated region
    $region42: #{tpu_custom_call.1} parent=1 // pred_check
      _
    $region43: #{tpu_custom_call.1} parent=1 // pred_check_branch
      %49 = sbr.rel (0) target = $region45
    $region44: #{tpu_custom_call.1} parent=1 // pred_region
      _
    $region45: #{tpu_custom_call.1} parent=1 // pred_fallthru
      _
    // Predicated region
    $region46: #{tpu_custom_call.1} parent=1 // pred_check
      _
    $region47: #{tpu_custom_call.1} parent=1 // pred_check_branch
      %51 = sbr.rel (0) target = $region49
    $region48: #{tpu_custom_call.1} parent=1 // pred_region
      %52 = dma.done [#allocation3], 256
    $region49: #{tpu_custom_call.1} parent=1 // pred_fallthru
      _
    %v54 = vld [vmem:[#allocation2] sm:$0xff]
    %v55 = vld [vmem:[#allocation2 + $0x8] sm:$0xff]
    %v56 = vld [vmem:[%s1] sm:$0xf]
    %v57 = vld [vmem:[%s1 + $0x4] sm:$0xf]
    %v58 = vld [vmem:[%s1 + $0x8] sm:$0xf]
    %v59 = vld [vmem:[%s1 + $0xc] sm:$0xf]
    %v60 = vld [vmem:[%s2] sm:$0xf]
    %v61 = vld [vmem:[%s2 + $0x4] sm:$0xf]
    %v62 = vld [vmem:[%s2 + $0x8] sm:$0xf]
    %v63 = vld [vmem:[%s2 + $0xc] sm:$0xf]
    %v64 = vpack.c.bf16 %v55, %v54
    %v69 = vunpack.c.l.b16 %v56
    %v70 = vunpack.c.l.b16 %v57
    %v71 = vunpack.c.l.b16 %v58
    %v72 = vunpack.c.l.b16 %v59
    %v73 = vpack.c.b16 %v70, %v69
    %v74 = vpack.c.b16 %v72, %v71
    %vm77 = vcmask 261120
    %v79 = vsel %vm77, %v64, 0
    %81 = vmatprep.subr.bf16.mxu0 0
    %82 = vmatpush1.bf16.msra.mxu0 %v73
    %83 = vmatprep.subr.bf16.mxu0 0
    %84 = vmatpush1.bf16.msra.mxu0 %v74
    %85 = vmatprep.subr.bf16.mxu0 0
    %86 = vmatpush1.bf16.msra.mxu0 0
    %87 = vmatprep.subr.bf16.mxu0 0
    %88 = vmatpush1.bf16.msra.mxu0 0
    %89 = vmatprep.subr.bf16.mxu0 0
    %90 = vmatpush1.bf16.msra.mxu0 0
    %91 = vmatprep.subr.bf16.mxu0 0
    %92 = vmatpush1.bf16.msra.mxu0 0
    %93 = vmatprep.subr.bf16.mxu0 0
    %94 = vmatpush1.bf16.msra.mxu0 0
    %95 = vmatprep.subr.bf16.mxu0 0
    %96 = vmatpush1.bf16.msra.mxu0 0
    %97 = vmatprep.subr.bf16.mxu0 0
    %98 = vmatpush1.bf16.msra.mxu0 0
    %99 = vmatprep.subr.bf16.mxu0 0
    %100 = vmatpush1.bf16.msra.mxu0 0
    %101 = vmatprep.subr.bf16.mxu0 0
    %102 = vmatpush1.bf16.msra.mxu0 0
    %103 = vmatprep.subr.bf16.mxu0 0
    %104 = vmatpush1.bf16.msra.mxu0 0
    %105 = vmatprep.subr.bf16.mxu0 0
    %106 = vmatpush1.bf16.msra.mxu0 0
    %107 = vmatprep.subr.bf16.mxu0 0
    %108 = vmatpush1.bf16.msra.mxu0 0
    %109 = vmatprep.subr.bf16.mxu0 0
    %110 = vmatpush1.bf16.msra.mxu0 0
    %111 = vmatprep.subr.bf16.mxu0 0
    %112 = vmatpush1.bf16.msra.mxu0 0
    %113 = vmatprep.mubr.bf16.mxu0 0
    %114 = vmatmul.mubr.bf16.gmra.mrb[0].mxu0 %v79
    %v115 = vpop.f32.mrb[0].mxu0
    %v116 = vadd.f32 0.0, %v115
    %v117 = vpop.f32.mrb[0].mxu0
    %v118 = vpop.f32.mrb[0].mxu0
    %v119 = vadd.f32 0.0, %v118
    %v120 = vpop.f32.mrb[0].mxu0
    %121 = vdwg.mxu0
    %124 = vrot.lane.b32.xlu0 %v116, 120
    %v125 = vpop.permute.xlu0 %124
    %126 = vrot.lane.b32.xlu0 %v119, 120
    %v127 = vpop.permute.xlu0 %126
    %130 = vrot.lane.b32.xlu0 %v116, 112
    %v131 = vpop.permute.xlu0 %130
    %132 = vrot.lane.b32.xlu0 %v119, 112
    %v133 = vpop.permute.xlu0 %132
    %136 = vrot.lane.b32.xlu0 %v116, 104
    %v137 = vpop.permute.xlu0 %136
    %138 = vrot.lane.b32.xlu0 %v119, 104
    %v139 = vpop.permute.xlu0 %138
    %142 = vrot.lane.b32.xlu0 %v116, 96
    %v143 = vpop.permute.xlu0 %142
    %144 = vrot.lane.b32.xlu0 %v119, 96
    %v145 = vpop.permute.xlu0 %144
    %148 = vrot.lane.b32.xlu0 %v116, 88
    %v149 = vpop.permute.xlu0 %148
    %150 = vrot.lane.b32.xlu0 %v119, 88
    %v151 = vpop.permute.xlu0 %150
    %154 = vrot.lane.b32.xlu0 %v116, 80
    %v155 = vpop.permute.xlu0 %154
    %156 = vrot.lane.b32.xlu0 %v119, 80
    %v157 = vpop.permute.xlu0 %156
    %160 = vrot.lane.b32.xlu0 %v116, 72
    %v161 = vpop.permute.xlu0 %160
    %162 = vrot.lane.b32.xlu0 %v119, 72
    %v163 = vpop.permute.xlu0 %162
    %166 = vrot.lane.b32.xlu0 %v116, 64
    %v167 = vpop.permute.xlu0 %166
    %168 = vrot.lane.b32.xlu0 %v119, 64
    %v169 = vpop.permute.xlu0 %168
    %172 = vrot.lane.b32.xlu0 %v116, 56
    %v173 = vpop.permute.xlu0 %172
    %174 = vrot.lane.b32.xlu0 %v119, 56
    %v175 = vpop.permute.xlu0 %174
    %178 = vrot.lane.b32.xlu0 %v116, 48
    %v179 = vpop.permute.xlu0 %178
    %180 = vrot.lane.b32.xlu0 %v119, 48
    %v181 = vpop.permute.xlu0 %180
    %184 = vrot.lane.b32.xlu0 %v116, 40
    %v185 = vpop.permute.xlu0 %184
    %186 = vrot.lane.b32.xlu0 %v119, 40
    %v187 = vpop.permute.xlu0 %186
    %v190 = vcombine.low %v116, %v131
    %v191 = vcombine.high %v116, %v131
    %v193 = vunpack.c.l.s4 1983009808
    %v194 = vunpack.c.0.s8 %v193
    %v195 = vlaneseq
    %v196 = vshrl.u32 %v195, 7
    %v197 = vsub.s32 %v194, %v196
    %v198 = vrot.slane %v190, %v197
    %v200 = vunpack.c.l.s4 1983009808
    %v201 = vunpack.c.0.s8 %v200
    %v202 = vlaneseq
    %v203 = vshrl.u32 %v202, 7
    %v204 = vsub.s32 %v201, %v203
    %v205 = vrot.slane %v191, %v204
    %v206 = vcombine.low %v125, %v137
    %v207 = vcombine.high %v125, %v137
    %v209 = vunpack.c.l.s4 1983009808
    %v210 = vunpack.c.0.s8 %v209
    %v211 = vlaneseq
    %v212 = vshrl.u32 %v211, 7
    %v213 = vsub.s32 %v210, %v212
    %v214 = vrot.slane %v206, %v213
    %v216 = vunpack.c.l.s4 1983009808
    %v217 = vunpack.c.0.s8 %v216
    %v218 = vlaneseq
    %v219 = vshrl.u32 %v218, 7
    %v220 = vsub.s32 %v217, %v219
    %v221 = vrot.slane %v207, %v220
    %v222 = vcombine.low %v143, %v155
    %v223 = vcombine.high %v143, %v155
    %v225 = vunpack.c.l.s4 1983009808
    %v226 = vunpack.c.0.s8 %v225
    %v227 = vlaneseq
    %v228 = vshrl.u32 %v227, 7
    %v229 = vsub.s32 %v226, %v228
    %v230 = vrot.slane %v222, %v229
    %v232 = vunpack.c.l.s4 1983009808
    %v233 = vunpack.c.0.s8 %v232
    %v234 = vlaneseq
    %v235 = vshrl.u32 %v234, 7
    %v236 = vsub.s32 %v233, %v235
    %v237 = vrot.slane %v223, %v236
    %v238 = vcombine.low %v149, %v161
    %v239 = vcombine.high %v149, %v161
    %v241 = vunpack.c.l.s4 1983009808
    %v242 = vunpack.c.0.s8 %v241
    %v243 = vlaneseq
    %v244 = vshrl.u32 %v243, 7
    %v245 = vsub.s32 %v242, %v244
    %v246 = vrot.slane %v238, %v245
    %v248 = vunpack.c.l.s4 1983009808
    %v249 = vunpack.c.0.s8 %v248
    %v250 = vlaneseq
    %v251 = vshrl.u32 %v250, 7
    %v252 = vsub.s32 %v249, %v251
    %v253 = vrot.slane %v239, %v252
    %v254 = vcombine.low %v198, %v214
    %v255 = vcombine.high %v198, %v214
    %v257 = vunpack.c.l.s4 1934713408
    %v258 = vunpack.c.0.s8 %v257
    %v259 = vlaneseq
    %v260 = vshrl.u32 %v259, 7
    %v261 = vsub.s32 %v258, %v260
    %v262 = vrot.slane %v254, %v261
    %v264 = vunpack.c.l.s4 1934713408
    %v265 = vunpack.c.0.s8 %v264
    %v266 = vlaneseq
    %v267 = vshrl.u32 %v266, 7
    %v268 = vsub.s32 %v265, %v267
    %v269 = vrot.slane %v255, %v268
    %v270 = vcombine.low %v205, %v221
    %v271 = vcombine.high %v205, %v221
    %v273 = vunpack.c.l.s4 1934713408
    %v274 = vunpack.c.0.s8 %v273
    %v275 = vlaneseq
    %v276 = vshrl.u32 %v275, 7
    %v277 = vsub.s32 %v274, %v276
    %v278 = vrot.slane %v270, %v277
    %v280 = vunpack.c.l.s4 1934713408
    %v281 = vunpack.c.0.s8 %v280
    %v282 = vlaneseq
    %v283 = vshrl.u32 %v282, 7
    %v284 = vsub.s32 %v281, %v283
    %v285 = vrot.slane %v271, %v284
    %v286 = vcombine.low %v230, %v246
    %v287 = vcombine.high %v230, %v246
    %v289 = vunpack.c.l.s4 1934713408
    %v290 = vunpack.c.0.s8 %v289
    %v291 = vlaneseq
    %v292 = vshrl.u32 %v291, 7
    %v293 = vsub.s32 %v290, %v292
    %v294 = vrot.slane %v286, %v293
    %v296 = vunpack.c.l.s4 1934713408
    %v297 = vunpack.c.0.s8 %v296
    %v298 = vlaneseq
    %v299 = vshrl.u32 %v298, 7
    %v300 = vsub.s32 %v297, %v299
    %v301 = vrot.slane %v287, %v300
    %v302 = vcombine.low %v237, %v253
    %v303 = vcombine.high %v237, %v253
    %v305 = vunpack.c.l.s4 1934713408
    %v306 = vunpack.c.0.s8 %v305
    %v307 = vlaneseq
    %v308 = vshrl.u32 %v307, 7
    %v309 = vsub.s32 %v306, %v308
    %v310 = vrot.slane %v302, %v309
    %v312 = vunpack.c.l.s4 1934713408
    %v313 = vunpack.c.0.s8 %v312
    %v314 = vlaneseq
    %v315 = vshrl.u32 %v314, 7
    %v316 = vsub.s32 %v313, %v315
    %v317 = vrot.slane %v303, %v316
    %v318 = vcombine.low %v262, %v294
    %v319 = vcombine.high %v262, %v294
    %v320 = vcombine.low %v269, %v301
    %v321 = vcombine.high %v269, %v301
    %v322 = vcombine.low %v278, %v310
    %v323 = vcombine.high %v278, %v310
    %v324 = vcombine.low %v285, %v317
    %v325 = vcombine.high %v285, %v317
    %v326 = vcombine.low %v167, %v179
    %v327 = vcombine.high %v167, %v179
    %v329 = vunpack.c.l.s4 1983009808
    %v330 = vunpack.c.0.s8 %v329
    %v331 = vlaneseq
    %v332 = vshrl.u32 %v331, 7
    %v333 = vsub.s32 %v330, %v332
    %v334 = vrot.slane %v326, %v333
    %v336 = vunpack.c.l.s4 1983009808
    %v337 = vunpack.c.0.s8 %v336
    %v338 = vlaneseq
    %v339 = vshrl.u32 %v338, 7
    %v340 = vsub.s32 %v337, %v339
    %v341 = vrot.slane %v327, %v340
    %v342 = vcombine.low %v173, %v185
    %v343 = vcombine.high %v173, %v185
    %v345 = vunpack.c.l.s4 1983009808
    %v346 = vunpack.c.0.s8 %v345
    %v347 = vlaneseq
    %v348 = vshrl.u32 %v347, 7
    %v349 = vsub.s32 %v346, %v348
    %v350 = vrot.slane %v342, %v349
    %v352 = vunpack.c.l.s4 1983009808
    %v353 = vunpack.c.0.s8 %v352
    %v354 = vlaneseq
    %v355 = vshrl.u32 %v354, 7
    %v356 = vsub.s32 %v353, %v355
    %v357 = vrot.slane %v343, %v356
    %v358 = vcombine.low %v334, %v350
    %v359 = vcombine.high %v334, %v350
    %v361 = vunpack.c.l.s4 1934713408
    %v362 = vunpack.c.0.s8 %v361
    %v363 = vlaneseq
    %v364 = vshrl.u32 %v363, 7
    %v365 = vsub.s32 %v362, %v364
    %v366 = vrot.slane %v358, %v365
    %v368 = vunpack.c.l.s4 1934713408
    %v369 = vunpack.c.0.s8 %v368
    %v370 = vlaneseq
    %v371 = vshrl.u32 %v370, 7
    %v372 = vsub.s32 %v369, %v371
    %v373 = vrot.slane %v359, %v372
    %v374 = vcombine.low %v341, %v357
    %v375 = vcombine.high %v341, %v357
    %v377 = vunpack.c.l.s4 1934713408
    %v378 = vunpack.c.0.s8 %v377
    %v379 = vlaneseq
    %v380 = vshrl.u32 %v379, 7
    %v381 = vsub.s32 %v378, %v380
    %v382 = vrot.slane %v374, %v381
    %v384 = vunpack.c.l.s4 1934713408
    %v385 = vunpack.c.0.s8 %v384
    %v386 = vlaneseq
    %v387 = vshrl.u32 %v386, 7
    %v388 = vsub.s32 %v385, %v387
    %v389 = vrot.slane %v375, %v388
    %v390 = vcombine.high %v366, 0.0
    %v391 = vcombine.high %v373, 0.0
    %v392 = vcombine.high %v382, 0.0
    %v393 = vcombine.high %v389, 0.0
    %v394 = vcombine.low %v119, %v133
    %v395 = vcombine.high %v119, %v133
    %v397 = vunpack.c.l.s4 1983009808
    %v398 = vunpack.c.0.s8 %v397
    %v399 = vlaneseq
    %v400 = vshrl.u32 %v399, 7
    %v401 = vsub.s32 %v398, %v400
    %v402 = vrot.slane %v394, %v401
    %v404 = vunpack.c.l.s4 1983009808
    %v405 = vunpack.c.0.s8 %v404
    %v406 = vlaneseq
    %v407 = vshrl.u32 %v406, 7
    %v408 = vsub.s32 %v405, %v407
    %v409 = vrot.slane %v395, %v408
    %v410 = vcombine.low %v127, %v139
    %v411 = vcombine.high %v127, %v139
    %v413 = vunpack.c.l.s4 1983009808
    %v414 = vunpack.c.0.s8 %v413
    %v415 = vlaneseq
    %v416 = vshrl.u32 %v415, 7
    %v417 = vsub.s32 %v414, %v416
    %v418 = vrot.slane %v410, %v417
    %v420 = vunpack.c.l.s4 1983009808
    %v421 = vunpack.c.0.s8 %v420
    %v422 = vlaneseq
    %v423 = vshrl.u32 %v422, 7
    %v424 = vsub.s32 %v421, %v423
    %v425 = vrot.slane %v411, %v424
    %v426 = vcombine.low %v145, %v157
    %v427 = vcombine.high %v145, %v157
    %v429 = vunpack.c.l.s4 1983009808
    %v430 = vunpack.c.0.s8 %v429
    %v431 = vlaneseq
    %v432 = vshrl.u32 %v431, 7
    %v433 = vsub.s32 %v430, %v432
    %v434 = vrot.slane %v426, %v433
    %v436 = vunpack.c.l.s4 1983009808
    %v437 = vunpack.c.0.s8 %v436
    %v438 = vlaneseq
    %v439 = vshrl.u32 %v438, 7
    %v440 = vsub.s32 %v437, %v439
    %v441 = vrot.slane %v427, %v440
    %v442 = vcombine.low %v151, %v163
    %v443 = vcombine.high %v151, %v163
    %v445 = vunpack.c.l.s4 1983009808
    %v446 = vunpack.c.0.s8 %v445
    %v447 = vlaneseq
    %v448 = vshrl.u32 %v447, 7
    %v449 = vsub.s32 %v446, %v448
    %v450 = vrot.slane %v442, %v449
    %v452 = vunpack.c.l.s4 1983009808
    %v453 = vunpack.c.0.s8 %v452
    %v454 = vlaneseq
    %v455 = vshrl.u32 %v454, 7
    %v456 = vsub.s32 %v453, %v455
    %v457 = vrot.slane %v443, %v456
    %v458 = vcombine.low %v402, %v418
    %v459 = vcombine.high %v402, %v418
    %v461 = vunpack.c.l.s4 1934713408
    %v462 = vunpack.c.0.s8 %v461
    %v463 = vlaneseq
    %v464 = vshrl.u32 %v463, 7
    %v465 = vsub.s32 %v462, %v464
    %v466 = vrot.slane %v458, %v465
    %v468 = vunpack.c.l.s4 1934713408
    %v469 = vunpack.c.0.s8 %v468
    %v470 = vlaneseq
    %v471 = vshrl.u32 %v470, 7
    %v472 = vsub.s32 %v469, %v471
    %v473 = vrot.slane %v459, %v472
    %v474 = vcombine.low %v409, %v425
    %v475 = vcombine.high %v409, %v425
    %v477 = vunpack.c.l.s4 1934713408
    %v478 = vunpack.c.0.s8 %v477
    %v479 = vlaneseq
    %v480 = vshrl.u32 %v479, 7
    %v481 = vsub.s32 %v478, %v480
    %v482 = vrot.slane %v474, %v481
    %v484 = vunpack.c.l.s4 1934713408
    %v485 = vunpack.c.0.s8 %v484
    %v486 = vlaneseq
    %v487 = vshrl.u32 %v486, 7
    %v488 = vsub.s32 %v485, %v487
    %v489 = vrot.slane %v475, %v488
    %v490 = vcombine.low %v434, %v450
    %v491 = vcombine.high %v434, %v450
    %v493 = vunpack.c.l.s4 1934713408
    %v494 = vunpack.c.0.s8 %v493
    %v495 = vlaneseq
    %v496 = vshrl.u32 %v495, 7
    %v497 = vsub.s32 %v494, %v496
    %v498 = vrot.slane %v490, %v497
    %v500 = vunpack.c.l.s4 1934713408
    %v501 = vunpack.c.0.s8 %v500
    %v502 = vlaneseq
    %v503 = vshrl.u32 %v502, 7
    %v504 = vsub.s32 %v501, %v503
    %v505 = vrot.slane %v491, %v504
    %v506 = vcombine.low %v441, %v457
    %v507 = vcombine.high %v441, %v457
    %v509 = vunpack.c.l.s4 1934713408
    %v510 = vunpack.c.0.s8 %v509
    %v511 = vlaneseq
    %v512 = vshrl.u32 %v511, 7
    %v513 = vsub.s32 %v510, %v512
    %v514 = vrot.slane %v506, %v513
    %v516 = vunpack.c.l.s4 1934713408
    %v517 = vunpack.c.0.s8 %v516
    %v518 = vlaneseq
    %v519 = vshrl.u32 %v518, 7
    %v520 = vsub.s32 %v517, %v519
    %v521 = vrot.slane %v507, %v520
    %v522 = vcombine.low %v466, %v498
    %v523 = vcombine.high %v466, %v498
    %v524 = vcombine.low %v473, %v505
    %v525 = vcombine.high %v473, %v505
    %v526 = vcombine.low %v482, %v514
    %v527 = vcombine.high %v482, %v514
    %v528 = vcombine.low %v489, %v521
    %v529 = vcombine.high %v489, %v521
    %v530 = vcombine.low %v169, %v181
    %v531 = vcombine.high %v169, %v181
    %v533 = vunpack.c.l.s4 1983009808
    %v534 = vunpack.c.0.s8 %v533
    %v535 = vlaneseq
    %v536 = vshrl.u32 %v535, 7
    %v537 = vsub.s32 %v534, %v536
    %v538 = vrot.slane %v530, %v537
    %v540 = vunpack.c.l.s4 1983009808
    %v541 = vunpack.c.0.s8 %v540
    %v542 = vlaneseq
    %v543 = vshrl.u32 %v542, 7
    %v544 = vsub.s32 %v541, %v543
    %v545 = vrot.slane %v531, %v544
    %v546 = vcombine.low %v175, %v187
    %v547 = vcombine.high %v175, %v187
    %v549 = vunpack.c.l.s4 1983009808
    %v550 = vunpack.c.0.s8 %v549
    %v551 = vlaneseq
    %v552 = vshrl.u32 %v551, 7
    %v553 = vsub.s32 %v550, %v552
    %v554 = vrot.slane %v546, %v553
    %v556 = vunpack.c.l.s4 1983009808
    %v557 = vunpack.c.0.s8 %v556
    %v558 = vlaneseq
    %v559 = vshrl.u32 %v558, 7
    %v560 = vsub.s32 %v557, %v559
    %v561 = vrot.slane %v547, %v560
    %v562 = vcombine.low %v538, %v554
    %v563 = vcombine.high %v538, %v554
    %v565 = vunpack.c.l.s4 1934713408
    %v566 = vunpack.c.0.s8 %v565
    %v567 = vlaneseq
    %v568 = vshrl.u32 %v567, 7
    %v569 = vsub.s32 %v566, %v568
    %v570 = vrot.slane %v562, %v569
    %v572 = vunpack.c.l.s4 1934713408
    %v573 = vunpack.c.0.s8 %v572
    %v574 = vlaneseq
    %v575 = vshrl.u32 %v574, 7
    %v576 = vsub.s32 %v573, %v575
    %v577 = vrot.slane %v563, %v576
    %v578 = vcombine.low %v545, %v561
    %v579 = vcombine.high %v545, %v561
    %v581 = vunpack.c.l.s4 1934713408
    %v582 = vunpack.c.0.s8 %v581
    %v583 = vlaneseq
    %v584 = vshrl.u32 %v583, 7
    %v585 = vsub.s32 %v582, %v584
    %v586 = vrot.slane %v578, %v585
    %v588 = vunpack.c.l.s4 1934713408
    %v589 = vunpack.c.0.s8 %v588
    %v590 = vlaneseq
    %v591 = vshrl.u32 %v590, 7
    %v592 = vsub.s32 %v589, %v591
    %v593 = vrot.slane %v579, %v592
    %v594 = vcombine.high %v570, 0.0
    %v595 = vcombine.high %v577, 0.0
    %v596 = vcombine.high %v586, 0.0
    %v597 = vcombine.high %v593, 0.0
    %v598 = vcombine.low %v318, %v320
    %v599 = vcombine.high %v318, %v320
    %v601 = vunpack.c.l.s4 1983009808
    %v602 = vunpack.c.0.s8 %v601
    %v603 = vlaneseq
    %v604 = vshrl.u32 %v603, 7
    %v605 = vsub.s32 %v602, %v604
    %v606 = vrot.slane %v598, %v605
    %v608 = vunpack.c.l.s4 1983009808
    %v609 = vunpack.c.0.s8 %v608
    %v610 = vlaneseq
    %v611 = vshrl.u32 %v610, 7
    %v612 = vsub.s32 %v609, %v611
    %v613 = vrot.slane %v599, %v612
    %v614 = vcombine.low %v319, %v321
    %v615 = vcombine.high %v319, %v321
    %v617 = vunpack.c.l.s4 1983009808
    %v618 = vunpack.c.0.s8 %v617
    %v619 = vlaneseq
    %v620 = vshrl.u32 %v619, 7
    %v621 = vsub.s32 %v618, %v620
    %v622 = vrot.slane %v614, %v621
    %v624 = vunpack.c.l.s4 1983009808
    %v625 = vunpack.c.0.s8 %v624
    %v626 = vlaneseq
    %v627 = vshrl.u32 %v626, 7
    %v628 = vsub.s32 %v625, %v627
    %v629 = vrot.slane %v615, %v628
    %v630 = vcombine.low %v322, %v324
    %v631 = vcombine.high %v322, %v324
    %v633 = vunpack.c.l.s4 1983009808
    %v634 = vunpack.c.0.s8 %v633
    %v635 = vlaneseq
    %v636 = vshrl.u32 %v635, 7
    %v637 = vsub.s32 %v634, %v636
    %v638 = vrot.slane %v630, %v637
    %v640 = vunpack.c.l.s4 1983009808
    %v641 = vunpack.c.0.s8 %v640
    %v642 = vlaneseq
    %v643 = vshrl.u32 %v642, 7
    %v644 = vsub.s32 %v641, %v643
    %v645 = vrot.slane %v631, %v644
    %v646 = vcombine.low %v323, %v325
    %v647 = vcombine.high %v323, %v325
    %v649 = vunpack.c.l.s4 1983009808
    %v650 = vunpack.c.0.s8 %v649
    %v651 = vlaneseq
    %v652 = vshrl.u32 %v651, 7
    %v653 = vsub.s32 %v650, %v652
    %v654 = vrot.slane %v646, %v653
    %v656 = vunpack.c.l.s4 1983009808
    %v657 = vunpack.c.0.s8 %v656
    %v658 = vlaneseq
    %v659 = vshrl.u32 %v658, 7
    %v660 = vsub.s32 %v657, %v659
    %v661 = vrot.slane %v647, %v660
    %v662 = vcombine.low %v606, %v622
    %v663 = vcombine.high %v606, %v622
    %v665 = vunpack.c.l.s4 1934713408
    %v666 = vunpack.c.0.s8 %v665
    %v667 = vlaneseq
    %v668 = vshrl.u32 %v667, 7
    %v669 = vsub.s32 %v666, %v668
    %v670 = vrot.slane %v662, %v669
    %v672 = vunpack.c.l.s4 1934713408
    %v673 = vunpack.c.0.s8 %v672
    %v674 = vlaneseq
    %v675 = vshrl.u32 %v674, 7
    %v676 = vsub.s32 %v673, %v675
    %v677 = vrot.slane %v663, %v676
    %v678 = vcombine.low %v613, %v629
    %v679 = vcombine.high %v613, %v629
    %v681 = vunpack.c.l.s4 1934713408
    %v682 = vunpack.c.0.s8 %v681
    %v683 = vlaneseq
    %v684 = vshrl.u32 %v683, 7
    %v685 = vsub.s32 %v682, %v684
    %v686 = vrot.slane %v678, %v685
    %v688 = vunpack.c.l.s4 1934713408
    %v689 = vunpack.c.0.s8 %v688
    %v690 = vlaneseq
    %v691 = vshrl.u32 %v690, 7
    %v692 = vsub.s32 %v689, %v691
    %v693 = vrot.slane %v679, %v692
    %v694 = vcombine.low %v638, %v654
    %v695 = vcombine.high %v638, %v654
    %v697 = vunpack.c.l.s4 1934713408
    %v698 = vunpack.c.0.s8 %v697
    %v699 = vlaneseq
    %v700 = vshrl.u32 %v699, 7
    %v701 = vsub.s32 %v698, %v700
    %v702 = vrot.slane %v694, %v701
    %v704 = vunpack.c.l.s4 1934713408
    %v705 = vunpack.c.0.s8 %v704
    %v706 = vlaneseq
    %v707 = vshrl.u32 %v706, 7
    %v708 = vsub.s32 %v705, %v707
    %v709 = vrot.slane %v695, %v708
    %v710 = vcombine.low %v645, %v661
    %v711 = vcombine.high %v645, %v661
    %v713 = vunpack.c.l.s4 1934713408
    %v714 = vunpack.c.0.s8 %v713
    %v715 = vlaneseq
    %v716 = vshrl.u32 %v715, 7
    %v717 = vsub.s32 %v714, %v716
    %v718 = vrot.slane %v710, %v717
    %v720 = vunpack.c.l.s4 1934713408
    %v721 = vunpack.c.0.s8 %v720
    %v722 = vlaneseq
    %v723 = vshrl.u32 %v722, 7
    %v724 = vsub.s32 %v721, %v723
    %v725 = vrot.slane %v711, %v724
    %v726 = vcombine.low %v670, %v702
    %v727 = vcombine.high %v670, %v702
    %v728 = vcombine.low %v677, %v709
    %v729 = vcombine.high %v677, %v709
    %v730 = vcombine.low %v686, %v718
    %v731 = vcombine.high %v686, %v718
    %v732 = vcombine.low %v693, %v725
    %v733 = vcombine.high %v693, %v725
    %v734 = vcombine.low %v366, %v373
    %v736 = vunpack.c.l.s4 1983009808
    %v737 = vunpack.c.0.s8 %v736
    %v738 = vlaneseq
    %v739 = vshrl.u32 %v738, 7
    %v740 = vsub.s32 %v737, %v739
    %v741 = vrot.slane %v734, %v740
    %v742 = vcombine.low %v390, %v391
    %v744 = vunpack.c.l.s4 1983009808
    %v745 = vunpack.c.0.s8 %v744
    %v746 = vlaneseq
    %v747 = vshrl.u32 %v746, 7
    %v748 = vsub.s32 %v745, %v747
    %v749 = vrot.slane %v742, %v748
    %v750 = vcombine.low %v382, %v389
    %v752 = vunpack.c.l.s4 1983009808
    %v753 = vunpack.c.0.s8 %v752
    %v754 = vlaneseq
    %v755 = vshrl.u32 %v754, 7
    %v756 = vsub.s32 %v753, %v755
    %v757 = vrot.slane %v750, %v756
    %v758 = vcombine.low %v392, %v393
    %v760 = vunpack.c.l.s4 1983009808
    %v761 = vunpack.c.0.s8 %v760
    %v762 = vlaneseq
    %v763 = vshrl.u32 %v762, 7
    %v764 = vsub.s32 %v761, %v763
    %v765 = vrot.slane %v758, %v764
    %v766 = vcombine.low %v741, %v749
    %v767 = vcombine.high %v741, %v749
    %v769 = vunpack.c.l.s4 1934713408
    %v770 = vunpack.c.0.s8 %v769
    %v771 = vlaneseq
    %v772 = vshrl.u32 %v771, 7
    %v773 = vsub.s32 %v770, %v772
    %v774 = vrot.slane %v766, %v773
    %v776 = vunpack.c.l.s4 1934713408
    %v777 = vunpack.c.0.s8 %v776
    %v778 = vlaneseq
    %v779 = vshrl.u32 %v778, 7
    %v780 = vsub.s32 %v777, %v779
    %v781 = vrot.slane %v767, %v780
    %v782 = vcombine.low %v757, %v765
    %v783 = vcombine.high %v757, %v765
    %v785 = vunpack.c.l.s4 1934713408
    %v786 = vunpack.c.0.s8 %v785
    %v787 = vlaneseq
    %v788 = vshrl.u32 %v787, 7
    %v789 = vsub.s32 %v786, %v788
    %v790 = vrot.slane %v782, %v789
    %v792 = vunpack.c.l.s4 1934713408
    %v793 = vunpack.c.0.s8 %v792
    %v794 = vlaneseq
    %v795 = vshrl.u32 %v794, 7
    %v796 = vsub.s32 %v793, %v795
    %v797 = vrot.slane %v783, %v796
    %v798 = vcombine.low %v774, %v790
    %v799 = vcombine.high %v774, %v790
    %v800 = vcombine.low %v781, %v797
    %v801 = vcombine.high %v781, %v797
    %v802 = vcombine.low %v522, %v524
    %v803 = vcombine.high %v522, %v524
    %v805 = vunpack.c.l.s4 1983009808
    %v806 = vunpack.c.0.s8 %v805
    %v807 = vlaneseq
    %v808 = vshrl.u32 %v807, 7
    %v809 = vsub.s32 %v806, %v808
    %v810 = vrot.slane %v802, %v809
    %v812 = vunpack.c.l.s4 1983009808
    %v813 = vunpack.c.0.s8 %v812
    %v814 = vlaneseq
    %v815 = vshrl.u32 %v814, 7
    %v816 = vsub.s32 %v813, %v815
    %v817 = vrot.slane %v803, %v816
    %v818 = vcombine.low %v523, %v525
    %v819 = vcombine.high %v523, %v525
    %v821 = vunpack.c.l.s4 1983009808
    %v822 = vunpack.c.0.s8 %v821
    %v823 = vlaneseq
    %v824 = vshrl.u32 %v823, 7
    %v825 = vsub.s32 %v822, %v824
    %v826 = vrot.slane %v818, %v825
    %v828 = vunpack.c.l.s4 1983009808
    %v829 = vunpack.c.0.s8 %v828
    %v830 = vlaneseq
    %v831 = vshrl.u32 %v830, 7
    %v832 = vsub.s32 %v829, %v831
    %v833 = vrot.slane %v819, %v832
    %v834 = vcombine.low %v526, %v528
    %v835 = vcombine.high %v526, %v528
    %v837 = vunpack.c.l.s4 1983009808
    %v838 = vunpack.c.0.s8 %v837
    %v839 = vlaneseq
    %v840 = vshrl.u32 %v839, 7
    %v841 = vsub.s32 %v838, %v840
    %v842 = vrot.slane %v834, %v841
    %v844 = vunpack.c.l.s4 1983009808
    %v845 = vunpack.c.0.s8 %v844
    %v846 = vlaneseq
    %v847 = vshrl.u32 %v846, 7
    %v848 = vsub.s32 %v845, %v847
    %v849 = vrot.slane %v835, %v848
    %v850 = vcombine.low %v527, %v529
    %v851 = vcombine.high %v527, %v529
    %v853 = vunpack.c.l.s4 1983009808
    %v854 = vunpack.c.0.s8 %v853
    %v855 = vlaneseq
    %v856 = vshrl.u32 %v855, 7
    %v857 = vsub.s32 %v854, %v856
    %v858 = vrot.slane %v850, %v857
    %v860 = vunpack.c.l.s4 1983009808
    %v861 = vunpack.c.0.s8 %v860
    %v862 = vlaneseq
    %v863 = vshrl.u32 %v862, 7
    %v864 = vsub.s32 %v861, %v863
    %v865 = vrot.slane %v851, %v864
    %v866 = vcombine.low %v810, %v826
    %v867 = vcombine.high %v810, %v826
    %v869 = vunpack.c.l.s4 1934713408
    %v870 = vunpack.c.0.s8 %v869
    %v871 = vlaneseq
    %v872 = vshrl.u32 %v871, 7
    %v873 = vsub.s32 %v870, %v872
    %v874 = vrot.slane %v866, %v873
    %v876 = vunpack.c.l.s4 1934713408
    %v877 = vunpack.c.0.s8 %v876
    %v878 = vlaneseq
    %v879 = vshrl.u32 %v878, 7
    %v880 = vsub.s32 %v877, %v879
    %v881 = vrot.slane %v867, %v880
    %v882 = vcombine.low %v817, %v833
    %v883 = vcombine.high %v817, %v833
    %v885 = vunpack.c.l.s4 1934713408
    %v886 = vunpack.c.0.s8 %v885
    %v887 = vlaneseq
    %v888 = vshrl.u32 %v887, 7
    %v889 = vsub.s32 %v886, %v888
    %v890 = vrot.slane %v882, %v889
    %v892 = vunpack.c.l.s4 1934713408
    %v893 = vunpack.c.0.s8 %v892
    %v894 = vlaneseq
    %v895 = vshrl.u32 %v894, 7
    %v896 = vsub.s32 %v893, %v895
    %v897 = vrot.slane %v883, %v896
    %v898 = vcombine.low %v842, %v858
    %v899 = vcombine.high %v842, %v858
    %v901 = vunpack.c.l.s4 1934713408
    %v902 = vunpack.c.0.s8 %v901
    %v903 = vlaneseq
    %v904 = vshrl.u32 %v903, 7
    %v905 = vsub.s32 %v902, %v904
    %v906 = vrot.slane %v898, %v905
    %v908 = vunpack.c.l.s4 1934713408
    %v909 = vunpack.c.0.s8 %v908
    %v910 = vlaneseq
    %v911 = vshrl.u32 %v910, 7
    %v912 = vsub.s32 %v909, %v911
    %v913 = vrot.slane %v899, %v912
    %v914 = vcombine.low %v849, %v865
    %v915 = vcombine.high %v849, %v865
    %v917 = vunpack.c.l.s4 1934713408
    %v918 = vunpack.c.0.s8 %v917
    %v919 = vlaneseq
    %v920 = vshrl.u32 %v919, 7
    %v921 = vsub.s32 %v918, %v920
    %v922 = vrot.slane %v914, %v921
    %v924 = vunpack.c.l.s4 1934713408
    %v925 = vunpack.c.0.s8 %v924
    %v926 = vlaneseq
    %v927 = vshrl.u32 %v926, 7
    %v928 = vsub.s32 %v925, %v927
    %v929 = vrot.slane %v915, %v928
    %v930 = vcombine.low %v874, %v906
    %v931 = vcombine.high %v874, %v906
    %v932 = vcombine.low %v881, %v913
    %v933 = vcombine.high %v881, %v913
    %v934 = vcombine.low %v890, %v922
    %v935 = vcombine.high %v890, %v922
    %v936 = vcombine.low %v897, %v929
    %v937 = vcombine.high %v897, %v929
    %v938 = vcombine.low %v570, %v577
    %v940 = vunpack.c.l.s4 1983009808
    %v941 = vunpack.c.0.s8 %v940
    %v942 = vlaneseq
    %v943 = vshrl.u32 %v942, 7
    %v944 = vsub.s32 %v941, %v943
    %v945 = vrot.slane %v938, %v944
    %v946 = vcombine.low %v594, %v595
    %v948 = vunpack.c.l.s4 1983009808
    %v949 = vunpack.c.0.s8 %v948
    %v950 = vlaneseq
    %v951 = vshrl.u32 %v950, 7
    %v952 = vsub.s32 %v949, %v951
    %v953 = vrot.slane %v946, %v952
    %v954 = vcombine.low %v586, %v593
    %v956 = vunpack.c.l.s4 1983009808
    %v957 = vunpack.c.0.s8 %v956
    %v958 = vlaneseq
    %v959 = vshrl.u32 %v958, 7
    %v960 = vsub.s32 %v957, %v959
    %v961 = vrot.slane %v954, %v960
    %v962 = vcombine.low %v596, %v597
    %v964 = vunpack.c.l.s4 1983009808
    %v965 = vunpack.c.0.s8 %v964
    %v966 = vlaneseq
    %v967 = vshrl.u32 %v966, 7
    %v968 = vsub.s32 %v965, %v967
    %v969 = vrot.slane %v962, %v968
    %v970 = vcombine.low %v945, %v953
    %v971 = vcombine.high %v945, %v953
    %v973 = vunpack.c.l.s4 1934713408
    %v974 = vunpack.c.0.s8 %v973
    %v975 = vlaneseq
    %v976 = vshrl.u32 %v975, 7
    %v977 = vsub.s32 %v974, %v976
    %v978 = vrot.slane %v970, %v977
    %v980 = vunpack.c.l.s4 1934713408
    %v981 = vunpack.c.0.s8 %v980
    %v982 = vlaneseq
    %v983 = vshrl.u32 %v982, 7
    %v984 = vsub.s32 %v981, %v983
    %v985 = vrot.slane %v971, %v984
    %v986 = vcombine.low %v961, %v969
    %v987 = vcombine.high %v961, %v969
    %v989 = vunpack.c.l.s4 1934713408
    %v990 = vunpack.c.0.s8 %v989
    %v991 = vlaneseq
    %v992 = vshrl.u32 %v991, 7
    %v993 = vsub.s32 %v990, %v992
    %v994 = vrot.slane %v986, %v993
    %v996 = vunpack.c.l.s4 1934713408
    %v997 = vunpack.c.0.s8 %v996
    %v998 = vlaneseq
    %v999 = vshrl.u32 %v998, 7
    %v1000 = vsub.s32 %v997, %v999
    %v1001 = vrot.slane %v987, %v1000
    %v1002 = vcombine.low %v978, %v994
    %v1003 = vcombine.high %v978, %v994
    %v1004 = vcombine.low %v985, %v1001
    %v1005 = vcombine.high %v985, %v1001
    %v1006 = vmul.f32 %v726, 0.35355338
    %v1007 = vmul.f32 %v727, 0.35355338
    %v1008 = vmul.f32 %v728, 0.35355338
    %v1009 = vmul.f32 %v729, 0.35355338
    %v1010 = vmul.f32 %v930, 0.35355338
    %v1011 = vmul.f32 %v931, 0.35355338
    %v1012 = vmul.f32 %v932, 0.35355338
    %v1013 = vmul.f32 %v933, 0.35355338
    %v1014 = vpack.c.bf16 %v1006, %v1006
    %v1015 = vpack.c.bf16 %v1007, %v1007
    %v1016 = vpack.c.bf16 %v1008, %v1008
    %v1017 = vpack.c.bf16 %v1009, %v1009
    %v1018 = vpack.c.bf16 %v1010, %v1010
    %v1019 = vpack.c.bf16 %v1011, %v1011
    %v1020 = vpack.c.bf16 %v1012, %v1012
    %v1021 = vpack.c.bf16 %v1013, %v1013
    %v1022 = vpack.c.bf16 %v730, %v730
    %v1023 = vpack.c.bf16 %v731, %v731
    %v1024 = vpack.c.bf16 %v732, %v732
    %v1025 = vpack.c.bf16 %v733, %v733
    %v1026 = vpack.c.bf16 %v934, %v934
    %v1027 = vpack.c.bf16 %v935, %v935
    %v1028 = vpack.c.bf16 %v936, %v936
    %v1029 = vpack.c.bf16 %v937, %v937
    %vm1030 = vcmask 64512
    %v1032 = vsel %vm1030, %v1014, 0
    %v1035 = vsel %vm1030, %v1022, 0
    %1037 = vmatprep.subr.bf16.mxu0 0
    %1038 = vmatpush1.bf16.xpose.msra.mxu0 %v1035
    %1039 = vmatprep.subr.bf16.mxu0 0
    %1040 = vmatpush1.bf16.xpose.msra.mxu0 0
    %1041 = vmatprep.subr.bf16.mxu0 0
    %1042 = vmatpush1.bf16.xpose.msra.mxu0 0
    %1043 = vmatprep.subr.bf16.mxu0 0
    %1044 = vmatpush1.bf16.xpose.msra.mxu0 0
    %1045 = vmatprep.subr.bf16.mxu0 0
    %1046 = vmatpush1.bf16.xpose.msra.mxu0 0
    %1047 = vmatprep.subr.bf16.mxu0 0
    %1048 = vmatpush1.bf16.xpose.msra.mxu0 0
    %1049 = vmatprep.subr.bf16.mxu0 0
    %1050 = vmatpush1.bf16.xpose.msra.mxu0 0
    %1051 = vmatprep.subr.bf16.mxu0 0
    %1052 = vmatpush1.bf16.xpose.msra.mxu0 0
    %1053 = vmatprep.subr.bf16.mxu0 0
    %1054 = vmatpush1.bf16.xpose.msra.mxu0 0
    %1055 = vmatprep.subr.bf16.mxu0 0
    %1056 = vmatpush1.bf16.xpose.msra.mxu0 0
    %1057 = vmatprep.subr.bf16.mxu0 0
    %1058 = vmatpush1.bf16.xpose.msra.mxu0 0
    %1059 = vmatprep.subr.bf16.mxu0 0
    %1060 = vmatpush1.bf16.xpose.msra.mxu0 0
    %1061 = vmatprep.subr.bf16.mxu0 0
    %1062 = vmatpush1.bf16.xpose.msra.mxu0 0
    %1063 = vmatprep.subr.bf16.mxu0 0
    %1064 = vmatpush1.bf16.xpose.msra.mxu0 0
    %1065 = vmatprep.subr.bf16.mxu0 0
    %1066 = vmatpush1.bf16.xpose.msra.mxu0 0
    %1067 = vmatprep.subr.bf16.mxu0 0
    %1068 = vmatpush1.bf16.xpose.msra.mxu0 0
    %1069 = vmatprep.mubr.bf16.mxu0 0
    %1070 = vmatmul.mubr.bf16.gmra.mrb[0].mxu0 %v1032
    %v1071 = vpop.f32.mrb[0].mxu0
    %v1072 = vadd.f32 0.0, %v1071
    %v1073 = vpop.f32.mrb[0].mxu0
    %v1074 = vpop.f32.mrb[0].mxu0
    %v1075 = vpop.f32.mrb[0].mxu0
    %1076 = vdwg.mxu0
    %v1078 = vsel %vm1030, %v1015, 0
    %v1081 = vsel %vm1030, %v1023, 0
    %1083 = vmatprep.subr.bf16.mxu0 0
    %1084 = vmatpush1.bf16.xpose.msra.mxu0 %v1081
    %1085 = vmatprep.subr.bf16.mxu0 0
    %1086 = vmatpush1.bf16.xpose.msra.mxu0 0
    %1087 = vmatprep.subr.bf16.mxu0 0
    %1088 = vmatpush1.bf16.xpose.msra.mxu0 0
    %1089 = vmatprep.subr.bf16.mxu0 0
    %1090 = vmatpush1.bf16.xpose.msra.mxu0 0
    %1091 = vmatprep.subr.bf16.mxu0 0
    %1092 = vmatpush1.bf16.xpose.msra.mxu0 0
    %1093 = vmatprep.subr.bf16.mxu0 0
    %1094 = vmatpush1.bf16.xpose.msra.mxu0 0
    %1095 = vmatprep.subr.bf16.mxu0 0
    %1096 = vmatpush1.bf16.xpose.msra.mxu0 0
    %1097 = vmatprep.subr.bf16.mxu0 0
    %1098 = vmatpush1.bf16.xpose.msra.mxu0 0
    %1099 = vmatprep.subr.bf16.mxu0 0
    %1100 = vmatpush1.bf16.xpose.msra.mxu0 0
    %1101 = vmatprep.subr.bf16.mxu0 0
    %1102 = vmatpush1.bf16.xpose.msra.mxu0 0
    %1103 = vmatprep.subr.bf16.mxu0 0
    %1104 = vmatpush1.bf16.xpose.msra.mxu0 0
    %1105 = vmatprep.subr.bf16.mxu0 0
    %1106 = vmatpush1.bf16.xpose.msra.mxu0 0
    %1107 = vmatprep.subr.bf16.mxu0 0
    %1108 = vmatpush1.bf16.xpose.msra.mxu0 0
    %1109 = vmatprep.subr.bf16.mxu0 0
    %1110 = vmatpush1.bf16.xpose.msra.mxu0 0
    %1111 = vmatprep.subr.bf16.mxu0 0
    %1112 = vmatpush1.bf16.xpose.msra.mxu0 0
    %1113 = vmatprep.subr.bf16.mxu0 0
    %1114 = vmatpush1.bf16.xpose.msra.mxu0 0
    %1115 = vmatprep.mubr.bf16.mxu0 0
    %1116 = vmatmul.mubr.bf16.gmra.mrb[0].mxu0 %v1078
    %v1117 = vpop.f32.mrb[0].mxu0
    %v1118 = vadd.f32 0.0, %v1117
    %v1119 = vpop.f32.mrb[0].mxu0
    %v1120 = vpop.f32.mrb[0].mxu0
    %v1121 = vpop.f32.mrb[0].mxu0
    %1122 = vdwg.mxu0
    %v1124 = vsel %vm1030, %v1016, 0
    %v1127 = vsel %vm1030, %v1024, 0
    %1129 = vmatprep.subr.bf16.mxu0 0
    %1130 = vmatpush1.bf16.xpose.msra.mxu0 %v1127
    %1131 = vmatprep.subr.bf16.mxu0 0
    %1132 = vmatpush1.bf16.xpose.msra.mxu0 0
    %1133 = vmatprep.subr.bf16.mxu0 0
    %1134 = vmatpush1.bf16.xpose.msra.mxu0 0
    %1135 = vmatprep.subr.bf16.mxu0 0
    %1136 = vmatpush1.bf16.xpose.msra.mxu0 0
    %1137 = vmatprep.subr.bf16.mxu0 0
    %1138 = vmatpush1.bf16.xpose.msra.mxu0 0
    %1139 = vmatprep.subr.bf16.mxu0 0
    %1140 = vmatpush1.bf16.xpose.msra.mxu0 0
    %1141 = vmatprep.subr.bf16.mxu0 0
    %1142 = vmatpush1.bf16.xpose.msra.mxu0 0
    %1143 = vmatprep.subr.bf16.mxu0 0
    %1144 = vmatpush1.bf16.xpose.msra.mxu0 0
    %1145 = vmatprep.subr.bf16.mxu0 0
    %1146 = vmatpush1.bf16.xpose.msra.mxu0 0
    %1147 = vmatprep.subr.bf16.mxu0 0
    %1148 = vmatpush1.bf16.xpose.msra.mxu0 0
    %1149 = vmatprep.subr.bf16.mxu0 0
    %1150 = vmatpush1.bf16.xpose.msra.mxu0 0
    %1151 = vmatprep.subr.bf16.mxu0 0
    %1152 = vmatpush1.bf16.xpose.msra.mxu0 0
    %1153 = vmatprep.subr.bf16.mxu0 0
    %1154 = vmatpush1.bf16.xpose.msra.mxu0 0
    %1155 = vmatprep.subr.bf16.mxu0 0
    %1156 = vmatpush1.bf16.xpose.msra.mxu0 0
    %1157 = vmatprep.subr.bf16.mxu0 0
    %1158 = vmatpush1.bf16.xpose.msra.mxu0 0
    %1159 = vmatprep.subr.bf16.mxu0 0
    %1160 = vmatpush1.bf16.xpose.msra.mxu0 0
    %1161 = vmatprep.mubr.bf16.mxu0 0
    %1162 = vmatmul.mubr.bf16.gmra.mrb[0].mxu0 %v1124
    %v1163 = vpop.f32.mrb[0].mxu0
    %v1164 = vadd.f32 0.0, %v1163
    %v1165 = vpop.f32.mrb[0].mxu0
    %v1166 = vpop.f32.mrb[0].mxu0
    %v1167 = vpop.f32.mrb[0].mxu0
    %1168 = vdwg.mxu0
    %v1170 = vsel %vm1030, %v1017, 0
    %v1173 = vsel %vm1030, %v1025, 0
    %1175 = vmatprep.subr.bf16.mxu0 0
    %1176 = vmatpush1.bf16.xpose.msra.mxu0 %v1173
    %1177 = vmatprep.subr.bf16.mxu0 0
    %1178 = vmatpush1.bf16.xpose.msra.mxu0 0
    %1179 = vmatprep.subr.bf16.mxu0 0
    %1180 = vmatpush1.bf16.xpose.msra.mxu0 0
    %1181 = vmatprep.subr.bf16.mxu0 0
    %1182 = vmatpush1.bf16.xpose.msra.mxu0 0
    %1183 = vmatprep.subr.bf16.mxu0 0
    %1184 = vmatpush1.bf16.xpose.msra.mxu0 0
    %1185 = vmatprep.subr.bf16.mxu0 0
    %1186 = vmatpush1.bf16.xpose.msra.mxu0 0
    %1187 = vmatprep.subr.bf16.mxu0 0
    %1188 = vmatpush1.bf16.xpose.msra.mxu0 0
    %1189 = vmatprep.subr.bf16.mxu0 0
    %1190 = vmatpush1.bf16.xpose.msra.mxu0 0
    %1191 = vmatprep.subr.bf16.mxu0 0
    %1192 = vmatpush1.bf16.xpose.msra.mxu0 0
    %1193 = vmatprep.subr.bf16.mxu0 0
    %1194 = vmatpush1.bf16.xpose.msra.mxu0 0
    %1195 = vmatprep.subr.bf16.mxu0 0
    %1196 = vmatpush1.bf16.xpose.msra.mxu0 0
    %1197 = vmatprep.subr.bf16.mxu0 0
    %1198 = vmatpush1.bf16.xpose.msra.mxu0 0
    %1199 = vmatprep.subr.bf16.mxu0 0
    %1200 = vmatpush1.bf16.xpose.msra.mxu0 0
    %1201 = vmatprep.subr.bf16.mxu0 0
    %1202 = vmatpush1.bf16.xpose.msra.mxu0 0
    %1203 = vmatprep.subr.bf16.mxu0 0
    %1204 = vmatpush1.bf16.xpose.msra.mxu0 0
    %1205 = vmatprep.subr.bf16.mxu0 0
    %1206 = vmatpush1.bf16.xpose.msra.mxu0 0
    %1207 = vmatprep.mubr.bf16.mxu0 0
    %1208 = vmatmul.mubr.bf16.gmra.mrb[0].mxu0 %v1170
    %v1209 = vpop.f32.mrb[0].mxu0
    %v1210 = vadd.f32 0.0, %v1209
    %v1211 = vpop.f32.mrb[0].mxu0
    %v1212 = vpop.f32.mrb[0].mxu0
    %v1213 = vpop.f32.mrb[0].mxu0
    %1214 = vdwg.mxu0
    %v1216 = vsel %vm1030, %v1018, 0
    %v1219 = vsel %vm1030, %v1026, 0
    %1221 = vmatprep.subr.bf16.mxu0 0
    %1222 = vmatpush1.bf16.xpose.msra.mxu0 %v1219
    %1223 = vmatprep.subr.bf16.mxu0 0
    %1224 = vmatpush1.bf16.xpose.msra.mxu0 0
    %1225 = vmatprep.subr.bf16.mxu0 0
    %1226 = vmatpush1.bf16.xpose.msra.mxu0 0
    %1227 = vmatprep.subr.bf16.mxu0 0
    %1228 = vmatpush1.bf16.xpose.msra.mxu0 0
    %1229 = vmatprep.subr.bf16.mxu0 0
    %1230 = vmatpush1.bf16.xpose.msra.mxu0 0
    %1231 = vmatprep.subr.bf16.mxu0 0
    %1232 = vmatpush1.bf16.xpose.msra.mxu0 0
    %1233 = vmatprep.subr.bf16.mxu0 0
    %1234 = vmatpush1.bf16.xpose.msra.mxu0 0
    %1235 = vmatprep.subr.bf16.mxu0 0
    %1236 = vmatpush1.bf16.xpose.msra.mxu0 0
    %1237 = vmatprep.subr.bf16.mxu0 0
    %1238 = vmatpush1.bf16.xpose.msra.mxu0 0
    %1239 = vmatprep.subr.bf16.mxu0 0
    %1240 = vmatpush1.bf16.xpose.msra.mxu0 0
    %1241 = vmatprep.subr.bf16.mxu0 0
    %1242 = vmatpush1.bf16.xpose.msra.mxu0 0
    %1243 = vmatprep.subr.bf16.mxu0 0
    %1244 = vmatpush1.bf16.xpose.msra.mxu0 0
    %1245 = vmatprep.subr.bf16.mxu0 0
    %1246 = vmatpush1.bf16.xpose.msra.mxu0 0
    %1247 = vmatprep.subr.bf16.mxu0 0
    %1248 = vmatpush1.bf16.xpose.msra.mxu0 0
    %1249 = vmatprep.subr.bf16.mxu0 0
    %1250 = vmatpush1.bf16.xpose.msra.mxu0 0
    %1251 = vmatprep.subr.bf16.mxu0 0
    %1252 = vmatpush1.bf16.xpose.msra.mxu0 0
    %1253 = vmatprep.mubr.bf16.mxu0 0
    %1254 = vmatmul.mubr.bf16.gmra.mrb[0].mxu0 %v1216
    %v1255 = vpop.f32.mrb[0].mxu0
    %v1256 = vadd.f32 0.0, %v1255
    %v1257 = vpop.f32.mrb[0].mxu0
    %v1258 = vpop.f32.mrb[0].mxu0
    %v1259 = vpop.f32.mrb[0].mxu0
    %1260 = vdwg.mxu0
    %v1262 = vsel %vm1030, %v1019, 0
    %v1265 = vsel %vm1030, %v1027, 0
    %1267 = vmatprep.subr.bf16.mxu0 0
    %1268 = vmatpush1.bf16.xpose.msra.mxu0 %v1265
    %1269 = vmatprep.subr.bf16.mxu0 0
    %1270 = vmatpush1.bf16.xpose.msra.mxu0 0
    %1271 = vmatprep.subr.bf16.mxu0 0
    %1272 = vmatpush1.bf16.xpose.msra.mxu0 0
    %1273 = vmatprep.subr.bf16.mxu0 0
    %1274 = vmatpush1.bf16.xpose.msra.mxu0 0
    %1275 = vmatprep.subr.bf16.mxu0 0
    %1276 = vmatpush1.bf16.xpose.msra.mxu0 0
    %1277 = vmatprep.subr.bf16.mxu0 0
    %1278 = vmatpush1.bf16.xpose.msra.mxu0 0
    %1279 = vmatprep.subr.bf16.mxu0 0
    %1280 = vmatpush1.bf16.xpose.msra.mxu0 0
    %1281 = vmatprep.subr.bf16.mxu0 0
    %1282 = vmatpush1.bf16.xpose.msra.mxu0 0
    %1283 = vmatprep.subr.bf16.mxu0 0
    %1284 = vmatpush1.bf16.xpose.msra.mxu0 0
    %1285 = vmatprep.subr.bf16.mxu0 0
    %1286 = vmatpush1.bf16.xpose.msra.mxu0 0
    %1287 = vmatprep.subr.bf16.mxu0 0
    %1288 = vmatpush1.bf16.xpose.msra.mxu0 0
    %1289 = vmatprep.subr.bf16.mxu0 0
    %1290 = vmatpush1.bf16.xpose.msra.mxu0 0
    %1291 = vmatprep.subr.bf16.mxu0 0
    %1292 = vmatpush1.bf16.xpose.msra.mxu0 0
    %1293 = vmatprep.subr.bf16.mxu0 0
    %1294 = vmatpush1.bf16.xpose.msra.mxu0 0
    %1295 = vmatprep.subr.bf16.mxu0 0
    %1296 = vmatpush1.bf16.xpose.msra.mxu0 0
    %1297 = vmatprep.subr.bf16.mxu0 0
    %1298 = vmatpush1.bf16.xpose.msra.mxu0 0
    %1299 = vmatprep.mubr.bf16.mxu0 0
    %1300 = vmatmul.mubr.bf16.gmra.mrb[0].mxu0 %v1262
    %v1301 = vpop.f32.mrb[0].mxu0
    %v1302 = vadd.f32 0.0, %v1301
    %v1303 = vpop.f32.mrb[0].mxu0
    %v1304 = vpop.f32.mrb[0].mxu0
    %v1305 = vpop.f32.mrb[0].mxu0
    %1306 = vdwg.mxu0
    %v1308 = vsel %vm1030, %v1020, 0
    %v1311 = vsel %vm1030, %v1028, 0
    %1313 = vmatprep.subr.bf16.mxu0 0
    %1314 = vmatpush1.bf16.xpose.msra.mxu0 %v1311
    %1315 = vmatprep.subr.bf16.mxu0 0
    %1316 = vmatpush1.bf16.xpose.msra.mxu0 0
    %1317 = vmatprep.subr.bf16.mxu0 0
    %1318 = vmatpush1.bf16.xpose.msra.mxu0 0
    %1319 = vmatprep.subr.bf16.mxu0 0
    %1320 = vmatpush1.bf16.xpose.msra.mxu0 0
    %1321 = vmatprep.subr.bf16.mxu0 0
    %1322 = vmatpush1.bf16.xpose.msra.mxu0 0
    %1323 = vmatprep.subr.bf16.mxu0 0
    %1324 = vmatpush1.bf16.xpose.msra.mxu0 0
    %1325 = vmatprep.subr.bf16.mxu0 0
    %1326 = vmatpush1.bf16.xpose.msra.mxu0 0
    %1327 = vmatprep.subr.bf16.mxu0 0
    %1328 = vmatpush1.bf16.xpose.msra.mxu0 0
    %1329 = vmatprep.subr.bf16.mxu0 0
    %1330 = vmatpush1.bf16.xpose.msra.mxu0 0
    %1331 = vmatprep.subr.bf16.mxu0 0
    %1332 = vmatpush1.bf16.xpose.msra.mxu0 0
    %1333 = vmatprep.subr.bf16.mxu0 0
    %1334 = vmatpush1.bf16.xpose.msra.mxu0 0
    %1335 = vmatprep.subr.bf16.mxu0 0
    %1336 = vmatpush1.bf16.xpose.msra.mxu0 0
    %1337 = vmatprep.subr.bf16.mxu0 0
    %1338 = vmatpush1.bf16.xpose.msra.mxu0 0
    %1339 = vmatprep.subr.bf16.mxu0 0
    %1340 = vmatpush1.bf16.xpose.msra.mxu0 0
    %1341 = vmatprep.subr.bf16.mxu0 0
    %1342 = vmatpush1.bf16.xpose.msra.mxu0 0
    %1343 = vmatprep.subr.bf16.mxu0 0
    %1344 = vmatpush1.bf16.xpose.msra.mxu0 0
    %1345 = vmatprep.mubr.bf16.mxu0 0
    %1346 = vmatmul.mubr.bf16.gmra.mrb[0].mxu0 %v1308
    %v1347 = vpop.f32.mrb[0].mxu0
    %v1348 = vadd.f32 0.0, %v1347
    %v1349 = vpop.f32.mrb[0].mxu0
    %v1350 = vpop.f32.mrb[0].mxu0
    %v1351 = vpop.f32.mrb[0].mxu0
    %1352 = vdwg.mxu0
    %v1354 = vsel %vm1030, %v1021, 0
    %v1357 = vsel %vm1030, %v1029, 0
    %1359 = vmatprep.subr.bf16.mxu0 0
    %1360 = vmatpush1.bf16.xpose.msra.mxu0 %v1357
    %1361 = vmatprep.subr.bf16.mxu0 0
    %1362 = vmatpush1.bf16.xpose.msra.mxu0 0
    %1363 = vmatprep.subr.bf16.mxu0 0
    %1364 = vmatpush1.bf16.xpose.msra.mxu0 0
    %1365 = vmatprep.subr.bf16.mxu0 0
    %1366 = vmatpush1.bf16.xpose.msra.mxu0 0
    %1367 = vmatprep.subr.bf16.mxu0 0
    %1368 = vmatpush1.bf16.xpose.msra.mxu0 0
    %1369 = vmatprep.subr.bf16.mxu0 0
    %1370 = vmatpush1.bf16.xpose.msra.mxu0 0
    %1371 = vmatprep.subr.bf16.mxu0 0
    %1372 = vmatpush1.bf16.xpose.msra.mxu0 0
    %1373 = vmatprep.subr.bf16.mxu0 0
    %1374 = vmatpush1.bf16.xpose.msra.mxu0 0
    %1375 = vmatprep.subr.bf16.mxu0 0
    %1376 = vmatpush1.bf16.xpose.msra.mxu0 0
    %1377 = vmatprep.subr.bf16.mxu0 0
    %1378 = vmatpush1.bf16.xpose.msra.mxu0 0
    %1379 = vmatprep.subr.bf16.mxu0 0
    %1380 = vmatpush1.bf16.xpose.msra.mxu0 0
    %1381 = vmatprep.subr.bf16.mxu0 0
    %1382 = vmatpush1.bf16.xpose.msra.mxu0 0
    %1383 = vmatprep.subr.bf16.mxu0 0
    %1384 = vmatpush1.bf16.xpose.msra.mxu0 0
    %1385 = vmatprep.subr.bf16.mxu0 0
    %1386 = vmatpush1.bf16.xpose.msra.mxu0 0
    %1387 = vmatprep.subr.bf16.mxu0 0
    %1388 = vmatpush1.bf16.xpose.msra.mxu0 0
    %1389 = vmatprep.subr.bf16.mxu0 0
    %1390 = vmatpush1.bf16.xpose.msra.mxu0 0
    %1391 = vmatprep.mubr.bf16.mxu0 0
    %1392 = vmatmul.mubr.bf16.gmra.mrb[0].mxu0 %v1354
    %v1393 = vpop.f32.mrb[0].mxu0
    %v1394 = vadd.f32 0.0, %v1393
    %v1395 = vpop.f32.mrb[0].mxu0
    %v1396 = vpop.f32.mrb[0].mxu0
    %v1397 = vpop.f32.mrb[0].mxu0
    %1398 = vdwg.mxu0
    %v1399 = vsel %vm1030, %v1072, -inf
    %1400 = vmax.xlane.f32.xlu0 %v1399
    %v1401 = vpop.xlane.xlu0 %1400
    %v1402 = vsel %vm1030, %v1118, -inf
    %1403 = vmax.xlane.f32.xlu0 %v1402
    %v1404 = vpop.xlane.xlu0 %1403
    %v1405 = vsel %vm1030, %v1164, -inf
    %1406 = vmax.xlane.f32.xlu0 %v1405
    %v1407 = vpop.xlane.xlu0 %1406
    %v1408 = vsel %vm1030, %v1210, -inf
    %1409 = vmax.xlane.f32.xlu0 %v1408
    %v1410 = vpop.xlane.xlu0 %1409
    %v1411 = vsel %vm1030, %v1256, -inf
    %1412 = vmax.xlane.f32.xlu0 %v1411
    %v1413 = vpop.xlane.xlu0 %1412
    %v1414 = vsel %vm1030, %v1302, -inf
    %1415 = vmax.xlane.f32.xlu0 %v1414
    %v1416 = vpop.xlane.xlu0 %1415
    %v1417 = vsel %vm1030, %v1348, -inf
    %1418 = vmax.xlane.f32.xlu0 %v1417
    %v1419 = vpop.xlane.xlu0 %1418
    %v1420 = vsel %vm1030, %v1394, -inf
    %1421 = vmax.xlane.f32.xlu0 %v1420
    %v1422 = vpop.xlane.xlu0 %1421
    %v1423 = vsub.f32 %v1072, %v1401
    %v1424 = vsub.f32 %v1118, %v1404
    %v1425 = vsub.f32 %v1164, %v1407
    %v1426 = vsub.f32 %v1210, %v1410
    %v1427 = vsub.f32 %v1256, %v1413
    %v1428 = vsub.f32 %v1302, %v1416
    %v1429 = vsub.f32 %v1348, %v1419
    %v1430 = vsub.f32 %v1394, %v1422
    %v1431 = vmul.f32 %v1423, 1.442695
    %v1432 = vpow.pop %v1431
    %v1433 = vmul.f32 %v1424, 1.442695
    %v1434 = vpow.pop %v1433
    %v1435 = vmul.f32 %v1425, 1.442695
    %v1436 = vpow.pop %v1435
    %v1437 = vmul.f32 %v1426, 1.442695
    %v1438 = vpow.pop %v1437
    %v1439 = vmul.f32 %v1427, 1.442695
    %v1440 = vpow.pop %v1439
    %v1441 = vmul.f32 %v1428, 1.442695
    %v1442 = vpow.pop %v1441
    %v1443 = vmul.f32 %v1429, 1.442695
    %v1444 = vpow.pop %v1443
    %v1445 = vmul.f32 %v1430, 1.442695
    %v1446 = vpow.pop %v1445
    %v1447 = vsel %vm1030, %v1432, 0.0
    %1448 = vadd.xlane.f32.xlu0 %v1447
    %v1449 = vpop.xlane.xlu0 %1448
    %v1450 = vsel %vm1030, %v1434, 0.0
    %1451 = vadd.xlane.f32.xlu0 %v1450
    %v1452 = vpop.xlane.xlu0 %1451
    %v1453 = vsel %vm1030, %v1436, 0.0
    %1454 = vadd.xlane.f32.xlu0 %v1453
    %v1455 = vpop.xlane.xlu0 %1454
    %v1456 = vsel %vm1030, %v1438, 0.0
    %1457 = vadd.xlane.f32.xlu0 %v1456
    %v1458 = vpop.xlane.xlu0 %1457
    %v1459 = vsel %vm1030, %v1440, 0.0
    %1460 = vadd.xlane.f32.xlu0 %v1459
    %v1461 = vpop.xlane.xlu0 %1460
    %v1462 = vsel %vm1030, %v1442, 0.0
    %1463 = vadd.xlane.f32.xlu0 %v1462
    %v1464 = vpop.xlane.xlu0 %1463
    %v1465 = vsel %vm1030, %v1444, 0.0
    %1466 = vadd.xlane.f32.xlu0 %v1465
    %v1467 = vpop.xlane.xlu0 %1466
    %v1468 = vsel %vm1030, %v1446, 0.0
    %1469 = vadd.xlane.f32.xlu0 %v1468
    %v1470 = vpop.xlane.xlu0 %1469
    %v1471 = vrcp.pop %v1449
    %v1472 = vrcp.pop %v1452
    %v1473 = vrcp.pop %v1455
    %v1474 = vrcp.pop %v1458
    %v1475 = vrcp.pop %v1461
    %v1476 = vrcp.pop %v1464
    %v1477 = vrcp.pop %v1467
    %v1478 = vrcp.pop %v1470
    %v1479 = vmul.f32 %v1432, %v1471
    %v1480 = vmul.f32 %v1434, %v1472
    %v1481 = vmul.f32 %v1436, %v1473
    %v1482 = vmul.f32 %v1438, %v1474
    %v1483 = vmul.f32 %v1440, %v1475
    %v1484 = vmul.f32 %v1442, %v1476
    %v1485 = vmul.f32 %v1444, %v1477
    %v1486 = vmul.f32 %v1446, %v1478
    %v1487 = vpack.c.bf16 %v1479, %v1479
    %v1488 = vpack.c.bf16 %v1480, %v1480
    %v1489 = vpack.c.bf16 %v1481, %v1481
    %v1490 = vpack.c.bf16 %v1482, %v1482
    %v1491 = vpack.c.bf16 %v1483, %v1483
    %v1492 = vpack.c.bf16 %v1484, %v1484
    %v1493 = vpack.c.bf16 %v1485, %v1485
    %v1494 = vpack.c.bf16 %v1486, %v1486
    %v1495 = vpack.c.bf16 %v798, %v798
    %v1496 = vpack.c.bf16 %v799, %v799
    %v1497 = vpack.c.bf16 %v800, %v800
    %v1498 = vpack.c.bf16 %v801, %v801
    %v1499 = vpack.c.bf16 %v1002, %v1002
    %v1500 = vpack.c.bf16 %v1003, %v1003
    %v1501 = vpack.c.bf16 %v1004, %v1004
    %v1502 = vpack.c.bf16 %v1005, %v1005
    %v1504 = vsel %vm1030, %v1487, 0
    %vm1506 = vcmask 1043456
    %v1508 = vsel %vm1506, %v1495, 0
    %1510 = vmatprep.subr.bf16.mxu0 0
    %1511 = vmatpush1.bf16.msra.mxu0 %v1508
    %1512 = vmatprep.subr.bf16.mxu0 0
    %1513 = vmatpush1.bf16.msra.mxu0 0
    %1514 = vmatprep.subr.bf16.mxu0 0
    %1515 = vmatpush1.bf16.msra.mxu0 0
    %1516 = vmatprep.subr.bf16.mxu0 0
    %1517 = vmatpush1.bf16.msra.mxu0 0
    %1518 = vmatprep.subr.bf16.mxu0 0
    %1519 = vmatpush1.bf16.msra.mxu0 0
    %1520 = vmatprep.subr.bf16.mxu0 0
    %1521 = vmatpush1.bf16.msra.mxu0 0
    %1522 = vmatprep.subr.bf16.mxu0 0
    %1523 = vmatpush1.bf16.msra.mxu0 0
    %1524 = vmatprep.subr.bf16.mxu0 0
    %1525 = vmatpush1.bf16.msra.mxu0 0
    %1526 = vmatprep.subr.bf16.mxu0 0
    %1527 = vmatpush1.bf16.msra.mxu0 0
    %1528 = vmatprep.subr.bf16.mxu0 0
    %1529 = vmatpush1.bf16.msra.mxu0 0
    %1530 = vmatprep.subr.bf16.mxu0 0
    %1531 = vmatpush1.bf16.msra.mxu0 0
    %1532 = vmatprep.subr.bf16.mxu0 0
    %1533 = vmatpush1.bf16.msra.mxu0 0
    %1534 = vmatprep.subr.bf16.mxu0 0
    %1535 = vmatpush1.bf16.msra.mxu0 0
    %1536 = vmatprep.subr.bf16.mxu0 0
    %1537 = vmatpush1.bf16.msra.mxu0 0
    %1538 = vmatprep.subr.bf16.mxu0 0
    %1539 = vmatpush1.bf16.msra.mxu0 0
    %1540 = vmatprep.subr.bf16.mxu0 0
    %1541 = vmatpush1.bf16.msra.mxu0 0
    %1542 = vmatprep.mubr.bf16.mxu0 0
    %1543 = vmatmul.mubr.bf16.gmra.mrb[0].mxu0 %v1504
    %v1544 = vpop.f32.mrb[0].mxu0
    %v1545 = vadd.f32 0.0, %v1544
    %v1546 = vpop.f32.mrb[0].mxu0
    %v1547 = vpop.f32.mrb[0].mxu0
    %v1548 = vpop.f32.mrb[0].mxu0
    %1549 = vdwg.mxu0
    %v1551 = vsel %vm1030, %v1488, 0
    %v1554 = vsel %vm1506, %v1496, 0
    %1556 = vmatprep.subr.bf16.mxu0 0
    %1557 = vmatpush1.bf16.msra.mxu0 %v1554
    %1558 = vmatprep.subr.bf16.mxu0 0
    %1559 = vmatpush1.bf16.msra.mxu0 0
    %1560 = vmatprep.subr.bf16.mxu0 0
    %1561 = vmatpush1.bf16.msra.mxu0 0
    %1562 = vmatprep.subr.bf16.mxu0 0
    %1563 = vmatpush1.bf16.msra.mxu0 0
    %1564 = vmatprep.subr.bf16.mxu0 0
    %1565 = vmatpush1.bf16.msra.mxu0 0
    %1566 = vmatprep.subr.bf16.mxu0 0
    %1567 = vmatpush1.bf16.msra.mxu0 0
    %1568 = vmatprep.subr.bf16.mxu0 0
    %1569 = vmatpush1.bf16.msra.mxu0 0
    %1570 = vmatprep.subr.bf16.mxu0 0
    %1571 = vmatpush1.bf16.msra.mxu0 0
    %1572 = vmatprep.subr.bf16.mxu0 0
    %1573 = vmatpush1.bf16.msra.mxu0 0
    %1574 = vmatprep.subr.bf16.mxu0 0
    %1575 = vmatpush1.bf16.msra.mxu0 0
    %1576 = vmatprep.subr.bf16.mxu0 0
    %1577 = vmatpush1.bf16.msra.mxu0 0
    %1578 = vmatprep.subr.bf16.mxu0 0
    %1579 = vmatpush1.bf16.msra.mxu0 0
    %1580 = vmatprep.subr.bf16.mxu0 0
    %1581 = vmatpush1.bf16.msra.mxu0 0
    %1582 = vmatprep.subr.bf16.mxu0 0
    %1583 = vmatpush1.bf16.msra.mxu0 0
    %1584 = vmatprep.subr.bf16.mxu0 0
    %1585 = vmatpush1.bf16.msra.mxu0 0
    %1586 = vmatprep.subr.bf16.mxu0 0
    %1587 = vmatpush1.bf16.msra.mxu0 0
    %1588 = vmatprep.mubr.bf16.mxu0 0
    %1589 = vmatmul.mubr.bf16.gmra.mrb[0].mxu0 %v1551
    %v1590 = vpop.f32.mrb[0].mxu0
    %v1591 = vadd.f32 0.0, %v1590
    %v1592 = vpop.f32.mrb[0].mxu0
    %v1593 = vpop.f32.mrb[0].mxu0
    %v1594 = vpop.f32.mrb[0].mxu0
    %1595 = vdwg.mxu0
    %v1597 = vsel %vm1030, %v1489, 0
    %v1600 = vsel %vm1506, %v1497, 0
    %1602 = vmatprep.subr.bf16.mxu0 0
    %1603 = vmatpush1.bf16.msra.mxu0 %v1600
    %1604 = vmatprep.subr.bf16.mxu0 0
    %1605 = vmatpush1.bf16.msra.mxu0 0
    %1606 = vmatprep.subr.bf16.mxu0 0
    %1607 = vmatpush1.bf16.msra.mxu0 0
    %1608 = vmatprep.subr.bf16.mxu0 0
    %1609 = vmatpush1.bf16.msra.mxu0 0
    %1610 = vmatprep.subr.bf16.mxu0 0
    %1611 = vmatpush1.bf16.msra.mxu0 0
    %1612 = vmatprep.subr.bf16.mxu0 0
    %1613 = vmatpush1.bf16.msra.mxu0 0
    %1614 = vmatprep.subr.bf16.mxu0 0
    %1615 = vmatpush1.bf16.msra.mxu0 0
    %1616 = vmatprep.subr.bf16.mxu0 0
    %1617 = vmatpush1.bf16.msra.mxu0 0
    %1618 = vmatprep.subr.bf16.mxu0 0
    %1619 = vmatpush1.bf16.msra.mxu0 0
    %1620 = vmatprep.subr.bf16.mxu0 0
    %1621 = vmatpush1.bf16.msra.mxu0 0
    %1622 = vmatprep.subr.bf16.mxu0 0
    %1623 = vmatpush1.bf16.msra.mxu0 0
    %1624 = vmatprep.subr.bf16.mxu0 0
    %1625 = vmatpush1.bf16.msra.mxu0 0
    %1626 = vmatprep.subr.bf16.mxu0 0
    %1627 = vmatpush1.bf16.msra.mxu0 0
    %1628 = vmatprep.subr.bf16.mxu0 0
    %1629 = vmatpush1.bf16.msra.mxu0 0
    %1630 = vmatprep.subr.bf16.mxu0 0
    %1631 = vmatpush1.bf16.msra.mxu0 0
    %1632 = vmatprep.subr.bf16.mxu0 0
    %1633 = vmatpush1.bf16.msra.mxu0 0
    %1634 = vmatprep.mubr.bf16.mxu0 0
    %1635 = vmatmul.mubr.bf16.gmra.mrb[0].mxu0 %v1597
    %v1636 = vpop.f32.mrb[0].mxu0
    %v1637 = vadd.f32 0.0, %v1636
    %v1638 = vpop.f32.mrb[0].mxu0
    %v1639 = vpop.f32.mrb[0].mxu0
    %v1640 = vpop.f32.mrb[0].mxu0
    %1641 = vdwg.mxu0
    %v1643 = vsel %vm1030, %v1490, 0
    %v1646 = vsel %vm1506, %v1498, 0
    %1648 = vmatprep.subr.bf16.mxu0 0
    %1649 = vmatpush1.bf16.msra.mxu0 %v1646
    %1650 = vmatprep.subr.bf16.mxu0 0
    %1651 = vmatpush1.bf16.msra.mxu0 0
    %1652 = vmatprep.subr.bf16.mxu0 0
    %1653 = vmatpush1.bf16.msra.mxu0 0
    %1654 = vmatprep.subr.bf16.mxu0 0
    %1655 = vmatpush1.bf16.msra.mxu0 0
    %1656 = vmatprep.subr.bf16.mxu0 0
    %1657 = vmatpush1.bf16.msra.mxu0 0
    %1658 = vmatprep.subr.bf16.mxu0 0
    %1659 = vmatpush1.bf16.msra.mxu0 0
    %1660 = vmatprep.subr.bf16.mxu0 0
    %1661 = vmatpush1.bf16.msra.mxu0 0
    %1662 = vmatprep.subr.bf16.mxu0 0
    %1663 = vmatpush1.bf16.msra.mxu0 0
    %1664 = vmatprep.subr.bf16.mxu0 0
    %1665 = vmatpush1.bf16.msra.mxu0 0
    %1666 = vmatprep.subr.bf16.mxu0 0
    %1667 = vmatpush1.bf16.msra.mxu0 0
    %1668 = vmatprep.subr.bf16.mxu0 0
    %1669 = vmatpush1.bf16.msra.mxu0 0
    %1670 = vmatprep.subr.bf16.mxu0 0
    %1671 = vmatpush1.bf16.msra.mxu0 0
    %1672 = vmatprep.subr.bf16.mxu0 0
    %1673 = vmatpush1.bf16.msra.mxu0 0
    %1674 = vmatprep.subr.bf16.mxu0 0
    %1675 = vmatpush1.bf16.msra.mxu0 0
    %1676 = vmatprep.subr.bf16.mxu0 0
    %1677 = vmatpush1.bf16.msra.mxu0 0
    %1678 = vmatprep.subr.bf16.mxu0 0
    %1679 = vmatpush1.bf16.msra.mxu0 0
    %1680 = vmatprep.mubr.bf16.mxu0 0
    %1681 = vmatmul.mubr.bf16.gmra.mrb[0].mxu0 %v1643
    %v1682 = vpop.f32.mrb[0].mxu0
    %v1683 = vadd.f32 0.0, %v1682
    %v1684 = vpop.f32.mrb[0].mxu0
    %v1685 = vpop.f32.mrb[0].mxu0
    %v1686 = vpop.f32.mrb[0].mxu0
    %1687 = vdwg.mxu0
    %v1689 = vsel %vm1030, %v1491, 0
    %v1692 = vsel %vm1506, %v1499, 0
    %1694 = vmatprep.subr.bf16.mxu0 0
    %1695 = vmatpush1.bf16.msra.mxu0 %v1692
    %1696 = vmatprep.subr.bf16.mxu0 0
    %1697 = vmatpush1.bf16.msra.mxu0 0
    %1698 = vmatprep.subr.bf16.mxu0 0
    %1699 = vmatpush1.bf16.msra.mxu0 0
    %1700 = vmatprep.subr.bf16.mxu0 0
    %1701 = vmatpush1.bf16.msra.mxu0 0
    %1702 = vmatprep.subr.bf16.mxu0 0
    %1703 = vmatpush1.bf16.msra.mxu0 0
    %1704 = vmatprep.subr.bf16.mxu0 0
    %1705 = vmatpush1.bf16.msra.mxu0 0
    %1706 = vmatprep.subr.bf16.mxu0 0
    %1707 = vmatpush1.bf16.msra.mxu0 0
    %1708 = vmatprep.subr.bf16.mxu0 0
    %1709 = vmatpush1.bf16.msra.mxu0 0
    %1710 = vmatprep.subr.bf16.mxu0 0
    %1711 = vmatpush1.bf16.msra.mxu0 0
    %1712 = vmatprep.subr.bf16.mxu0 0
    %1713 = vmatpush1.bf16.msra.mxu0 0
    %1714 = vmatprep.subr.bf16.mxu0 0
    %1715 = vmatpush1.bf16.msra.mxu0 0
    %1716 = vmatprep.subr.bf16.mxu0 0
    %1717 = vmatpush1.bf16.msra.mxu0 0
    %1718 = vmatprep.subr.bf16.mxu0 0
    %1719 = vmatpush1.bf16.msra.mxu0 0
    %1720 = vmatprep.subr.bf16.mxu0 0
    %1721 = vmatpush1.bf16.msra.mxu0 0
    %1722 = vmatprep.subr.bf16.mxu0 0
    %1723 = vmatpush1.bf16.msra.mxu0 0
    %1724 = vmatprep.subr.bf16.mxu0 0
    %1725 = vmatpush1.bf16.msra.mxu0 0
    %1726 = vmatprep.mubr.bf16.mxu0 0
    %1727 = vmatmul.mubr.bf16.gmra.mrb[0].mxu0 %v1689
    %v1728 = vpop.f32.mrb[0].mxu0
    %v1729 = vadd.f32 0.0, %v1728
    %v1730 = vpop.f32.mrb[0].mxu0
    %v1731 = vpop.f32.mrb[0].mxu0
    %v1732 = vpop.f32.mrb[0].mxu0
    %1733 = vdwg.mxu0
    %v1735 = vsel %vm1030, %v1492, 0
    %v1738 = vsel %vm1506, %v1500, 0
    %1740 = vmatprep.subr.bf16.mxu0 0
    %1741 = vmatpush1.bf16.msra.mxu0 %v1738
    %1742 = vmatprep.subr.bf16.mxu0 0
    %1743 = vmatpush1.bf16.msra.mxu0 0
    %1744 = vmatprep.subr.bf16.mxu0 0
    %1745 = vmatpush1.bf16.msra.mxu0 0
    %1746 = vmatprep.subr.bf16.mxu0 0
    %1747 = vmatpush1.bf16.msra.mxu0 0
    %1748 = vmatprep.subr.bf16.mxu0 0
    %1749 = vmatpush1.bf16.msra.mxu0 0
    %1750 = vmatprep.subr.bf16.mxu0 0
    %1751 = vmatpush1.bf16.msra.mxu0 0
    %1752 = vmatprep.subr.bf16.mxu0 0
    %1753 = vmatpush1.bf16.msra.mxu0 0
    %1754 = vmatprep.subr.bf16.mxu0 0
    %1755 = vmatpush1.bf16.msra.mxu0 0
    %1756 = vmatprep.subr.bf16.mxu0 0
    %1757 = vmatpush1.bf16.msra.mxu0 0
    %1758 = vmatprep.subr.bf16.mxu0 0
    %1759 = vmatpush1.bf16.msra.mxu0 0
    %1760 = vmatprep.subr.bf16.mxu0 0
    %1761 = vmatpush1.bf16.msra.mxu0 0
    %1762 = vmatprep.subr.bf16.mxu0 0
    %1763 = vmatpush1.bf16.msra.mxu0 0
    %1764 = vmatprep.subr.bf16.mxu0 0
    %1765 = vmatpush1.bf16.msra.mxu0 0
    %1766 = vmatprep.subr.bf16.mxu0 0
    %1767 = vmatpush1.bf16.msra.mxu0 0
    %1768 = vmatprep.subr.bf16.mxu0 0
    %1769 = vmatpush1.bf16.msra.mxu0 0
    %1770 = vmatprep.subr.bf16.mxu0 0
    %1771 = vmatpush1.bf16.msra.mxu0 0
    %1772 = vmatprep.mubr.bf16.mxu0 0
    %1773 = vmatmul.mubr.bf16.gmra.mrb[0].mxu0 %v1735
    %v1774 = vpop.f32.mrb[0].mxu0
    %v1775 = vadd.f32 0.0, %v1774
    %v1776 = vpop.f32.mrb[0].mxu0
    %v1777 = vpop.f32.mrb[0].mxu0
    %v1778 = vpop.f32.mrb[0].mxu0
    %1779 = vdwg.mxu0
    %v1781 = vsel %vm1030, %v1493, 0
    %v1784 = vsel %vm1506, %v1501, 0
    %1786 = vmatprep.subr.bf16.mxu0 0
    %1787 = vmatpush1.bf16.msra.mxu0 %v1784
    %1788 = vmatprep.subr.bf16.mxu0 0
    %1789 = vmatpush1.bf16.msra.mxu0 0
    %1790 = vmatprep.subr.bf16.mxu0 0
    %1791 = vmatpush1.bf16.msra.mxu0 0
    %1792 = vmatprep.subr.bf16.mxu0 0
    %1793 = vmatpush1.bf16.msra.mxu0 0
    %1794 = vmatprep.subr.bf16.mxu0 0
    %1795 = vmatpush1.bf16.msra.mxu0 0
    %1796 = vmatprep.subr.bf16.mxu0 0
    %1797 = vmatpush1.bf16.msra.mxu0 0
    %1798 = vmatprep.subr.bf16.mxu0 0
    %1799 = vmatpush1.bf16.msra.mxu0 0
    %1800 = vmatprep.subr.bf16.mxu0 0
    %1801 = vmatpush1.bf16.msra.mxu0 0
    %1802 = vmatprep.subr.bf16.mxu0 0
    %1803 = vmatpush1.bf16.msra.mxu0 0
    %1804 = vmatprep.subr.bf16.mxu0 0
    %1805 = vmatpush1.bf16.msra.mxu0 0
    %1806 = vmatprep.subr.bf16.mxu0 0
    %1807 = vmatpush1.bf16.msra.mxu0 0
    %1808 = vmatprep.subr.bf16.mxu0 0
    %1809 = vmatpush1.bf16.msra.mxu0 0
    %1810 = vmatprep.subr.bf16.mxu0 0
    %1811 = vmatpush1.bf16.msra.mxu0 0
    %1812 = vmatprep.subr.bf16.mxu0 0
    %1813 = vmatpush1.bf16.msra.mxu0 0
    %1814 = vmatprep.subr.bf16.mxu0 0
    %1815 = vmatpush1.bf16.msra.mxu0 0
    %1816 = vmatprep.subr.bf16.mxu0 0
    %1817 = vmatpush1.bf16.msra.mxu0 0
    %1818 = vmatprep.mubr.bf16.mxu0 0
    %1819 = vmatmul.mubr.bf16.gmra.mrb[0].mxu0 %v1781
    %v1820 = vpop.f32.mrb[0].mxu0
    %v1821 = vadd.f32 0.0, %v1820
    %v1822 = vpop.f32.mrb[0].mxu0
    %v1823 = vpop.f32.mrb[0].mxu0
    %v1824 = vpop.f32.mrb[0].mxu0
    %1825 = vdwg.mxu0
    %v1827 = vsel %vm1030, %v1494, 0
    %v1830 = vsel %vm1506, %v1502, 0
    %1832 = vmatprep.subr.bf16.mxu0 0
    %1833 = vmatpush1.bf16.msra.mxu0 %v1830
    %1834 = vmatprep.subr.bf16.mxu0 0
    %1835 = vmatpush1.bf16.msra.mxu0 0
    %1836 = vmatprep.subr.bf16.mxu0 0
    %1837 = vmatpush1.bf16.msra.mxu0 0
    %1838 = vmatprep.subr.bf16.mxu0 0
    %1839 = vmatpush1.bf16.msra.mxu0 0
    %1840 = vmatprep.subr.bf16.mxu0 0
    %1841 = vmatpush1.bf16.msra.mxu0 0
    %1842 = vmatprep.subr.bf16.mxu0 0
    %1843 = vmatpush1.bf16.msra.mxu0 0
    %1844 = vmatprep.subr.bf16.mxu0 0
    %1845 = vmatpush1.bf16.msra.mxu0 0
    %1846 = vmatprep.subr.bf16.mxu0 0
    %1847 = vmatpush1.bf16.msra.mxu0 0
    %1848 = vmatprep.subr.bf16.mxu0 0
    %1849 = vmatpush1.bf16.msra.mxu0 0
    %1850 = vmatprep.subr.bf16.mxu0 0
    %1851 = vmatpush1.bf16.msra.mxu0 0
    %1852 = vmatprep.subr.bf16.mxu0 0
    %1853 = vmatpush1.bf16.msra.mxu0 0
    %1854 = vmatprep.subr.bf16.mxu0 0
    %1855 = vmatpush1.bf16.msra.mxu0 0
    %1856 = vmatprep.subr.bf16.mxu0 0
    %1857 = vmatpush1.bf16.msra.mxu0 0
    %1858 = vmatprep.subr.bf16.mxu0 0
    %1859 = vmatpush1.bf16.msra.mxu0 0
    %1860 = vmatprep.subr.bf16.mxu0 0
    %1861 = vmatpush1.bf16.msra.mxu0 0
    %1862 = vmatprep.subr.bf16.mxu0 0
    %1863 = vmatpush1.bf16.msra.mxu0 0
    %1864 = vmatprep.mubr.bf16.mxu0 0
    %1865 = vmatmul.mubr.bf16.gmra.mrb[0].mxu0 %v1827
    %v1866 = vpop.f32.mrb[0].mxu0
    %v1867 = vadd.f32 0.0, %v1866
    %v1868 = vpop.f32.mrb[0].mxu0
    %v1869 = vpop.f32.mrb[0].mxu0
    %v1870 = vpop.f32.mrb[0].mxu0
    %1871 = vdwg.mxu0
    %v1872 = vcombine.low %v1545, %v1637
    %v1873 = vcombine.high %v1545, %v1637
    %v1875 = vunpack.c.l.s4 1983009808
    %v1876 = vunpack.c.0.s8 %v1875
    %v1877 = vlaneseq
    %v1878 = vshrl.u32 %v1877, 7
    %v1879 = vsub.s32 %v1876, %v1878
    %v1880 = vrot.slane %v1872, %v1879
    %v1882 = vunpack.c.l.s4 1983009808
    %v1883 = vunpack.c.0.s8 %v1882
    %v1884 = vlaneseq
    %v1885 = vshrl.u32 %v1884, 7
    %v1886 = vsub.s32 %v1883, %v1885
    %v1887 = vrot.slane %v1873, %v1886
    %v1888 = vcombine.low %v1591, %v1683
    %v1889 = vcombine.high %v1591, %v1683
    %v1891 = vunpack.c.l.s4 1983009808
    %v1892 = vunpack.c.0.s8 %v1891
    %v1893 = vlaneseq
    %v1894 = vshrl.u32 %v1893, 7
    %v1895 = vsub.s32 %v1892, %v1894
    %v1896 = vrot.slane %v1888, %v1895
    %v1898 = vunpack.c.l.s4 1983009808
    %v1899 = vunpack.c.0.s8 %v1898
    %v1900 = vlaneseq
    %v1901 = vshrl.u32 %v1900, 7
    %v1902 = vsub.s32 %v1899, %v1901
    %v1903 = vrot.slane %v1889, %v1902
    %v1904 = vcombine.low %v1880, %v1896
    %v1905 = vcombine.high %v1880, %v1896
    %v1907 = vunpack.c.l.s4 1934713408
    %v1908 = vunpack.c.0.s8 %v1907
    %v1909 = vlaneseq
    %v1910 = vshrl.u32 %v1909, 7
    %v1911 = vsub.s32 %v1908, %v1910
    %v1912 = vrot.slane %v1904, %v1911
    %v1914 = vunpack.c.l.s4 1934713408
    %v1915 = vunpack.c.0.s8 %v1914
    %v1916 = vlaneseq
    %v1917 = vshrl.u32 %v1916, 7
    %v1918 = vsub.s32 %v1915, %v1917
    %v1919 = vrot.slane %v1905, %v1918
    %v1920 = vcombine.low %v1887, %v1903
    %v1921 = vcombine.high %v1887, %v1903
    %v1923 = vunpack.c.l.s4 1934713408
    %v1924 = vunpack.c.0.s8 %v1923
    %v1925 = vlaneseq
    %v1926 = vshrl.u32 %v1925, 7
    %v1927 = vsub.s32 %v1924, %v1926
    %v1928 = vrot.slane %v1920, %v1927
    %v1930 = vunpack.c.l.s4 1934713408
    %v1931 = vunpack.c.0.s8 %v1930
    %v1932 = vlaneseq
    %v1933 = vshrl.u32 %v1932, 7
    %v1934 = vsub.s32 %v1931, %v1933
    %v1935 = vrot.slane %v1921, %v1934
    %v1936 = vcombine.high %v1912, 0.0
    %v1937 = vcombine.high %v1919, 0.0
    %v1938 = vcombine.high %v1928, 0.0
    %v1939 = vcombine.high %v1935, 0.0
    %v1940 = vcombine.low %v1729, %v1821
    %v1941 = vcombine.high %v1729, %v1821
    %v1943 = vunpack.c.l.s4 1983009808
    %v1944 = vunpack.c.0.s8 %v1943
    %v1945 = vlaneseq
    %v1946 = vshrl.u32 %v1945, 7
    %v1947 = vsub.s32 %v1944, %v1946
    %v1948 = vrot.slane %v1940, %v1947
    %v1950 = vunpack.c.l.s4 1983009808
    %v1951 = vunpack.c.0.s8 %v1950
    %v1952 = vlaneseq
    %v1953 = vshrl.u32 %v1952, 7
    %v1954 = vsub.s32 %v1951, %v1953
    %v1955 = vrot.slane %v1941, %v1954
    %v1956 = vcombine.low %v1775, %v1867
    %v1957 = vcombine.high %v1775, %v1867
    %v1959 = vunpack.c.l.s4 1983009808
    %v1960 = vunpack.c.0.s8 %v1959
    %v1961 = vlaneseq
    %v1962 = vshrl.u32 %v1961, 7
    %v1963 = vsub.s32 %v1960, %v1962
    %v1964 = vrot.slane %v1956, %v1963
    %v1966 = vunpack.c.l.s4 1983009808
    %v1967 = vunpack.c.0.s8 %v1966
    %v1968 = vlaneseq
    %v1969 = vshrl.u32 %v1968, 7
    %v1970 = vsub.s32 %v1967, %v1969
    %v1971 = vrot.slane %v1957, %v1970
    %v1972 = vcombine.low %v1948, %v1964
    %v1973 = vcombine.high %v1948, %v1964
    %v1975 = vunpack.c.l.s4 1934713408
    %v1976 = vunpack.c.0.s8 %v1975
    %v1977 = vlaneseq
    %v1978 = vshrl.u32 %v1977, 7
    %v1979 = vsub.s32 %v1976, %v1978
    %v1980 = vrot.slane %v1972, %v1979
    %v1982 = vunpack.c.l.s4 1934713408
    %v1983 = vunpack.c.0.s8 %v1982
    %v1984 = vlaneseq
    %v1985 = vshrl.u32 %v1984, 7
    %v1986 = vsub.s32 %v1983, %v1985
    %v1987 = vrot.slane %v1973, %v1986
    %v1988 = vcombine.low %v1955, %v1971
    %v1989 = vcombine.high %v1955, %v1971
    %v1991 = vunpack.c.l.s4 1934713408
    %v1992 = vunpack.c.0.s8 %v1991
    %v1993 = vlaneseq
    %v1994 = vshrl.u32 %v1993, 7
    %v1995 = vsub.s32 %v1992, %v1994
    %v1996 = vrot.slane %v1988, %v1995
    %v1998 = vunpack.c.l.s4 1934713408
    %v1999 = vunpack.c.0.s8 %v1998
    %v2000 = vlaneseq
    %v2001 = vshrl.u32 %v2000, 7
    %v2002 = vsub.s32 %v1999, %v2001
    %v2003 = vrot.slane %v1989, %v2002
    %v2004 = vcombine.high %v1980, 0.0
    %v2005 = vcombine.high %v1987, 0.0
    %v2006 = vcombine.high %v1996, 0.0
    %v2007 = vcombine.high %v2003, 0.0
    %v2008 = vcombine.low %v1912, %v1919
    %v2010 = vunpack.c.l.s4 1983009808
    %v2011 = vunpack.c.0.s8 %v2010
    %v2012 = vlaneseq
    %v2013 = vshrl.u32 %v2012, 7
    %v2014 = vsub.s32 %v2011, %v2013
    %v2015 = vrot.slane %v2008, %v2014
    %v2016 = vcombine.low %v1936, %v1937
    %v2018 = vunpack.c.l.s4 1983009808
    %v2019 = vunpack.c.0.s8 %v2018
    %v2020 = vlaneseq
    %v2021 = vshrl.u32 %v2020, 7
    %v2022 = vsub.s32 %v2019, %v2021
    %v2023 = vrot.slane %v2016, %v2022
    %v2024 = vcombine.low %v1928, %v1935
    %v2026 = vunpack.c.l.s4 1983009808
    %v2027 = vunpack.c.0.s8 %v2026
    %v2028 = vlaneseq
    %v2029 = vshrl.u32 %v2028, 7
    %v2030 = vsub.s32 %v2027, %v2029
    %v2031 = vrot.slane %v2024, %v2030
    %v2032 = vcombine.low %v1938, %v1939
    %v2034 = vunpack.c.l.s4 1983009808
    %v2035 = vunpack.c.0.s8 %v2034
    %v2036 = vlaneseq
    %v2037 = vshrl.u32 %v2036, 7
    %v2038 = vsub.s32 %v2035, %v2037
    %v2039 = vrot.slane %v2032, %v2038
    %v2040 = vcombine.low %v2015, %v2023
    %v2041 = vcombine.high %v2015, %v2023
    %v2043 = vunpack.c.l.s4 1934713408
    %v2044 = vunpack.c.0.s8 %v2043
    %v2045 = vlaneseq
    %v2046 = vshrl.u32 %v2045, 7
    %v2047 = vsub.s32 %v2044, %v2046
    %v2048 = vrot.slane %v2040, %v2047
    %v2050 = vunpack.c.l.s4 1934713408
    %v2051 = vunpack.c.0.s8 %v2050
    %v2052 = vlaneseq
    %v2053 = vshrl.u32 %v2052, 7
    %v2054 = vsub.s32 %v2051, %v2053
    %v2055 = vrot.slane %v2041, %v2054
    %v2056 = vcombine.low %v2031, %v2039
    %v2057 = vcombine.high %v2031, %v2039
    %v2059 = vunpack.c.l.s4 1934713408
    %v2060 = vunpack.c.0.s8 %v2059
    %v2061 = vlaneseq
    %v2062 = vshrl.u32 %v2061, 7
    %v2063 = vsub.s32 %v2060, %v2062
    %v2064 = vrot.slane %v2056, %v2063
    %v2066 = vunpack.c.l.s4 1934713408
    %v2067 = vunpack.c.0.s8 %v2066
    %v2068 = vlaneseq
    %v2069 = vshrl.u32 %v2068, 7
    %v2070 = vsub.s32 %v2067, %v2069
    %v2071 = vrot.slane %v2057, %v2070
    %v2072 = vcombine.low %v2048, %v2064
    %v2073 = vcombine.high %v2048, %v2064
    %v2074 = vcombine.low %v2055, %v2071
    %v2075 = vcombine.high %v2055, %v2071
    %v2076 = vcombine.low %v1980, %v1987
    %v2078 = vunpack.c.l.s4 1983009808
    %v2079 = vunpack.c.0.s8 %v2078
    %v2080 = vlaneseq
    %v2081 = vshrl.u32 %v2080, 7
    %v2082 = vsub.s32 %v2079, %v2081
    %v2083 = vrot.slane %v2076, %v2082
    %v2084 = vcombine.low %v2004, %v2005
    %v2086 = vunpack.c.l.s4 1983009808
    %v2087 = vunpack.c.0.s8 %v2086
    %v2088 = vlaneseq
    %v2089 = vshrl.u32 %v2088, 7
    %v2090 = vsub.s32 %v2087, %v2089
    %v2091 = vrot.slane %v2084, %v2090
    %v2092 = vcombine.low %v1996, %v2003
    %v2094 = vunpack.c.l.s4 1983009808
    %v2095 = vunpack.c.0.s8 %v2094
    %v2096 = vlaneseq
    %v2097 = vshrl.u32 %v2096, 7
    %v2098 = vsub.s32 %v2095, %v2097
    %v2099 = vrot.slane %v2092, %v2098
    %v2100 = vcombine.low %v2006, %v2007
    %v2102 = vunpack.c.l.s4 1983009808
    %v2103 = vunpack.c.0.s8 %v2102
    %v2104 = vlaneseq
    %v2105 = vshrl.u32 %v2104, 7
    %v2106 = vsub.s32 %v2103, %v2105
    %v2107 = vrot.slane %v2100, %v2106
    %v2108 = vcombine.low %v2083, %v2091
    %v2109 = vcombine.high %v2083, %v2091
    %v2111 = vunpack.c.l.s4 1934713408
    %v2112 = vunpack.c.0.s8 %v2111
    %v2113 = vlaneseq
    %v2114 = vshrl.u32 %v2113, 7
    %v2115 = vsub.s32 %v2112, %v2114
    %v2116 = vrot.slane %v2108, %v2115
    %v2118 = vunpack.c.l.s4 1934713408
    %v2119 = vunpack.c.0.s8 %v2118
    %v2120 = vlaneseq
    %v2121 = vshrl.u32 %v2120, 7
    %v2122 = vsub.s32 %v2119, %v2121
    %v2123 = vrot.slane %v2109, %v2122
    %v2124 = vcombine.low %v2099, %v2107
    %v2125 = vcombine.high %v2099, %v2107
    %v2127 = vunpack.c.l.s4 1934713408
    %v2128 = vunpack.c.0.s8 %v2127
    %v2129 = vlaneseq
    %v2130 = vshrl.u32 %v2129, 7
    %v2131 = vsub.s32 %v2128, %v2130
    %v2132 = vrot.slane %v2124, %v2131
    %v2134 = vunpack.c.l.s4 1934713408
    %v2135 = vunpack.c.0.s8 %v2134
    %v2136 = vlaneseq
    %v2137 = vshrl.u32 %v2136, 7
    %v2138 = vsub.s32 %v2135, %v2137
    %v2139 = vrot.slane %v2125, %v2138
    %v2140 = vcombine.low %v2116, %v2132
    %v2141 = vcombine.high %v2116, %v2132
    %v2142 = vcombine.low %v2123, %v2139
    %v2143 = vcombine.high %v2123, %v2139
    %2146 = vrot.lane.b32.xlu0 %v2073, 8
    %v2147 = vpop.permute.xlu0 %2146
    %2148 = vrot.lane.b32.xlu0 %v2141, 8
    %v2149 = vpop.permute.xlu0 %2148
    %2154 = vrot.lane.b32.xlu0 %v2074, 16
    %v2155 = vpop.permute.xlu0 %2154
    %2156 = vrot.lane.b32.xlu0 %v2142, 16
    %v2157 = vpop.permute.xlu0 %2156
    %2162 = vrot.lane.b32.xlu0 %v2075, 24
    %v2163 = vpop.permute.xlu0 %2162
    %2164 = vrot.lane.b32.xlu0 %v2143, 24
    %v2165 = vpop.permute.xlu0 %2164
    %v2168 = vsel %vm1030, %v2072, %v2147
    %v2169 = vsel %vm1030, %v2140, %v2149
    %vm2170 = vcmask 130048
    %v2171 = vsel %vm2170, %v2168, %v2155
    %v2172 = vsel %vm2170, %v2169, %v2157
    %vm2173 = vcmask 195584
    %v2174 = vsel %vm2173, %v2171, %v2163
    %v2175 = vsel %vm2173, %v2172, %v2165
    %v2176 = vpack.c.bf16 %v2175, %v2174
    %v2181 = vunpack.c.l.b16 %v60
    %v2182 = vunpack.c.l.b16 %v61
    %v2183 = vunpack.c.l.b16 %v62
    %v2184 = vunpack.c.l.b16 %v63
    %v2185 = vpack.c.b16 %v2182, %v2181
    %v2186 = vpack.c.b16 %v2184, %v2183
    %v2190 = vsel %vm77, %v2176, 0
    %2192 = vmatprep.subr.bf16.mxu0 0
    %2193 = vmatpush1.bf16.msra.mxu0 %v2185
    %2194 = vmatprep.subr.bf16.mxu0 0
    %2195 = vmatpush1.bf16.msra.mxu0 %v2186
    %2196 = vmatprep.subr.bf16.mxu0 0
    %2197 = vmatpush1.bf16.msra.mxu0 0
    %2198 = vmatprep.subr.bf16.mxu0 0
    %2199 = vmatpush1.bf16.msra.mxu0 0
    %2200 = vmatprep.subr.bf16.mxu0 0
    %2201 = vmatpush1.bf16.msra.mxu0 0
    %2202 = vmatprep.subr.bf16.mxu0 0
    %2203 = vmatpush1.bf16.msra.mxu0 0
    %2204 = vmatprep.subr.bf16.mxu0 0
    %2205 = vmatpush1.bf16.msra.mxu0 0
    %2206 = vmatprep.subr.bf16.mxu0 0
    %2207 = vmatpush1.bf16.msra.mxu0 0
    %2208 = vmatprep.subr.bf16.mxu0 0
    %2209 = vmatpush1.bf16.msra.mxu0 0
    %2210 = vmatprep.subr.bf16.mxu0 0
    %2211 = vmatpush1.bf16.msra.mxu0 0
    %2212 = vmatprep.subr.bf16.mxu0 0
    %2213 = vmatpush1.bf16.msra.mxu0 0
    %2214 = vmatprep.subr.bf16.mxu0 0
    %2215 = vmatpush1.bf16.msra.mxu0 0
    %2216 = vmatprep.subr.bf16.mxu0 0
    %2217 = vmatpush1.bf16.msra.mxu0 0
    %2218 = vmatprep.subr.bf16.mxu0 0
    %2219 = vmatpush1.bf16.msra.mxu0 0
    %2220 = vmatprep.subr.bf16.mxu0 0
    %2221 = vmatpush1.bf16.msra.mxu0 0
    %2222 = vmatprep.subr.bf16.mxu0 0
    %2223 = vmatpush1.bf16.msra.mxu0 0
    %2224 = vmatprep.mubr.bf16.mxu0 0
    %2225 = vmatmul.mubr.bf16.gmra.mrb[0].mxu0 %v2190
    %v2226 = vpop.f32.mrb[0].mxu0
    %v2227 = vadd.f32 0.0, %v2226
    %v2228 = vpop.f32.mrb[0].mxu0
    %v2229 = vpop.f32.mrb[0].mxu0
    %v2230 = vadd.f32 0.0, %v2229
    %v2231 = vpop.f32.mrb[0].mxu0
    %2232 = vdwg.mxu0
    %v2233 = vadd.f32 %v54, %v2227
    %v2234 = vadd.f32 %v55, %v2230
    %v2235 = vld [vmem:[%s3] sm:$0x1]
    %v2236 = vld [vmem:[%s4] sm:$0x1]
    %v2237 = vsel %vm77, %v2233, 0.0
    %2238 = vadd.xlane.f32.xlu0 %v2237
    %v2239 = vpop.xlane.xlu0 %2238
    %v2240 = vsel %vm77, %v2234, 0.0
    %2241 = vadd.xlane.f32.xlu0 %v2240
    %v2242 = vpop.xlane.xlu0 %2241
    %v2243 = vrcp.pop 32.0
    %v2244 = vmul.f32 %v2239, %v2243
    %v2245 = vmul.f32 %v2242, %v2243
    %v2246 = vsub.f32 %v2233, %v2244
    %v2247 = vsub.f32 %v2234, %v2245
    %v2248 = vmul.f32 %v2246, %v2246
    %v2249 = vmul.f32 %v2247, %v2247
    %v2250 = vsel %vm77, %v2248, 0.0
    %2251 = vadd.xlane.f32.xlu0 %v2250
    %v2252 = vpop.xlane.xlu0 %2251
    %v2253 = vsel %vm77, %v2249, 0.0
    %2254 = vadd.xlane.f32.xlu0 %v2253
    %v2255 = vpop.xlane.xlu0 %2254
    %v2256 = vmul.f32 %v2252, %v2243
    %v2257 = vmul.f32 %v2255, %v2243
    %v2258 = vadd.f32 %v2256, 1e-05
    %v2259 = vadd.f32 %v2257, 1e-05
    %v2260 = vrsqrt.pop %v2258
    %v2261 = vrsqrt.pop %v2259
    %v2262 = vmul.f32 %v2246, %v2260
    %v2263 = vmul.f32 %v2247, %v2261
    %v2265 = vlaneseq
    %v2266 = vshrl.u32 %v2265, 7
    %v2267 = vsub.s32 0, %v2266
    %v2268 = vrot.slane %v2235, %v2267
    %v2270 = vmul.f32 %v2262, %v2268
    %v2271 = vmul.f32 %v2263, %v2268
    %v2273 = vlaneseq
    %v2274 = vshrl.u32 %v2273, 7
    %v2275 = vsub.s32 0, %v2274
    %v2276 = vrot.slane %v2236, %v2275
    %v2278 = vadd.f32 %v2270, %v2276
    %v2279 = vadd.f32 %v2271, %v2276
    %v2280 = vpack.c.bf16 %v2279, %v2278
    %v2281 = vld [vmem:[%s5] sm:$0xf]
    %v2282 = vld [vmem:[%s5 + $0x4] sm:$0xf]
    %v2283 = vld [vmem:[%s5 + $0x8] sm:$0xf]
    %v2284 = vld [vmem:[%s5 + $0xc] sm:$0xf]
    %v2285 = vld [vmem:[%s6] sm:$0x1]
    %v2287 = vlaneseq
    %v2288 = vshrl.u32 %v2287, 7
    %v2289 = vsub.s32 0, %v2288
    %v2290 = vrot.slane %v2285, %v2289
    %v2296 = vunpack.c.l.b16 %v2281
    %v2297 = vunpack.c.l.b16 %v2282
    %v2298 = vunpack.c.l.b16 %v2283
    %v2299 = vunpack.c.l.b16 %v2284
    %v2300 = vpack.c.b16 %v2297, %v2296
    %v2301 = vpack.c.b16 %v2299, %v2298
    %v2305 = vsel %vm77, %v2280, 0
    %2307 = vmatprep.subr.bf16.mxu0 0
    %2308 = vmatpush1.bf16.msra.mxu0 %v2300
    %2309 = vmatprep.subr.bf16.mxu0 0
    %2310 = vmatpush1.bf16.msra.mxu0 %v2301
    %2311 = vmatprep.subr.bf16.mxu0 0
    %2312 = vmatpush1.bf16.msra.mxu0 0
    %2313 = vmatprep.subr.bf16.mxu0 0
    %2314 = vmatpush1.bf16.msra.mxu0 0
    %2315 = vmatprep.subr.bf16.mxu0 0
    %2316 = vmatpush1.bf16.msra.mxu0 0
    %2317 = vmatprep.subr.bf16.mxu0 0
    %2318 = vmatpush1.bf16.msra.mxu0 0
    %2319 = vmatprep.subr.bf16.mxu0 0
    %2320 = vmatpush1.bf16.msra.mxu0 0
    %2321 = vmatprep.subr.bf16.mxu0 0
    %2322 = vmatpush1.bf16.msra.mxu0 0
    %2323 = vmatprep.subr.bf16.mxu0 0
    %2324 = vmatpush1.bf16.msra.mxu0 0
    %2325 = vmatprep.subr.bf16.mxu0 0
    %2326 = vmatpush1.bf16.msra.mxu0 0
    %2327 = vmatprep.subr.bf16.mxu0 0
    %2328 = vmatpush1.bf16.msra.mxu0 0
    %2329 = vmatprep.subr.bf16.mxu0 0
    %2330 = vmatpush1.bf16.msra.mxu0 0
    %2331 = vmatprep.subr.bf16.mxu0 0
    %2332 = vmatpush1.bf16.msra.mxu0 0
    %2333 = vmatprep.subr.bf16.mxu0 0
    %2334 = vmatpush1.bf16.msra.mxu0 0
    %2335 = vmatprep.subr.bf16.mxu0 0
    %2336 = vmatpush1.bf16.msra.mxu0 0
    %2337 = vmatprep.subr.bf16.mxu0 0
    %2338 = vmatpush1.bf16.msra.mxu0 0
    %2339 = vmatprep.mubr.bf16.mxu0 0
    %2340 = vmatmul.mubr.bf16.gmra.mrb[0].mxu0 %v2305
    %v2341 = vpop.f32.mrb[0].mxu0
    %v2342 = vadd.f32 %v2290, %v2341
    %v2343 = vpop.f32.mrb[0].mxu0
    %v2344 = vpop.f32.mrb[0].mxu0
    %v2345 = vadd.f32 %v2290, %v2344
    %v2346 = vpop.f32.mrb[0].mxu0
    %2347 = vdwg.mxu0
    %v2348 = vmax.f32 %v2342, 0.0
    %v2349 = vmax.f32 %v2345, 0.0
    %v2350 = vpack.c.bf16 %v2349, %v2348
    %v2351 = vld [vmem:[%s7] sm:$0xf]
    %v2352 = vld [vmem:[%s7 + $0x4] sm:$0xf]
    %v2353 = vld [vmem:[%s7 + $0x8] sm:$0xf]
    %v2354 = vld [vmem:[%s7 + $0xc] sm:$0xf]
    %v2355 = vld [vmem:[%s7 + $0x10] sm:$0xf]
    %v2356 = vld [vmem:[%s7 + $0x14] sm:$0xf]
    %v2357 = vld [vmem:[%s7 + $0x18] sm:$0xf]
    %v2358 = vld [vmem:[%s7 + $0x1c] sm:$0xf]
    %v2359 = vld [vmem:[%s8] sm:$0x1]
    %v2361 = vlaneseq
    %v2362 = vshrl.u32 %v2361, 7
    %v2363 = vsub.s32 0, %v2362
    %v2364 = vrot.slane %v2359, %v2363
    %v2374 = vunpack.c.l.b16 %v2351
    %v2375 = vunpack.c.l.b16 %v2352
    %v2376 = vunpack.c.l.b16 %v2353
    %v2377 = vunpack.c.l.b16 %v2354
    %v2378 = vunpack.c.l.b16 %v2355
    %v2379 = vunpack.c.l.b16 %v2356
    %v2380 = vunpack.c.l.b16 %v2357
    %v2381 = vunpack.c.l.b16 %v2358
    %v2382 = vpack.c.b16 %v2375, %v2374
    %v2383 = vpack.c.b16 %v2377, %v2376
    %v2384 = vpack.c.b16 %v2379, %v2378
    %v2385 = vpack.c.b16 %v2381, %v2380
    %vm2390 = vcmask 523264
    %v2392 = vsel %vm2390, %v2350, 0
    %2394 = vmatprep.subr.bf16.mxu0 0
    %2395 = vmatpush1.bf16.msra.mxu0 %v2382
    %2396 = vmatprep.subr.bf16.mxu0 0
    %2397 = vmatpush1.bf16.msra.mxu0 %v2383
    %2398 = vmatprep.subr.bf16.mxu0 0
    %2399 = vmatpush1.bf16.msra.mxu0 %v2384
    %2400 = vmatprep.subr.bf16.mxu0 0
    %2401 = vmatpush1.bf16.msra.mxu0 %v2385
    %2402 = vmatprep.subr.bf16.mxu0 0
    %2403 = vmatpush1.bf16.msra.mxu0 0
    %2404 = vmatprep.subr.bf16.mxu0 0
    %2405 = vmatpush1.bf16.msra.mxu0 0
    %2406 = vmatprep.subr.bf16.mxu0 0
    %2407 = vmatpush1.bf16.msra.mxu0 0
    %2408 = vmatprep.subr.bf16.mxu0 0
    %2409 = vmatpush1.bf16.msra.mxu0 0
    %2410 = vmatprep.subr.bf16.mxu0 0
    %2411 = vmatpush1.bf16.msra.mxu0 0
    %2412 = vmatprep.subr.bf16.mxu0 0
    %2413 = vmatpush1.bf16.msra.mxu0 0
    %2414 = vmatprep.subr.bf16.mxu0 0
    %2415 = vmatpush1.bf16.msra.mxu0 0
    %2416 = vmatprep.subr.bf16.mxu0 0
    %2417 = vmatpush1.bf16.msra.mxu0 0
    %2418 = vmatprep.subr.bf16.mxu0 0
    %2419 = vmatpush1.bf16.msra.mxu0 0
    %2420 = vmatprep.subr.bf16.mxu0 0
    %2421 = vmatpush1.bf16.msra.mxu0 0
    %2422 = vmatprep.subr.bf16.mxu0 0
    %2423 = vmatpush1.bf16.msra.mxu0 0
    %2424 = vmatprep.subr.bf16.mxu0 0
    %2425 = vmatpush1.bf16.msra.mxu0 0
    %2426 = vmatprep.mubr.bf16.mxu0 0
    %2427 = vmatmul.mubr.bf16.gmra.mrb[0].mxu0 %v2392
    %v2428 = vpop.f32.mrb[0].mxu0
    %v2429 = vadd.f32 %v2364, %v2428
    %v2430 = vpop.f32.mrb[0].mxu0
    %v2431 = vpop.f32.mrb[0].mxu0
    %v2432 = vadd.f32 %v2364, %v2431
    %v2433 = vpop.f32.mrb[0].mxu0
    %2434 = vdwg.mxu0
    %v2435 = vadd.f32 %v2278, %v2429
    %v2436 = vadd.f32 %v2279, %v2432
    %v2437 = vld [vmem:[%s9] sm:$0x1]
    %v2438 = vld [vmem:[%s10] sm:$0x1]
    %v2439 = vsel %vm77, %v2435, 0.0
    %2440 = vadd.xlane.f32.xlu0 %v2439
    %v2441 = vpop.xlane.xlu0 %2440
    %v2442 = vsel %vm77, %v2436, 0.0
    %2443 = vadd.xlane.f32.xlu0 %v2442
    %v2444 = vpop.xlane.xlu0 %2443
    %v2445 = vmul.f32 %v2441, %v2243
    %v2446 = vmul.f32 %v2444, %v2243
    %v2447 = vsub.f32 %v2435, %v2445
    %v2448 = vsub.f32 %v2436, %v2446
    %v2449 = vmul.f32 %v2447, %v2447
    %v2450 = vmul.f32 %v2448, %v2448
    %v2451 = vsel %vm77, %v2449, 0.0
    %2452 = vadd.xlane.f32.xlu0 %v2451
    %v2453 = vpop.xlane.xlu0 %2452
    %v2454 = vsel %vm77, %v2450, 0.0
    %2455 = vadd.xlane.f32.xlu0 %v2454
    %v2456 = vpop.xlane.xlu0 %2455
    %v2457 = vmul.f32 %v2453, %v2243
    %v2458 = vmul.f32 %v2456, %v2243
    %v2459 = vadd.f32 %v2457, 1e-05
    %v2460 = vadd.f32 %v2458, 1e-05
    %v2461 = vrsqrt.pop %v2459
    %v2462 = vrsqrt.pop %v2460
    %v2463 = vmul.f32 %v2447, %v2461
    %v2464 = vmul.f32 %v2448, %v2462
    %v2466 = vlaneseq
    %v2467 = vshrl.u32 %v2466, 7
    %v2468 = vsub.s32 0, %v2467
    %v2469 = vrot.slane %v2437, %v2468
    %v2471 = vmul.f32 %v2463, %v2469
    %v2472 = vmul.f32 %v2464, %v2469
    %v2474 = vlaneseq
    %v2475 = vshrl.u32 %v2474, 7
    %v2476 = vsub.s32 0, %v2475
    %v2477 = vrot.slane %v2438, %v2476
    %v2479 = vadd.f32 %v2471, %v2477
    %v2480 = vadd.f32 %v2472, %v2477
    %s2481 = scalar_lea.vmem %s1, 16
    %v2482 = vld [vmem:[%s2481] sm:$0xf]
    %v2483 = vld [vmem:[%s2481 + $0x4] sm:$0xf]
    %v2484 = vld [vmem:[%s2481 + $0x8] sm:$0xf]
    %v2485 = vld [vmem:[%s2481 + $0xc] sm:$0xf]
    %s2486 = scalar_lea.vmem %s2, 16
    %v2487 = vld [vmem:[%s2486] sm:$0xf]
    %v2488 = vld [vmem:[%s2486 + $0x4] sm:$0xf]
    %v2489 = vld [vmem:[%s2486 + $0x8] sm:$0xf]
    %v2490 = vld [vmem:[%s2486 + $0xc] sm:$0xf]
    %v2491 = vpack.c.bf16 %v2480, %v2479
    %v2496 = vunpack.c.l.b16 %v2482
    %v2497 = vunpack.c.l.b16 %v2483
    %v2498 = vunpack.c.l.b16 %v2484
    %v2499 = vunpack.c.l.b16 %v2485
    %v2500 = vpack.c.b16 %v2497, %v2496
    %v2501 = vpack.c.b16 %v2499, %v2498
    %v2505 = vsel %vm77, %v2491, 0
    %2507 = vmatprep.subr.bf16.mxu0 0
    %2508 = vmatpush1.bf16.msra.mxu0 %v2500
    %2509 = vmatprep.subr.bf16.mxu0 0
    %2510 = vmatpush1.bf16.msra.mxu0 %v2501
    %2511 = vmatprep.subr.bf16.mxu0 0
    %2512 = vmatpush1.bf16.msra.mxu0 0
    %2513 = vmatprep.subr.bf16.mxu0 0
    %2514 = vmatpush1.bf16.msra.mxu0 0
    %2515 = vmatprep.subr.bf16.mxu0 0
    %2516 = vmatpush1.bf16.msra.mxu0 0
    %2517 = vmatprep.subr.bf16.mxu0 0
    %2518 = vmatpush1.bf16.msra.mxu0 0
    %2519 = vmatprep.subr.bf16.mxu0 0
    %2520 = vmatpush1.bf16.msra.mxu0 0
    %2521 = vmatprep.subr.bf16.mxu0 0
    %2522 = vmatpush1.bf16.msra.mxu0 0
    %2523 = vmatprep.subr.bf16.mxu0 0
    %2524 = vmatpush1.bf16.msra.mxu0 0
    %2525 = vmatprep.subr.bf16.mxu0 0
    %2526 = vmatpush1.bf16.msra.mxu0 0
    %2527 = vmatprep.subr.bf16.mxu0 0
    %2528 = vmatpush1.bf16.msra.mxu0 0
    %2529 = vmatprep.subr.bf16.mxu0 0
    %2530 = vmatpush1.bf16.msra.mxu0 0
    %2531 = vmatprep.subr.bf16.mxu0 0
    %2532 = vmatpush1.bf16.msra.mxu0 0
    %2533 = vmatprep.subr.bf16.mxu0 0
    %2534 = vmatpush1.bf16.msra.mxu0 0
    %2535 = vmatprep.subr.bf16.mxu0 0
    %2536 = vmatpush1.bf16.msra.mxu0 0
    %2537 = vmatprep.subr.bf16.mxu0 0
    %2538 = vmatpush1.bf16.msra.mxu0 0
    %2539 = vmatprep.mubr.bf16.mxu0 0
    %2540 = vmatmul.mubr.bf16.gmra.mrb[0].mxu0 %v2505
    %v2541 = vpop.f32.mrb[0].mxu0
    %v2542 = vadd.f32 0.0, %v2541
    %v2543 = vpop.f32.mrb[0].mxu0
    %v2544 = vpop.f32.mrb[0].mxu0
    %v2545 = vadd.f32 0.0, %v2544
    %v2546 = vpop.f32.mrb[0].mxu0
    %2547 = vdwg.mxu0
    %2550 = vrot.lane.b32.xlu0 %v2542, 120
    %v2551 = vpop.permute.xlu0 %2550
    %2552 = vrot.lane.b32.xlu0 %v2545, 120
    %v2553 = vpop.permute.xlu0 %2552
    %2556 = vrot.lane.b32.xlu0 %v2542, 112
    %v2557 = vpop.permute.xlu0 %2556
    %2558 = vrot.lane.b32.xlu0 %v2545, 112
    %v2559 = vpop.permute.xlu0 %2558
    %2562 = vrot.lane.b32.xlu0 %v2542, 104
    %v2563 = vpop.permute.xlu0 %2562
    %2564 = vrot.lane.b32.xlu0 %v2545, 104
    %v2565 = vpop.permute.xlu0 %2564
    %2568 = vrot.lane.b32.xlu0 %v2542, 96
    %v2569 = vpop.permute.xlu0 %2568
    %2570 = vrot.lane.b32.xlu0 %v2545, 96
    %v2571 = vpop.permute.xlu0 %2570
    %2574 = vrot.lane.b32.xlu0 %v2542, 88
    %v2575 = vpop.permute.xlu0 %2574
    %2576 = vrot.lane.b32.xlu0 %v2545, 88
    %v2577 = vpop.permute.xlu0 %2576
    %2580 = vrot.lane.b32.xlu0 %v2542, 80
    %v2581 = vpop.permute.xlu0 %2580
    %2582 = vrot.lane.b32.xlu0 %v2545, 80
    %v2583 = vpop.permute.xlu0 %2582
    %2586 = vrot.lane.b32.xlu0 %v2542, 72
    %v2587 = vpop.permute.xlu0 %2586
    %2588 = vrot.lane.b32.xlu0 %v2545, 72
    %v2589 = vpop.permute.xlu0 %2588
    %2592 = vrot.lane.b32.xlu0 %v2542, 64
    %v2593 = vpop.permute.xlu0 %2592
    %2594 = vrot.lane.b32.xlu0 %v2545, 64
    %v2595 = vpop.permute.xlu0 %2594
    %2598 = vrot.lane.b32.xlu0 %v2542, 56
    %v2599 = vpop.permute.xlu0 %2598
    %2600 = vrot.lane.b32.xlu0 %v2545, 56
    %v2601 = vpop.permute.xlu0 %2600
    %2604 = vrot.lane.b32.xlu0 %v2542, 48
    %v2605 = vpop.permute.xlu0 %2604
    %2606 = vrot.lane.b32.xlu0 %v2545, 48
    %v2607 = vpop.permute.xlu0 %2606
    %2610 = vrot.lane.b32.xlu0 %v2542, 40
    %v2611 = vpop.permute.xlu0 %2610
    %2612 = vrot.lane.b32.xlu0 %v2545, 40
    %v2613 = vpop.permute.xlu0 %2612
    %v2616 = vcombine.low %v2542, %v2557
    %v2617 = vcombine.high %v2542, %v2557
    %v2619 = vunpack.c.l.s4 1983009808
    %v2620 = vunpack.c.0.s8 %v2619
    %v2621 = vlaneseq
    %v2622 = vshrl.u32 %v2621, 7
    %v2623 = vsub.s32 %v2620, %v2622
    %v2624 = vrot.slane %v2616, %v2623
    %v2626 = vunpack.c.l.s4 1983009808
    %v2627 = vunpack.c.0.s8 %v2626
    %v2628 = vlaneseq
    %v2629 = vshrl.u32 %v2628, 7
    %v2630 = vsub.s32 %v2627, %v2629
    %v2631 = vrot.slane %v2617, %v2630
    %v2632 = vcombine.low %v2551, %v2563
    %v2633 = vcombine.high %v2551, %v2563
    %v2635 = vunpack.c.l.s4 1983009808
    %v2636 = vunpack.c.0.s8 %v2635
    %v2637 = vlaneseq
    %v2638 = vshrl.u32 %v2637, 7
    %v2639 = vsub.s32 %v2636, %v2638
    %v2640 = vrot.slane %v2632, %v2639
    %v2642 = vunpack.c.l.s4 1983009808
    %v2643 = vunpack.c.0.s8 %v2642
    %v2644 = vlaneseq
    %v2645 = vshrl.u32 %v2644, 7
    %v2646 = vsub.s32 %v2643, %v2645
    %v2647 = vrot.slane %v2633, %v2646
    %v2648 = vcombine.low %v2569, %v2581
    %v2649 = vcombine.high %v2569, %v2581
    %v2651 = vunpack.c.l.s4 1983009808
    %v2652 = vunpack.c.0.s8 %v2651
    %v2653 = vlaneseq
    %v2654 = vshrl.u32 %v2653, 7
    %v2655 = vsub.s32 %v2652, %v2654
    %v2656 = vrot.slane %v2648, %v2655
    %v2658 = vunpack.c.l.s4 1983009808
    %v2659 = vunpack.c.0.s8 %v2658
    %v2660 = vlaneseq
    %v2661 = vshrl.u32 %v2660, 7
    %v2662 = vsub.s32 %v2659, %v2661
    %v2663 = vrot.slane %v2649, %v2662
    %v2664 = vcombine.low %v2575, %v2587
    %v2665 = vcombine.high %v2575, %v2587
    %v2667 = vunpack.c.l.s4 1983009808
    %v2668 = vunpack.c.0.s8 %v2667
    %v2669 = vlaneseq
    %v2670 = vshrl.u32 %v2669, 7
    %v2671 = vsub.s32 %v2668, %v2670
    %v2672 = vrot.slane %v2664, %v2671
    %v2674 = vunpack.c.l.s4 1983009808
    %v2675 = vunpack.c.0.s8 %v2674
    %v2676 = vlaneseq
    %v2677 = vshrl.u32 %v2676, 7
    %v2678 = vsub.s32 %v2675, %v2677
    %v2679 = vrot.slane %v2665, %v2678
    %v2680 = vcombine.low %v2624, %v2640
    %v2681 = vcombine.high %v2624, %v2640
    %v2683 = vunpack.c.l.s4 1934713408
    %v2684 = vunpack.c.0.s8 %v2683
    %v2685 = vlaneseq
    %v2686 = vshrl.u32 %v2685, 7
    %v2687 = vsub.s32 %v2684, %v2686
    %v2688 = vrot.slane %v2680, %v2687
    %v2690 = vunpack.c.l.s4 1934713408
    %v2691 = vunpack.c.0.s8 %v2690
    %v2692 = vlaneseq
    %v2693 = vshrl.u32 %v2692, 7
    %v2694 = vsub.s32 %v2691, %v2693
    %v2695 = vrot.slane %v2681, %v2694
    %v2696 = vcombine.low %v2631, %v2647
    %v2697 = vcombine.high %v2631, %v2647
    %v2699 = vunpack.c.l.s4 1934713408
    %v2700 = vunpack.c.0.s8 %v2699
    %v2701 = vlaneseq
    %v2702 = vshrl.u32 %v2701, 7
    %v2703 = vsub.s32 %v2700, %v2702
    %v2704 = vrot.slane %v2696, %v2703
    %v2706 = vunpack.c.l.s4 1934713408
    %v2707 = vunpack.c.0.s8 %v2706
    %v2708 = vlaneseq
    %v2709 = vshrl.u32 %v2708, 7
    %v2710 = vsub.s32 %v2707, %v2709
    %v2711 = vrot.slane %v2697, %v2710
    %v2712 = vcombine.low %v2656, %v2672
    %v2713 = vcombine.high %v2656, %v2672
    %v2715 = vunpack.c.l.s4 1934713408
    %v2716 = vunpack.c.0.s8 %v2715
    %v2717 = vlaneseq
    %v2718 = vshrl.u32 %v2717, 7
    %v2719 = vsub.s32 %v2716, %v2718
    %v2720 = vrot.slane %v2712, %v2719
    %v2722 = vunpack.c.l.s4 1934713408
    %v2723 = vunpack.c.0.s8 %v2722
    %v2724 = vlaneseq
    %v2725 = vshrl.u32 %v2724, 7
    %v2726 = vsub.s32 %v2723, %v2725
    %v2727 = vrot.slane %v2713, %v2726
    %v2728 = vcombine.low %v2663, %v2679
    %v2729 = vcombine.high %v2663, %v2679
    %v2731 = vunpack.c.l.s4 1934713408
    %v2732 = vunpack.c.0.s8 %v2731
    %v2733 = vlaneseq
    %v2734 = vshrl.u32 %v2733, 7
    %v2735 = vsub.s32 %v2732, %v2734
    %v2736 = vrot.slane %v2728, %v2735
    %v2738 = vunpack.c.l.s4 1934713408
    %v2739 = vunpack.c.0.s8 %v2738
    %v2740 = vlaneseq
    %v2741 = vshrl.u32 %v2740, 7
    %v2742 = vsub.s32 %v2739, %v2741
    %v2743 = vrot.slane %v2729, %v2742
    %v2744 = vcombine.low %v2688, %v2720
    %v2745 = vcombine.high %v2688, %v2720
    %v2746 = vcombine.low %v2695, %v2727
    %v2747 = vcombine.high %v2695, %v2727
    %v2748 = vcombine.low %v2704, %v2736
    %v2749 = vcombine.high %v2704, %v2736
    %v2750 = vcombine.low %v2711, %v2743
    %v2751 = vcombine.high %v2711, %v2743
    %v2752 = vcombine.low %v2593, %v2605
    %v2753 = vcombine.high %v2593, %v2605
    %v2755 = vunpack.c.l.s4 1983009808
    %v2756 = vunpack.c.0.s8 %v2755
    %v2757 = vlaneseq
    %v2758 = vshrl.u32 %v2757, 7
    %v2759 = vsub.s32 %v2756, %v2758
    %v2760 = vrot.slane %v2752, %v2759
    %v2762 = vunpack.c.l.s4 1983009808
    %v2763 = vunpack.c.0.s8 %v2762
    %v2764 = vlaneseq
    %v2765 = vshrl.u32 %v2764, 7
    %v2766 = vsub.s32 %v2763, %v2765
    %v2767 = vrot.slane %v2753, %v2766
    %v2768 = vcombine.low %v2599, %v2611
    %v2769 = vcombine.high %v2599, %v2611
    %v2771 = vunpack.c.l.s4 1983009808
    %v2772 = vunpack.c.0.s8 %v2771
    %v2773 = vlaneseq
    %v2774 = vshrl.u32 %v2773, 7
    %v2775 = vsub.s32 %v2772, %v2774
    %v2776 = vrot.slane %v2768, %v2775
    %v2778 = vunpack.c.l.s4 1983009808
    %v2779 = vunpack.c.0.s8 %v2778
    %v2780 = vlaneseq
    %v2781 = vshrl.u32 %v2780, 7
    %v2782 = vsub.s32 %v2779, %v2781
    %v2783 = vrot.slane %v2769, %v2782
    %v2784 = vcombine.low %v2760, %v2776
    %v2785 = vcombine.high %v2760, %v2776
    %v2787 = vunpack.c.l.s4 1934713408
    %v2788 = vunpack.c.0.s8 %v2787
    %v2789 = vlaneseq
    %v2790 = vshrl.u32 %v2789, 7
    %v2791 = vsub.s32 %v2788, %v2790
    %v2792 = vrot.slane %v2784, %v2791
    %v2794 = vunpack.c.l.s4 1934713408
    %v2795 = vunpack.c.0.s8 %v2794
    %v2796 = vlaneseq
    %v2797 = vshrl.u32 %v2796, 7
    %v2798 = vsub.s32 %v2795, %v2797
    %v2799 = vrot.slane %v2785, %v2798
    %v2800 = vcombine.low %v2767, %v2783
    %v2801 = vcombine.high %v2767, %v2783
    %v2803 = vunpack.c.l.s4 1934713408
    %v2804 = vunpack.c.0.s8 %v2803
    %v2805 = vlaneseq
    %v2806 = vshrl.u32 %v2805, 7
    %v2807 = vsub.s32 %v2804, %v2806
    %v2808 = vrot.slane %v2800, %v2807
    %v2810 = vunpack.c.l.s4 1934713408
    %v2811 = vunpack.c.0.s8 %v2810
    %v2812 = vlaneseq
    %v2813 = vshrl.u32 %v2812, 7
    %v2814 = vsub.s32 %v2811, %v2813
    %v2815 = vrot.slane %v2801, %v2814
    %v2816 = vcombine.high %v2792, 0.0
    %v2817 = vcombine.high %v2799, 0.0
    %v2818 = vcombine.high %v2808, 0.0
    %v2819 = vcombine.high %v2815, 0.0
    %v2820 = vcombine.low %v2545, %v2559
    %v2821 = vcombine.high %v2545, %v2559
    %v2823 = vunpack.c.l.s4 1983009808
    %v2824 = vunpack.c.0.s8 %v2823
    %v2825 = vlaneseq
    %v2826 = vshrl.u32 %v2825, 7
    %v2827 = vsub.s32 %v2824, %v2826
    %v2828 = vrot.slane %v2820, %v2827
    %v2830 = vunpack.c.l.s4 1983009808
    %v2831 = vunpack.c.0.s8 %v2830
    %v2832 = vlaneseq
    %v2833 = vshrl.u32 %v2832, 7
    %v2834 = vsub.s32 %v2831, %v2833
    %v2835 = vrot.slane %v2821, %v2834
    %v2836 = vcombine.low %v2553, %v2565
    %v2837 = vcombine.high %v2553, %v2565
    %v2839 = vunpack.c.l.s4 1983009808
    %v2840 = vunpack.c.0.s8 %v2839
    %v2841 = vlaneseq
    %v2842 = vshrl.u32 %v2841, 7
    %v2843 = vsub.s32 %v2840, %v2842
    %v2844 = vrot.slane %v2836, %v2843
    %v2846 = vunpack.c.l.s4 1983009808
    %v2847 = vunpack.c.0.s8 %v2846
    %v2848 = vlaneseq
    %v2849 = vshrl.u32 %v2848, 7
    %v2850 = vsub.s32 %v2847, %v2849
    %v2851 = vrot.slane %v2837, %v2850
    %v2852 = vcombine.low %v2571, %v2583
    %v2853 = vcombine.high %v2571, %v2583
    %v2855 = vunpack.c.l.s4 1983009808
    %v2856 = vunpack.c.0.s8 %v2855
    %v2857 = vlaneseq
    %v2858 = vshrl.u32 %v2857, 7
    %v2859 = vsub.s32 %v2856, %v2858
    %v2860 = vrot.slane %v2852, %v2859
    %v2862 = vunpack.c.l.s4 1983009808
    %v2863 = vunpack.c.0.s8 %v2862
    %v2864 = vlaneseq
    %v2865 = vshrl.u32 %v2864, 7
    %v2866 = vsub.s32 %v2863, %v2865
    %v2867 = vrot.slane %v2853, %v2866
    %v2868 = vcombine.low %v2577, %v2589
    %v2869 = vcombine.high %v2577, %v2589
    %v2871 = vunpack.c.l.s4 1983009808
    %v2872 = vunpack.c.0.s8 %v2871
    %v2873 = vlaneseq
    %v2874 = vshrl.u32 %v2873, 7
    %v2875 = vsub.s32 %v2872, %v2874
    %v2876 = vrot.slane %v2868, %v2875
    %v2878 = vunpack.c.l.s4 1983009808
    %v2879 = vunpack.c.0.s8 %v2878
    %v2880 = vlaneseq
    %v2881 = vshrl.u32 %v2880, 7
    %v2882 = vsub.s32 %v2879, %v2881
    %v2883 = vrot.slane %v2869, %v2882
    %v2884 = vcombine.low %v2828, %v2844
    %v2885 = vcombine.high %v2828, %v2844
    %v2887 = vunpack.c.l.s4 1934713408
    %v2888 = vunpack.c.0.s8 %v2887
    %v2889 = vlaneseq
    %v2890 = vshrl.u32 %v2889, 7
    %v2891 = vsub.s32 %v2888, %v2890
    %v2892 = vrot.slane %v2884, %v2891
    %v2894 = vunpack.c.l.s4 1934713408
    %v2895 = vunpack.c.0.s8 %v2894
    %v2896 = vlaneseq
    %v2897 = vshrl.u32 %v2896, 7
    %v2898 = vsub.s32 %v2895, %v2897
    %v2899 = vrot.slane %v2885, %v2898
    %v2900 = vcombine.low %v2835, %v2851
    %v2901 = vcombine.high %v2835, %v2851
    %v2903 = vunpack.c.l.s4 1934713408
    %v2904 = vunpack.c.0.s8 %v2903
    %v2905 = vlaneseq
    %v2906 = vshrl.u32 %v2905, 7
    %v2907 = vsub.s32 %v2904, %v2906
    %v2908 = vrot.slane %v2900, %v2907
    %v2910 = vunpack.c.l.s4 1934713408
    %v2911 = vunpack.c.0.s8 %v2910
    %v2912 = vlaneseq
    %v2913 = vshrl.u32 %v2912, 7
    %v2914 = vsub.s32 %v2911, %v2913
    %v2915 = vrot.slane %v2901, %v2914
    %v2916 = vcombine.low %v2860, %v2876
    %v2917 = vcombine.high %v2860, %v2876
    %v2919 = vunpack.c.l.s4 1934713408
    %v2920 = vunpack.c.0.s8 %v2919
    %v2921 = vlaneseq
    %v2922 = vshrl.u32 %v2921, 7
    %v2923 = vsub.s32 %v2920, %v2922
    %v2924 = vrot.slane %v2916, %v2923
    %v2926 = vunpack.c.l.s4 1934713408
    %v2927 = vunpack.c.0.s8 %v2926
    %v2928 = vlaneseq
    %v2929 = vshrl.u32 %v2928, 7
    %v2930 = vsub.s32 %v2927, %v2929
    %v2931 = vrot.slane %v2917, %v2930
    %v2932 = vcombine.low %v2867, %v2883
    %v2933 = vcombine.high %v2867, %v2883
    %v2935 = vunpack.c.l.s4 1934713408
    %v2936 = vunpack.c.0.s8 %v2935
    %v2937 = vlaneseq
    %v2938 = vshrl.u32 %v2937, 7
    %v2939 = vsub.s32 %v2936, %v2938
    %v2940 = vrot.slane %v2932, %v2939
    %v2942 = vunpack.c.l.s4 1934713408
    %v2943 = vunpack.c.0.s8 %v2942
    %v2944 = vlaneseq
    %v2945 = vshrl.u32 %v2944, 7
    %v2946 = vsub.s32 %v2943, %v2945
    %v2947 = vrot.slane %v2933, %v2946
    %v2948 = vcombine.low %v2892, %v2924
    %v2949 = vcombine.high %v2892, %v2924
    %v2950 = vcombine.low %v2899, %v2931
    %v2951 = vcombine.high %v2899, %v2931
    %v2952 = vcombine.low %v2908, %v2940
    %v2953 = vcombine.high %v2908, %v2940
    %v2954 = vcombine.low %v2915, %v2947
    %v2955 = vcombine.high %v2915, %v2947
    %v2956 = vcombine.low %v2595, %v2607
    %v2957 = vcombine.high %v2595, %v2607
    %v2959 = vunpack.c.l.s4 1983009808
    %v2960 = vunpack.c.0.s8 %v2959
    %v2961 = vlaneseq
    %v2962 = vshrl.u32 %v2961, 7
    %v2963 = vsub.s32 %v2960, %v2962
    %v2964 = vrot.slane %v2956, %v2963
    %v2966 = vunpack.c.l.s4 1983009808
    %v2967 = vunpack.c.0.s8 %v2966
    %v2968 = vlaneseq
    %v2969 = vshrl.u32 %v2968, 7
    %v2970 = vsub.s32 %v2967, %v2969
    %v2971 = vrot.slane %v2957, %v2970
    %v2972 = vcombine.low %v2601, %v2613
    %v2973 = vcombine.high %v2601, %v2613
    %v2975 = vunpack.c.l.s4 1983009808
    %v2976 = vunpack.c.0.s8 %v2975
    %v2977 = vlaneseq
    %v2978 = vshrl.u32 %v2977, 7
    %v2979 = vsub.s32 %v2976, %v2978
    %v2980 = vrot.slane %v2972, %v2979
    %v2982 = vunpack.c.l.s4 1983009808
    %v2983 = vunpack.c.0.s8 %v2982
    %v2984 = vlaneseq
    %v2985 = vshrl.u32 %v2984, 7
    %v2986 = vsub.s32 %v2983, %v2985
    %v2987 = vrot.slane %v2973, %v2986
    %v2988 = vcombine.low %v2964, %v2980
    %v2989 = vcombine.high %v2964, %v2980
    %v2991 = vunpack.c.l.s4 1934713408
    %v2992 = vunpack.c.0.s8 %v2991
    %v2993 = vlaneseq
    %v2994 = vshrl.u32 %v2993, 7
    %v2995 = vsub.s32 %v2992, %v2994
    %v2996 = vrot.slane %v2988, %v2995
    %v2998 = vunpack.c.l.s4 1934713408
    %v2999 = vunpack.c.0.s8 %v2998
    %v3000 = vlaneseq
    %v3001 = vshrl.u32 %v3000, 7
    %v3002 = vsub.s32 %v2999, %v3001
    %v3003 = vrot.slane %v2989, %v3002
    %v3004 = vcombine.low %v2971, %v2987
    %v3005 = vcombine.high %v2971, %v2987
    %v3007 = vunpack.c.l.s4 1934713408
    %v3008 = vunpack.c.0.s8 %v3007
    %v3009 = vlaneseq
    %v3010 = vshrl.u32 %v3009, 7
    %v3011 = vsub.s32 %v3008, %v3010
    %v3012 = vrot.slane %v3004, %v3011
    %v3014 = vunpack.c.l.s4 1934713408
    %v3015 = vunpack.c.0.s8 %v3014
    %v3016 = vlaneseq
    %v3017 = vshrl.u32 %v3016, 7
    %v3018 = vsub.s32 %v3015, %v3017
    %v3019 = vrot.slane %v3005, %v3018
    %v3020 = vcombine.high %v2996, 0.0
    %v3021 = vcombine.high %v3003, 0.0
    %v3022 = vcombine.high %v3012, 0.0
    %v3023 = vcombine.high %v3019, 0.0
    %v3024 = vcombine.low %v2744, %v2746
    %v3025 = vcombine.high %v2744, %v2746
    %v3027 = vunpack.c.l.s4 1983009808
    %v3028 = vunpack.c.0.s8 %v3027
    %v3029 = vlaneseq
    %v3030 = vshrl.u32 %v3029, 7
    %v3031 = vsub.s32 %v3028, %v3030
    %v3032 = vrot.slane %v3024, %v3031
    %v3034 = vunpack.c.l.s4 1983009808
    %v3035 = vunpack.c.0.s8 %v3034
    %v3036 = vlaneseq
    %v3037 = vshrl.u32 %v3036, 7
    %v3038 = vsub.s32 %v3035, %v3037
    %v3039 = vrot.slane %v3025, %v3038
    %v3040 = vcombine.low %v2745, %v2747
    %v3041 = vcombine.high %v2745, %v2747
    %v3043 = vunpack.c.l.s4 1983009808
    %v3044 = vunpack.c.0.s8 %v3043
    %v3045 = vlaneseq
    %v3046 = vshrl.u32 %v3045, 7
    %v3047 = vsub.s32 %v3044, %v3046
    %v3048 = vrot.slane %v3040, %v3047
    %v3050 = vunpack.c.l.s4 1983009808
    %v3051 = vunpack.c.0.s8 %v3050
    %v3052 = vlaneseq
    %v3053 = vshrl.u32 %v3052, 7
    %v3054 = vsub.s32 %v3051, %v3053
    %v3055 = vrot.slane %v3041, %v3054
    %v3056 = vcombine.low %v2748, %v2750
    %v3057 = vcombine.high %v2748, %v2750
    %v3059 = vunpack.c.l.s4 1983009808
    %v3060 = vunpack.c.0.s8 %v3059
    %v3061 = vlaneseq
    %v3062 = vshrl.u32 %v3061, 7
    %v3063 = vsub.s32 %v3060, %v3062
    %v3064 = vrot.slane %v3056, %v3063
    %v3066 = vunpack.c.l.s4 1983009808
    %v3067 = vunpack.c.0.s8 %v3066
    %v3068 = vlaneseq
    %v3069 = vshrl.u32 %v3068, 7
    %v3070 = vsub.s32 %v3067, %v3069
    %v3071 = vrot.slane %v3057, %v3070
    %v3072 = vcombine.low %v2749, %v2751
    %v3073 = vcombine.high %v2749, %v2751
    %v3075 = vunpack.c.l.s4 1983009808
    %v3076 = vunpack.c.0.s8 %v3075
    %v3077 = vlaneseq
    %v3078 = vshrl.u32 %v3077, 7
    %v3079 = vsub.s32 %v3076, %v3078
    %v3080 = vrot.slane %v3072, %v3079
    %v3082 = vunpack.c.l.s4 1983009808
    %v3083 = vunpack.c.0.s8 %v3082
    %v3084 = vlaneseq
    %v3085 = vshrl.u32 %v3084, 7
    %v3086 = vsub.s32 %v3083, %v3085
    %v3087 = vrot.slane %v3073, %v3086
    %v3088 = vcombine.low %v3032, %v3048
    %v3089 = vcombine.high %v3032, %v3048
    %v3091 = vunpack.c.l.s4 1934713408
    %v3092 = vunpack.c.0.s8 %v3091
    %v3093 = vlaneseq
    %v3094 = vshrl.u32 %v3093, 7
    %v3095 = vsub.s32 %v3092, %v3094
    %v3096 = vrot.slane %v3088, %v3095
    %v3098 = vunpack.c.l.s4 1934713408
    %v3099 = vunpack.c.0.s8 %v3098
    %v3100 = vlaneseq
    %v3101 = vshrl.u32 %v3100, 7
    %v3102 = vsub.s32 %v3099, %v3101
    %v3103 = vrot.slane %v3089, %v3102
    %v3104 = vcombine.low %v3039, %v3055
    %v3105 = vcombine.high %v3039, %v3055
    %v3107 = vunpack.c.l.s4 1934713408
    %v3108 = vunpack.c.0.s8 %v3107
    %v3109 = vlaneseq
    %v3110 = vshrl.u32 %v3109, 7
    %v3111 = vsub.s32 %v3108, %v3110
    %v3112 = vrot.slane %v3104, %v3111
    %v3114 = vunpack.c.l.s4 1934713408
    %v3115 = vunpack.c.0.s8 %v3114
    %v3116 = vlaneseq
    %v3117 = vshrl.u32 %v3116, 7
    %v3118 = vsub.s32 %v3115, %v3117
    %v3119 = vrot.slane %v3105, %v3118
    %v3120 = vcombine.low %v3064, %v3080
    %v3121 = vcombine.high %v3064, %v3080
    %v3123 = vunpack.c.l.s4 1934713408
    %v3124 = vunpack.c.0.s8 %v3123
    %v3125 = vlaneseq
    %v3126 = vshrl.u32 %v3125, 7
    %v3127 = vsub.s32 %v3124, %v3126
    %v3128 = vrot.slane %v3120, %v3127
    %v3130 = vunpack.c.l.s4 1934713408
    %v3131 = vunpack.c.0.s8 %v3130
    %v3132 = vlaneseq
    %v3133 = vshrl.u32 %v3132, 7
    %v3134 = vsub.s32 %v3131, %v3133
    %v3135 = vrot.slane %v3121, %v3134
    %v3136 = vcombine.low %v3071, %v3087
    %v3137 = vcombine.high %v3071, %v3087
    %v3139 = vunpack.c.l.s4 1934713408
    %v3140 = vunpack.c.0.s8 %v3139
    %v3141 = vlaneseq
    %v3142 = vshrl.u32 %v3141, 7
    %v3143 = vsub.s32 %v3140, %v3142
    %v3144 = vrot.slane %v3136, %v3143
    %v3146 = vunpack.c.l.s4 1934713408
    %v3147 = vunpack.c.0.s8 %v3146
    %v3148 = vlaneseq
    %v3149 = vshrl.u32 %v3148, 7
    %v3150 = vsub.s32 %v3147, %v3149
    %v3151 = vrot.slane %v3137, %v3150
    %v3152 = vcombine.low %v3096, %v3128
    %v3153 = vcombine.high %v3096, %v3128
    %v3154 = vcombine.low %v3103, %v3135
    %v3155 = vcombine.high %v3103, %v3135
    %v3156 = vcombine.low %v3112, %v3144
    %v3157 = vcombine.high %v3112, %v3144
    %v3158 = vcombine.low %v3119, %v3151
    %v3159 = vcombine.high %v3119, %v3151
    %v3160 = vcombine.low %v2792, %v2799
    %v3162 = vunpack.c.l.s4 1983009808
    %v3163 = vunpack.c.0.s8 %v3162
    %v3164 = vlaneseq
    %v3165 = vshrl.u32 %v3164, 7
    %v3166 = vsub.s32 %v3163, %v3165
    %v3167 = vrot.slane %v3160, %v3166
    %v3168 = vcombine.low %v2816, %v2817
    %v3170 = vunpack.c.l.s4 1983009808
    %v3171 = vunpack.c.0.s8 %v3170
    %v3172 = vlaneseq
    %v3173 = vshrl.u32 %v3172, 7
    %v3174 = vsub.s32 %v3171, %v3173
    %v3175 = vrot.slane %v3168, %v3174
    %v3176 = vcombine.low %v2808, %v2815
    %v3178 = vunpack.c.l.s4 1983009808
    %v3179 = vunpack.c.0.s8 %v3178
    %v3180 = vlaneseq
    %v3181 = vshrl.u32 %v3180, 7
    %v3182 = vsub.s32 %v3179, %v3181
    %v3183 = vrot.slane %v3176, %v3182
    %v3184 = vcombine.low %v2818, %v2819
    %v3186 = vunpack.c.l.s4 1983009808
    %v3187 = vunpack.c.0.s8 %v3186
    %v3188 = vlaneseq
    %v3189 = vshrl.u32 %v3188, 7
    %v3190 = vsub.s32 %v3187, %v3189
    %v3191 = vrot.slane %v3184, %v3190
    %v3192 = vcombine.low %v3167, %v3175
    %v3193 = vcombine.high %v3167, %v3175
    %v3195 = vunpack.c.l.s4 1934713408
    %v3196 = vunpack.c.0.s8 %v3195
    %v3197 = vlaneseq
    %v3198 = vshrl.u32 %v3197, 7
    %v3199 = vsub.s32 %v3196, %v3198
    %v3200 = vrot.slane %v3192, %v3199
    %v3202 = vunpack.c.l.s4 1934713408
    %v3203 = vunpack.c.0.s8 %v3202
    %v3204 = vlaneseq
    %v3205 = vshrl.u32 %v3204, 7
    %v3206 = vsub.s32 %v3203, %v3205
    %v3207 = vrot.slane %v3193, %v3206
    %v3208 = vcombine.low %v3183, %v3191
    %v3209 = vcombine.high %v3183, %v3191
    %v3211 = vunpack.c.l.s4 1934713408
    %v3212 = vunpack.c.0.s8 %v3211
    %v3213 = vlaneseq
    %v3214 = vshrl.u32 %v3213, 7
    %v3215 = vsub.s32 %v3212, %v3214
    %v3216 = vrot.slane %v3208, %v3215
    %v3218 = vunpack.c.l.s4 1934713408
    %v3219 = vunpack.c.0.s8 %v3218
    %v3220 = vlaneseq
    %v3221 = vshrl.u32 %v3220, 7
    %v3222 = vsub.s32 %v3219, %v3221
    %v3223 = vrot.slane %v3209, %v3222
    %v3224 = vcombine.low %v3200, %v3216
    %v3225 = vcombine.high %v3200, %v3216
    %v3226 = vcombine.low %v3207, %v3223
    %v3227 = vcombine.high %v3207, %v3223
    %v3228 = vcombine.low %v2948, %v2950
    %v3229 = vcombine.high %v2948, %v2950
    %v3231 = vunpack.c.l.s4 1983009808
    %v3232 = vunpack.c.0.s8 %v3231
    %v3233 = vlaneseq
    %v3234 = vshrl.u32 %v3233, 7
    %v3235 = vsub.s32 %v3232, %v3234
    %v3236 = vrot.slane %v3228, %v3235
    %v3238 = vunpack.c.l.s4 1983009808
    %v3239 = vunpack.c.0.s8 %v3238
    %v3240 = vlaneseq
    %v3241 = vshrl.u32 %v3240, 7
    %v3242 = vsub.s32 %v3239, %v3241
    %v3243 = vrot.slane %v3229, %v3242
    %v3244 = vcombine.low %v2949, %v2951
    %v3245 = vcombine.high %v2949, %v2951
    %v3247 = vunpack.c.l.s4 1983009808
    %v3248 = vunpack.c.0.s8 %v3247
    %v3249 = vlaneseq
    %v3250 = vshrl.u32 %v3249, 7
    %v3251 = vsub.s32 %v3248, %v3250
    %v3252 = vrot.slane %v3244, %v3251
    %v3254 = vunpack.c.l.s4 1983009808
    %v3255 = vunpack.c.0.s8 %v3254
    %v3256 = vlaneseq
    %v3257 = vshrl.u32 %v3256, 7
    %v3258 = vsub.s32 %v3255, %v3257
    %v3259 = vrot.slane %v3245, %v3258
    %v3260 = vcombine.low %v2952, %v2954
    %v3261 = vcombine.high %v2952, %v2954
    %v3263 = vunpack.c.l.s4 1983009808
    %v3264 = vunpack.c.0.s8 %v3263
    %v3265 = vlaneseq
    %v3266 = vshrl.u32 %v3265, 7
    %v3267 = vsub.s32 %v3264, %v3266
    %v3268 = vrot.slane %v3260, %v3267
    %v3270 = vunpack.c.l.s4 1983009808
    %v3271 = vunpack.c.0.s8 %v3270
    %v3272 = vlaneseq
    %v3273 = vshrl.u32 %v3272, 7
    %v3274 = vsub.s32 %v3271, %v3273
    %v3275 = vrot.slane %v3261, %v3274
    %v3276 = vcombine.low %v2953, %v2955
    %v3277 = vcombine.high %v2953, %v2955
    %v3279 = vunpack.c.l.s4 1983009808
    %v3280 = vunpack.c.0.s8 %v3279
    %v3281 = vlaneseq
    %v3282 = vshrl.u32 %v3281, 7
    %v3283 = vsub.s32 %v3280, %v3282
    %v3284 = vrot.slane %v3276, %v3283
    %v3286 = vunpack.c.l.s4 1983009808
    %v3287 = vunpack.c.0.s8 %v3286
    %v3288 = vlaneseq
    %v3289 = vshrl.u32 %v3288, 7
    %v3290 = vsub.s32 %v3287, %v3289
    %v3291 = vrot.slane %v3277, %v3290
    %v3292 = vcombine.low %v3236, %v3252
    %v3293 = vcombine.high %v3236, %v3252
    %v3295 = vunpack.c.l.s4 1934713408
    %v3296 = vunpack.c.0.s8 %v3295
    %v3297 = vlaneseq
    %v3298 = vshrl.u32 %v3297, 7
    %v3299 = vsub.s32 %v3296, %v3298
    %v3300 = vrot.slane %v3292, %v3299
    %v3302 = vunpack.c.l.s4 1934713408
    %v3303 = vunpack.c.0.s8 %v3302
    %v3304 = vlaneseq
    %v3305 = vshrl.u32 %v3304, 7
    %v3306 = vsub.s32 %v3303, %v3305
    %v3307 = vrot.slane %v3293, %v3306
    %v3308 = vcombine.low %v3243, %v3259
    %v3309 = vcombine.high %v3243, %v3259
    %v3311 = vunpack.c.l.s4 1934713408
    %v3312 = vunpack.c.0.s8 %v3311
    %v3313 = vlaneseq
    %v3314 = vshrl.u32 %v3313, 7
    %v3315 = vsub.s32 %v3312, %v3314
    %v3316 = vrot.slane %v3308, %v3315
    %v3318 = vunpack.c.l.s4 1934713408
    %v3319 = vunpack.c.0.s8 %v3318
    %v3320 = vlaneseq
    %v3321 = vshrl.u32 %v3320, 7
    %v3322 = vsub.s32 %v3319, %v3321
    %v3323 = vrot.slane %v3309, %v3322
    %v3324 = vcombine.low %v3268, %v3284
    %v3325 = vcombine.high %v3268, %v3284
    %v3327 = vunpack.c.l.s4 1934713408
    %v3328 = vunpack.c.0.s8 %v3327
    %v3329 = vlaneseq
    %v3330 = vshrl.u32 %v3329, 7
    %v3331 = vsub.s32 %v3328, %v3330
    %v3332 = vrot.slane %v3324, %v3331
    %v3334 = vunpack.c.l.s4 1934713408
    %v3335 = vunpack.c.0.s8 %v3334
    %v3336 = vlaneseq
    %v3337 = vshrl.u32 %v3336, 7
    %v3338 = vsub.s32 %v3335, %v3337
    %v3339 = vrot.slane %v3325, %v3338
    %v3340 = vcombine.low %v3275, %v3291
    %v3341 = vcombine.high %v3275, %v3291
    %v3343 = vunpack.c.l.s4 1934713408
    %v3344 = vunpack.c.0.s8 %v3343
    %v3345 = vlaneseq
    %v3346 = vshrl.u32 %v3345, 7
    %v3347 = vsub.s32 %v3344, %v3346
    %v3348 = vrot.slane %v3340, %v3347
    %v3350 = vunpack.c.l.s4 1934713408
    %v3351 = vunpack.c.0.s8 %v3350
    %v3352 = vlaneseq
    %v3353 = vshrl.u32 %v3352, 7
    %v3354 = vsub.s32 %v3351, %v3353
    %v3355 = vrot.slane %v3341, %v3354
    %v3356 = vcombine.low %v3300, %v3332
    %v3357 = vcombine.high %v3300, %v3332
    %v3358 = vcombine.low %v3307, %v3339
    %v3359 = vcombine.high %v3307, %v3339
    %v3360 = vcombine.low %v3316, %v3348
    %v3361 = vcombine.high %v3316, %v3348
    %v3362 = vcombine.low %v3323, %v3355
    %v3363 = vcombine.high %v3323, %v3355
    %v3364 = vcombine.low %v2996, %v3003
    %v3366 = vunpack.c.l.s4 1983009808
    %v3367 = vunpack.c.0.s8 %v3366
    %v3368 = vlaneseq
    %v3369 = vshrl.u32 %v3368, 7
    %v3370 = vsub.s32 %v3367, %v3369
    %v3371 = vrot.slane %v3364, %v3370
    %v3372 = vcombine.low %v3020, %v3021
    %v3374 = vunpack.c.l.s4 1983009808
    %v3375 = vunpack.c.0.s8 %v3374
    %v3376 = vlaneseq
    %v3377 = vshrl.u32 %v3376, 7
    %v3378 = vsub.s32 %v3375, %v3377
    %v3379 = vrot.slane %v3372, %v3378
    %v3380 = vcombine.low %v3012, %v3019
    %v3382 = vunpack.c.l.s4 1983009808
    %v3383 = vunpack.c.0.s8 %v3382
    %v3384 = vlaneseq
    %v3385 = vshrl.u32 %v3384, 7
    %v3386 = vsub.s32 %v3383, %v3385
    %v3387 = vrot.slane %v3380, %v3386
    %v3388 = vcombine.low %v3022, %v3023
    %v3390 = vunpack.c.l.s4 1983009808
    %v3391 = vunpack.c.0.s8 %v3390
    %v3392 = vlaneseq
    %v3393 = vshrl.u32 %v3392, 7
    %v3394 = vsub.s32 %v3391, %v3393
    %v3395 = vrot.slane %v3388, %v3394
    %v3396 = vcombine.low %v3371, %v3379
    %v3397 = vcombine.high %v3371, %v3379
    %v3399 = vunpack.c.l.s4 1934713408
    %v3400 = vunpack.c.0.s8 %v3399
    %v3401 = vlaneseq
    %v3402 = vshrl.u32 %v3401, 7
    %v3403 = vsub.s32 %v3400, %v3402
    %v3404 = vrot.slane %v3396, %v3403
    %v3406 = vunpack.c.l.s4 1934713408
    %v3407 = vunpack.c.0.s8 %v3406
    %v3408 = vlaneseq
    %v3409 = vshrl.u32 %v3408, 7
    %v3410 = vsub.s32 %v3407, %v3409
    %v3411 = vrot.slane %v3397, %v3410
    %v3412 = vcombine.low %v3387, %v3395
    %v3413 = vcombine.high %v3387, %v3395
    %v3415 = vunpack.c.l.s4 1934713408
    %v3416 = vunpack.c.0.s8 %v3415
    %v3417 = vlaneseq
    %v3418 = vshrl.u32 %v3417, 7
    %v3419 = vsub.s32 %v3416, %v3418
    %v3420 = vrot.slane %v3412, %v3419
    %v3422 = vunpack.c.l.s4 1934713408
    %v3423 = vunpack.c.0.s8 %v3422
    %v3424 = vlaneseq
    %v3425 = vshrl.u32 %v3424, 7
    %v3426 = vsub.s32 %v3423, %v3425
    %v3427 = vrot.slane %v3413, %v3426
    %v3428 = vcombine.low %v3404, %v3420
    %v3429 = vcombine.high %v3404, %v3420
    %v3430 = vcombine.low %v3411, %v3427
    %v3431 = vcombine.high %v3411, %v3427
    %v3432 = vmul.f32 %v3152, 0.35355338
    %v3433 = vmul.f32 %v3153, 0.35355338
    %v3434 = vmul.f32 %v3154, 0.35355338
    %v3435 = vmul.f32 %v3155, 0.35355338
    %v3436 = vmul.f32 %v3356, 0.35355338
    %v3437 = vmul.f32 %v3357, 0.35355338
    %v3438 = vmul.f32 %v3358, 0.35355338
    %v3439 = vmul.f32 %v3359, 0.35355338
    %v3440 = vpack.c.bf16 %v3432, %v3432
    %v3441 = vpack.c.bf16 %v3433, %v3433
    %v3442 = vpack.c.bf16 %v3434, %v3434
    %v3443 = vpack.c.bf16 %v3435, %v3435
    %v3444 = vpack.c.bf16 %v3436, %v3436
    %v3445 = vpack.c.bf16 %v3437, %v3437
    %v3446 = vpack.c.bf16 %v3438, %v3438
    %v3447 = vpack.c.bf16 %v3439, %v3439
    %v3448 = vpack.c.bf16 %v3156, %v3156
    %v3449 = vpack.c.bf16 %v3157, %v3157
    %v3450 = vpack.c.bf16 %v3158, %v3158
    %v3451 = vpack.c.bf16 %v3159, %v3159
    %v3452 = vpack.c.bf16 %v3360, %v3360
    %v3453 = vpack.c.bf16 %v3361, %v3361
    %v3454 = vpack.c.bf16 %v3362, %v3362
    %v3455 = vpack.c.bf16 %v3363, %v3363
    %v3457 = vsel %vm1030, %v3440, 0
    %v3460 = vsel %vm1030, %v3448, 0
    %3462 = vmatprep.subr.bf16.mxu0 0
    %3463 = vmatpush1.bf16.xpose.msra.mxu0 %v3460
    %3464 = vmatprep.subr.bf16.mxu0 0
    %3465 = vmatpush1.bf16.xpose.msra.mxu0 0
    %3466 = vmatprep.subr.bf16.mxu0 0
    %3467 = vmatpush1.bf16.xpose.msra.mxu0 0
    %3468 = vmatprep.subr.bf16.mxu0 0
    %3469 = vmatpush1.bf16.xpose.msra.mxu0 0
    %3470 = vmatprep.subr.bf16.mxu0 0
    %3471 = vmatpush1.bf16.xpose.msra.mxu0 0
    %3472 = vmatprep.subr.bf16.mxu0 0
    %3473 = vmatpush1.bf16.xpose.msra.mxu0 0
    %3474 = vmatprep.subr.bf16.mxu0 0
    %3475 = vmatpush1.bf16.xpose.msra.mxu0 0
    %3476 = vmatprep.subr.bf16.mxu0 0
    %3477 = vmatpush1.bf16.xpose.msra.mxu0 0
    %3478 = vmatprep.subr.bf16.mxu0 0
    %3479 = vmatpush1.bf16.xpose.msra.mxu0 0
    %3480 = vmatprep.subr.bf16.mxu0 0
    %3481 = vmatpush1.bf16.xpose.msra.mxu0 0
    %3482 = vmatprep.subr.bf16.mxu0 0
    %3483 = vmatpush1.bf16.xpose.msra.mxu0 0
    %3484 = vmatprep.subr.bf16.mxu0 0
    %3485 = vmatpush1.bf16.xpose.msra.mxu0 0
    %3486 = vmatprep.subr.bf16.mxu0 0
    %3487 = vmatpush1.bf16.xpose.msra.mxu0 0
    %3488 = vmatprep.subr.bf16.mxu0 0
    %3489 = vmatpush1.bf16.xpose.msra.mxu0 0
    %3490 = vmatprep.subr.bf16.mxu0 0
    %3491 = vmatpush1.bf16.xpose.msra.mxu0 0
    %3492 = vmatprep.subr.bf16.mxu0 0
    %3493 = vmatpush1.bf16.xpose.msra.mxu0 0
    %3494 = vmatprep.mubr.bf16.mxu0 0
    %3495 = vmatmul.mubr.bf16.gmra.mrb[0].mxu0 %v3457
    %v3496 = vpop.f32.mrb[0].mxu0
    %v3497 = vadd.f32 0.0, %v3496
    %v3498 = vpop.f32.mrb[0].mxu0
    %v3499 = vpop.f32.mrb[0].mxu0
    %v3500 = vpop.f32.mrb[0].mxu0
    %3501 = vdwg.mxu0
    %v3503 = vsel %vm1030, %v3441, 0
    %v3506 = vsel %vm1030, %v3449, 0
    %3508 = vmatprep.subr.bf16.mxu0 0
    %3509 = vmatpush1.bf16.xpose.msra.mxu0 %v3506
    %3510 = vmatprep.subr.bf16.mxu0 0
    %3511 = vmatpush1.bf16.xpose.msra.mxu0 0
    %3512 = vmatprep.subr.bf16.mxu0 0
    %3513 = vmatpush1.bf16.xpose.msra.mxu0 0
    %3514 = vmatprep.subr.bf16.mxu0 0
    %3515 = vmatpush1.bf16.xpose.msra.mxu0 0
    %3516 = vmatprep.subr.bf16.mxu0 0
    %3517 = vmatpush1.bf16.xpose.msra.mxu0 0
    %3518 = vmatprep.subr.bf16.mxu0 0
    %3519 = vmatpush1.bf16.xpose.msra.mxu0 0
    %3520 = vmatprep.subr.bf16.mxu0 0
    %3521 = vmatpush1.bf16.xpose.msra.mxu0 0
    %3522 = vmatprep.subr.bf16.mxu0 0
    %3523 = vmatpush1.bf16.xpose.msra.mxu0 0
    %3524 = vmatprep.subr.bf16.mxu0 0
    %3525 = vmatpush1.bf16.xpose.msra.mxu0 0
    %3526 = vmatprep.subr.bf16.mxu0 0
    %3527 = vmatpush1.bf16.xpose.msra.mxu0 0
    %3528 = vmatprep.subr.bf16.mxu0 0
    %3529 = vmatpush1.bf16.xpose.msra.mxu0 0
    %3530 = vmatprep.subr.bf16.mxu0 0
    %3531 = vmatpush1.bf16.xpose.msra.mxu0 0
    %3532 = vmatprep.subr.bf16.mxu0 0
    %3533 = vmatpush1.bf16.xpose.msra.mxu0 0
    %3534 = vmatprep.subr.bf16.mxu0 0
    %3535 = vmatpush1.bf16.xpose.msra.mxu0 0
    %3536 = vmatprep.subr.bf16.mxu0 0
    %3537 = vmatpush1.bf16.xpose.msra.mxu0 0
    %3538 = vmatprep.subr.bf16.mxu0 0
    %3539 = vmatpush1.bf16.xpose.msra.mxu0 0
    %3540 = vmatprep.mubr.bf16.mxu0 0
    %3541 = vmatmul.mubr.bf16.gmra.mrb[0].mxu0 %v3503
    %v3542 = vpop.f32.mrb[0].mxu0
    %v3543 = vadd.f32 0.0, %v3542
    %v3544 = vpop.f32.mrb[0].mxu0
    %v3545 = vpop.f32.mrb[0].mxu0
    %v3546 = vpop.f32.mrb[0].mxu0
    %3547 = vdwg.mxu0
    %v3549 = vsel %vm1030, %v3442, 0
    %v3552 = vsel %vm1030, %v3450, 0
    %3554 = vmatprep.subr.bf16.mxu0 0
    %3555 = vmatpush1.bf16.xpose.msra.mxu0 %v3552
    %3556 = vmatprep.subr.bf16.mxu0 0
    %3557 = vmatpush1.bf16.xpose.msra.mxu0 0
    %3558 = vmatprep.subr.bf16.mxu0 0
    %3559 = vmatpush1.bf16.xpose.msra.mxu0 0
    %3560 = vmatprep.subr.bf16.mxu0 0
    %3561 = vmatpush1.bf16.xpose.msra.mxu0 0
    %3562 = vmatprep.subr.bf16.mxu0 0
    %3563 = vmatpush1.bf16.xpose.msra.mxu0 0
    %3564 = vmatprep.subr.bf16.mxu0 0
    %3565 = vmatpush1.bf16.xpose.msra.mxu0 0
    %3566 = vmatprep.subr.bf16.mxu0 0
    %3567 = vmatpush1.bf16.xpose.msra.mxu0 0
    %3568 = vmatprep.subr.bf16.mxu0 0
    %3569 = vmatpush1.bf16.xpose.msra.mxu0 0
    %3570 = vmatprep.subr.bf16.mxu0 0
    %3571 = vmatpush1.bf16.xpose.msra.mxu0 0
    %3572 = vmatprep.subr.bf16.mxu0 0
    %3573 = vmatpush1.bf16.xpose.msra.mxu0 0
    %3574 = vmatprep.subr.bf16.mxu0 0
    %3575 = vmatpush1.bf16.xpose.msra.mxu0 0
    %3576 = vmatprep.subr.bf16.mxu0 0
    %3577 = vmatpush1.bf16.xpose.msra.mxu0 0
    %3578 = vmatprep.subr.bf16.mxu0 0
    %3579 = vmatpush1.bf16.xpose.msra.mxu0 0
    %3580 = vmatprep.subr.bf16.mxu0 0
    %3581 = vmatpush1.bf16.xpose.msra.mxu0 0
    %3582 = vmatprep.subr.bf16.mxu0 0
    %3583 = vmatpush1.bf16.xpose.msra.mxu0 0
    %3584 = vmatprep.subr.bf16.mxu0 0
    %3585 = vmatpush1.bf16.xpose.msra.mxu0 0
    %3586 = vmatprep.mubr.bf16.mxu0 0
    %3587 = vmatmul.mubr.bf16.gmra.mrb[0].mxu0 %v3549
    %v3588 = vpop.f32.mrb[0].mxu0
    %v3589 = vadd.f32 0.0, %v3588
    %v3590 = vpop.f32.mrb[0].mxu0
    %v3591 = vpop.f32.mrb[0].mxu0
    %v3592 = vpop.f32.mrb[0].mxu0
    %3593 = vdwg.mxu0
    %v3595 = vsel %vm1030, %v3443, 0
    %v3598 = vsel %vm1030, %v3451, 0
    %3600 = vmatprep.subr.bf16.mxu0 0
    %3601 = vmatpush1.bf16.xpose.msra.mxu0 %v3598
    %3602 = vmatprep.subr.bf16.mxu0 0
    %3603 = vmatpush1.bf16.xpose.msra.mxu0 0
    %3604 = vmatprep.subr.bf16.mxu0 0
    %3605 = vmatpush1.bf16.xpose.msra.mxu0 0
    %3606 = vmatprep.subr.bf16.mxu0 0
    %3607 = vmatpush1.bf16.xpose.msra.mxu0 0
    %3608 = vmatprep.subr.bf16.mxu0 0
    %3609 = vmatpush1.bf16.xpose.msra.mxu0 0
    %3610 = vmatprep.subr.bf16.mxu0 0
    %3611 = vmatpush1.bf16.xpose.msra.mxu0 0
    %3612 = vmatprep.subr.bf16.mxu0 0
    %3613 = vmatpush1.bf16.xpose.msra.mxu0 0
    %3614 = vmatprep.subr.bf16.mxu0 0
    %3615 = vmatpush1.bf16.xpose.msra.mxu0 0
    %3616 = vmatprep.subr.bf16.mxu0 0
    %3617 = vmatpush1.bf16.xpose.msra.mxu0 0
    %3618 = vmatprep.subr.bf16.mxu0 0
    %3619 = vmatpush1.bf16.xpose.msra.mxu0 0
    %3620 = vmatprep.subr.bf16.mxu0 0
    %3621 = vmatpush1.bf16.xpose.msra.mxu0 0
    %3622 = vmatprep.subr.bf16.mxu0 0
    %3623 = vmatpush1.bf16.xpose.msra.mxu0 0
    %3624 = vmatprep.subr.bf16.mxu0 0
    %3625 = vmatpush1.bf16.xpose.msra.mxu0 0
    %3626 = vmatprep.subr.bf16.mxu0 0
    %3627 = vmatpush1.bf16.xpose.msra.mxu0 0
    %3628 = vmatprep.subr.bf16.mxu0 0
    %3629 = vmatpush1.bf16.xpose.msra.mxu0 0
    %3630 = vmatprep.subr.bf16.mxu0 0
    %3631 = vmatpush1.bf16.xpose.msra.mxu0 0
    %3632 = vmatprep.mubr.bf16.mxu0 0
    %3633 = vmatmul.mubr.bf16.gmra.mrb[0].mxu0 %v3595
    %v3634 = vpop.f32.mrb[0].mxu0
    %v3635 = vadd.f32 0.0, %v3634
    %v3636 = vpop.f32.mrb[0].mxu0
    %v3637 = vpop.f32.mrb[0].mxu0
    %v3638 = vpop.f32.mrb[0].mxu0
    %3639 = vdwg.mxu0
    %v3641 = vsel %vm1030, %v3444, 0
    %v3644 = vsel %vm1030, %v3452, 0
    %3646 = vmatprep.subr.bf16.mxu0 0
    %3647 = vmatpush1.bf16.xpose.msra.mxu0 %v3644
    %3648 = vmatprep.subr.bf16.mxu0 0
    %3649 = vmatpush1.bf16.xpose.msra.mxu0 0
    %3650 = vmatprep.subr.bf16.mxu0 0
    %3651 = vmatpush1.bf16.xpose.msra.mxu0 0
    %3652 = vmatprep.subr.bf16.mxu0 0
    %3653 = vmatpush1.bf16.xpose.msra.mxu0 0
    %3654 = vmatprep.subr.bf16.mxu0 0
    %3655 = vmatpush1.bf16.xpose.msra.mxu0 0
    %3656 = vmatprep.subr.bf16.mxu0 0
    %3657 = vmatpush1.bf16.xpose.msra.mxu0 0
    %3658 = vmatprep.subr.bf16.mxu0 0
    %3659 = vmatpush1.bf16.xpose.msra.mxu0 0
    %3660 = vmatprep.subr.bf16.mxu0 0
    %3661 = vmatpush1.bf16.xpose.msra.mxu0 0
    %3662 = vmatprep.subr.bf16.mxu0 0
    %3663 = vmatpush1.bf16.xpose.msra.mxu0 0
    %3664 = vmatprep.subr.bf16.mxu0 0
    %3665 = vmatpush1.bf16.xpose.msra.mxu0 0
    %3666 = vmatprep.subr.bf16.mxu0 0
    %3667 = vmatpush1.bf16.xpose.msra.mxu0 0
    %3668 = vmatprep.subr.bf16.mxu0 0
    %3669 = vmatpush1.bf16.xpose.msra.mxu0 0
    %3670 = vmatprep.subr.bf16.mxu0 0
    %3671 = vmatpush1.bf16.xpose.msra.mxu0 0
    %3672 = vmatprep.subr.bf16.mxu0 0
    %3673 = vmatpush1.bf16.xpose.msra.mxu0 0
    %3674 = vmatprep.subr.bf16.mxu0 0
    %3675 = vmatpush1.bf16.xpose.msra.mxu0 0
    %3676 = vmatprep.subr.bf16.mxu0 0
    %3677 = vmatpush1.bf16.xpose.msra.mxu0 0
    %3678 = vmatprep.mubr.bf16.mxu0 0
    %3679 = vmatmul.mubr.bf16.gmra.mrb[0].mxu0 %v3641
    %v3680 = vpop.f32.mrb[0].mxu0
    %v3681 = vadd.f32 0.0, %v3680
    %v3682 = vpop.f32.mrb[0].mxu0
    %v3683 = vpop.f32.mrb[0].mxu0
    %v3684 = vpop.f32.mrb[0].mxu0
    %3685 = vdwg.mxu0
    %v3687 = vsel %vm1030, %v3445, 0
    %v3690 = vsel %vm1030, %v3453, 0
    %3692 = vmatprep.subr.bf16.mxu0 0
    %3693 = vmatpush1.bf16.xpose.msra.mxu0 %v3690
    %3694 = vmatprep.subr.bf16.mxu0 0
    %3695 = vmatpush1.bf16.xpose.msra.mxu0 0
    %3696 = vmatprep.subr.bf16.mxu0 0
    %3697 = vmatpush1.bf16.xpose.msra.mxu0 0
    %3698 = vmatprep.subr.bf16.mxu0 0
    %3699 = vmatpush1.bf16.xpose.msra.mxu0 0
    %3700 = vmatprep.subr.bf16.mxu0 0
    %3701 = vmatpush1.bf16.xpose.msra.mxu0 0
    %3702 = vmatprep.subr.bf16.mxu0 0
    %3703 = vmatpush1.bf16.xpose.msra.mxu0 0
    %3704 = vmatprep.subr.bf16.mxu0 0
    %3705 = vmatpush1.bf16.xpose.msra.mxu0 0
    %3706 = vmatprep.subr.bf16.mxu0 0
    %3707 = vmatpush1.bf16.xpose.msra.mxu0 0
    %3708 = vmatprep.subr.bf16.mxu0 0
    %3709 = vmatpush1.bf16.xpose.msra.mxu0 0
    %3710 = vmatprep.subr.bf16.mxu0 0
    %3711 = vmatpush1.bf16.xpose.msra.mxu0 0
    %3712 = vmatprep.subr.bf16.mxu0 0
    %3713 = vmatpush1.bf16.xpose.msra.mxu0 0
    %3714 = vmatprep.subr.bf16.mxu0 0
    %3715 = vmatpush1.bf16.xpose.msra.mxu0 0
    %3716 = vmatprep.subr.bf16.mxu0 0
    %3717 = vmatpush1.bf16.xpose.msra.mxu0 0
    %3718 = vmatprep.subr.bf16.mxu0 0
    %3719 = vmatpush1.bf16.xpose.msra.mxu0 0
    %3720 = vmatprep.subr.bf16.mxu0 0
    %3721 = vmatpush1.bf16.xpose.msra.mxu0 0
    %3722 = vmatprep.subr.bf16.mxu0 0
    %3723 = vmatpush1.bf16.xpose.msra.mxu0 0
    %3724 = vmatprep.mubr.bf16.mxu0 0
    %3725 = vmatmul.mubr.bf16.gmra.mrb[0].mxu0 %v3687
    %v3726 = vpop.f32.mrb[0].mxu0
    %v3727 = vadd.f32 0.0, %v3726
    %v3728 = vpop.f32.mrb[0].mxu0
    %v3729 = vpop.f32.mrb[0].mxu0
    %v3730 = vpop.f32.mrb[0].mxu0
    %3731 = vdwg.mxu0
    %v3733 = vsel %vm1030, %v3446, 0
    %v3736 = vsel %vm1030, %v3454, 0
    %3738 = vmatprep.subr.bf16.mxu0 0
    %3739 = vmatpush1.bf16.xpose.msra.mxu0 %v3736
    %3740 = vmatprep.subr.bf16.mxu0 0
    %3741 = vmatpush1.bf16.xpose.msra.mxu0 0
    %3742 = vmatprep.subr.bf16.mxu0 0
    %3743 = vmatpush1.bf16.xpose.msra.mxu0 0
    %3744 = vmatprep.subr.bf16.mxu0 0
    %3745 = vmatpush1.bf16.xpose.msra.mxu0 0
    %3746 = vmatprep.subr.bf16.mxu0 0
    %3747 = vmatpush1.bf16.xpose.msra.mxu0 0
    %3748 = vmatprep.subr.bf16.mxu0 0
    %3749 = vmatpush1.bf16.xpose.msra.mxu0 0
    %3750 = vmatprep.subr.bf16.mxu0 0
    %3751 = vmatpush1.bf16.xpose.msra.mxu0 0
    %3752 = vmatprep.subr.bf16.mxu0 0
    %3753 = vmatpush1.bf16.xpose.msra.mxu0 0
    %3754 = vmatprep.subr.bf16.mxu0 0
    %3755 = vmatpush1.bf16.xpose.msra.mxu0 0
    %3756 = vmatprep.subr.bf16.mxu0 0
    %3757 = vmatpush1.bf16.xpose.msra.mxu0 0
    %3758 = vmatprep.subr.bf16.mxu0 0
    %3759 = vmatpush1.bf16.xpose.msra.mxu0 0
    %3760 = vmatprep.subr.bf16.mxu0 0
    %3761 = vmatpush1.bf16.xpose.msra.mxu0 0
    %3762 = vmatprep.subr.bf16.mxu0 0
    %3763 = vmatpush1.bf16.xpose.msra.mxu0 0
    %3764 = vmatprep.subr.bf16.mxu0 0
    %3765 = vmatpush1.bf16.xpose.msra.mxu0 0
    %3766 = vmatprep.subr.bf16.mxu0 0
    %3767 = vmatpush1.bf16.xpose.msra.mxu0 0
    %3768 = vmatprep.subr.bf16.mxu0 0
    %3769 = vmatpush1.bf16.xpose.msra.mxu0 0
    %3770 = vmatprep.mubr.bf16.mxu0 0
    %3771 = vmatmul.mubr.bf16.gmra.mrb[0].mxu0 %v3733
    %v3772 = vpop.f32.mrb[0].mxu0
    %v3773 = vadd.f32 0.0, %v3772
    %v3774 = vpop.f32.mrb[0].mxu0
    %v3775 = vpop.f32.mrb[0].mxu0
    %v3776 = vpop.f32.mrb[0].mxu0
    %3777 = vdwg.mxu0
    %v3779 = vsel %vm1030, %v3447, 0
    %v3782 = vsel %vm1030, %v3455, 0
    %3784 = vmatprep.subr.bf16.mxu0 0
    %3785 = vmatpush1.bf16.xpose.msra.mxu0 %v3782
    %3786 = vmatprep.subr.bf16.mxu0 0
    %3787 = vmatpush1.bf16.xpose.msra.mxu0 0
    %3788 = vmatprep.subr.bf16.mxu0 0
    %3789 = vmatpush1.bf16.xpose.msra.mxu0 0
    %3790 = vmatprep.subr.bf16.mxu0 0
    %3791 = vmatpush1.bf16.xpose.msra.mxu0 0
    %3792 = vmatprep.subr.bf16.mxu0 0
    %3793 = vmatpush1.bf16.xpose.msra.mxu0 0
    %3794 = vmatprep.subr.bf16.mxu0 0
    %3795 = vmatpush1.bf16.xpose.msra.mxu0 0
    %3796 = vmatprep.subr.bf16.mxu0 0
    %3797 = vmatpush1.bf16.xpose.msra.mxu0 0
    %3798 = vmatprep.subr.bf16.mxu0 0
    %3799 = vmatpush1.bf16.xpose.msra.mxu0 0
    %3800 = vmatprep.subr.bf16.mxu0 0
    %3801 = vmatpush1.bf16.xpose.msra.mxu0 0
    %3802 = vmatprep.subr.bf16.mxu0 0
    %3803 = vmatpush1.bf16.xpose.msra.mxu0 0
    %3804 = vmatprep.subr.bf16.mxu0 0
    %3805 = vmatpush1.bf16.xpose.msra.mxu0 0
    %3806 = vmatprep.subr.bf16.mxu0 0
    %3807 = vmatpush1.bf16.xpose.msra.mxu0 0
    %3808 = vmatprep.subr.bf16.mxu0 0
    %3809 = vmatpush1.bf16.xpose.msra.mxu0 0
    %3810 = vmatprep.subr.bf16.mxu0 0
    %3811 = vmatpush1.bf16.xpose.msra.mxu0 0
    %3812 = vmatprep.subr.bf16.mxu0 0
    %3813 = vmatpush1.bf16.xpose.msra.mxu0 0
    %3814 = vmatprep.subr.bf16.mxu0 0
    %3815 = vmatpush1.bf16.xpose.msra.mxu0 0
    %3816 = vmatprep.mubr.bf16.mxu0 0
    %3817 = vmatmul.mubr.bf16.gmra.mrb[0].mxu0 %v3779
    %v3818 = vpop.f32.mrb[0].mxu0
    %v3819 = vadd.f32 0.0, %v3818
    %v3820 = vpop.f32.mrb[0].mxu0
    %v3821 = vpop.f32.mrb[0].mxu0
    %v3822 = vpop.f32.mrb[0].mxu0
    %3823 = vdwg.mxu0
    %v3824 = vsel %vm1030, %v3497, -inf
    %3825 = vmax.xlane.f32.xlu0 %v3824
    %v3826 = vpop.xlane.xlu0 %3825
    %v3827 = vsel %vm1030, %v3543, -inf
    %3828 = vmax.xlane.f32.xlu0 %v3827
    %v3829 = vpop.xlane.xlu0 %3828
    %v3830 = vsel %vm1030, %v3589, -inf
    %3831 = vmax.xlane.f32.xlu0 %v3830
    %v3832 = vpop.xlane.xlu0 %3831
    %v3833 = vsel %vm1030, %v3635, -inf
    %3834 = vmax.xlane.f32.xlu0 %v3833
    %v3835 = vpop.xlane.xlu0 %3834
    %v3836 = vsel %vm1030, %v3681, -inf
    %3837 = vmax.xlane.f32.xlu0 %v3836
    %v3838 = vpop.xlane.xlu0 %3837
    %v3839 = vsel %vm1030, %v3727, -inf
    %3840 = vmax.xlane.f32.xlu0 %v3839
    %v3841 = vpop.xlane.xlu0 %3840
    %v3842 = vsel %vm1030, %v3773, -inf
    %3843 = vmax.xlane.f32.xlu0 %v3842
    %v3844 = vpop.xlane.xlu0 %3843
    %v3845 = vsel %vm1030, %v3819, -inf
    %3846 = vmax.xlane.f32.xlu0 %v3845
    %v3847 = vpop.xlane.xlu0 %3846
    %v3848 = vsub.f32 %v3497, %v3826
    %v3849 = vsub.f32 %v3543, %v3829
    %v3850 = vsub.f32 %v3589, %v3832
    %v3851 = vsub.f32 %v3635, %v3835
    %v3852 = vsub.f32 %v3681, %v3838
    %v3853 = vsub.f32 %v3727, %v3841
    %v3854 = vsub.f32 %v3773, %v3844
    %v3855 = vsub.f32 %v3819, %v3847
    %v3856 = vmul.f32 %v3848, 1.442695
    %v3857 = vpow.pop %v3856
    %v3858 = vmul.f32 %v3849, 1.442695
    %v3859 = vpow.pop %v3858
    %v3860 = vmul.f32 %v3850, 1.442695
    %v3861 = vpow.pop %v3860
    %v3862 = vmul.f32 %v3851, 1.442695
    %v3863 = vpow.pop %v3862
    %v3864 = vmul.f32 %v3852, 1.442695
    %v3865 = vpow.pop %v3864
    %v3866 = vmul.f32 %v3853, 1.442695
    %v3867 = vpow.pop %v3866
    %v3868 = vmul.f32 %v3854, 1.442695
    %v3869 = vpow.pop %v3868
    %v3870 = vmul.f32 %v3855, 1.442695
    %v3871 = vpow.pop %v3870
    %v3872 = vsel %vm1030, %v3857, 0.0
    %3873 = vadd.xlane.f32.xlu0 %v3872
    %v3874 = vpop.xlane.xlu0 %3873
    %v3875 = vsel %vm1030, %v3859, 0.0
    %3876 = vadd.xlane.f32.xlu0 %v3875
    %v3877 = vpop.xlane.xlu0 %3876
    %v3878 = vsel %vm1030, %v3861, 0.0
    %3879 = vadd.xlane.f32.xlu0 %v3878
    %v3880 = vpop.xlane.xlu0 %3879
    %v3881 = vsel %vm1030, %v3863, 0.0
    %3882 = vadd.xlane.f32.xlu0 %v3881
    %v3883 = vpop.xlane.xlu0 %3882
    %v3884 = vsel %vm1030, %v3865, 0.0
    %3885 = vadd.xlane.f32.xlu0 %v3884
    %v3886 = vpop.xlane.xlu0 %3885
    %v3887 = vsel %vm1030, %v3867, 0.0
    %3888 = vadd.xlane.f32.xlu0 %v3887
    %v3889 = vpop.xlane.xlu0 %3888
    %v3890 = vsel %vm1030, %v3869, 0.0
    %3891 = vadd.xlane.f32.xlu0 %v3890
    %v3892 = vpop.xlane.xlu0 %3891
    %v3893 = vsel %vm1030, %v3871, 0.0
    %3894 = vadd.xlane.f32.xlu0 %v3893
    %v3895 = vpop.xlane.xlu0 %3894
    %v3896 = vrcp.pop %v3874
    %v3897 = vrcp.pop %v3877
    %v3898 = vrcp.pop %v3880
    %v3899 = vrcp.pop %v3883
    %v3900 = vrcp.pop %v3886
    %v3901 = vrcp.pop %v3889
    %v3902 = vrcp.pop %v3892
    %v3903 = vrcp.pop %v3895
    %v3904 = vmul.f32 %v3857, %v3896
    %v3905 = vmul.f32 %v3859, %v3897
    %v3906 = vmul.f32 %v3861, %v3898
    %v3907 = vmul.f32 %v3863, %v3899
    %v3908 = vmul.f32 %v3865, %v3900
    %v3909 = vmul.f32 %v3867, %v3901
    %v3910 = vmul.f32 %v3869, %v3902
    %v3911 = vmul.f32 %v3871, %v3903
    %v3912 = vpack.c.bf16 %v3904, %v3904
    %v3913 = vpack.c.bf16 %v3905, %v3905
    %v3914 = vpack.c.bf16 %v3906, %v3906
    %v3915 = vpack.c.bf16 %v3907, %v3907
    %v3916 = vpack.c.bf16 %v3908, %v3908
    %v3917 = vpack.c.bf16 %v3909, %v3909
    %v3918 = vpack.c.bf16 %v3910, %v3910
    %v3919 = vpack.c.bf16 %v3911, %v3911
    %v3920 = vpack.c.bf16 %v3224, %v3224
    %v3921 = vpack.c.bf16 %v3225, %v3225
    %v3922 = vpack.c.bf16 %v3226, %v3226
    %v3923 = vpack.c.bf16 %v3227, %v3227
    %v3924 = vpack.c.bf16 %v3428, %v3428
    %v3925 = vpack.c.bf16 %v3429, %v3429
    %v3926 = vpack.c.bf16 %v3430, %v3430
    %v3927 = vpack.c.bf16 %v3431, %v3431
    %v3929 = vsel %vm1030, %v3912, 0
    %v3932 = vsel %vm1506, %v3920, 0
    %3934 = vmatprep.subr.bf16.mxu0 0
    %3935 = vmatpush1.bf16.msra.mxu0 %v3932
    %3936 = vmatprep.subr.bf16.mxu0 0
    %3937 = vmatpush1.bf16.msra.mxu0 0
    %3938 = vmatprep.subr.bf16.mxu0 0
    %3939 = vmatpush1.bf16.msra.mxu0 0
    %3940 = vmatprep.subr.bf16.mxu0 0
    %3941 = vmatpush1.bf16.msra.mxu0 0
    %3942 = vmatprep.subr.bf16.mxu0 0
    %3943 = vmatpush1.bf16.msra.mxu0 0
    %3944 = vmatprep.subr.bf16.mxu0 0
    %3945 = vmatpush1.bf16.msra.mxu0 0
    %3946 = vmatprep.subr.bf16.mxu0 0
    %3947 = vmatpush1.bf16.msra.mxu0 0
    %3948 = vmatprep.subr.bf16.mxu0 0
    %3949 = vmatpush1.bf16.msra.mxu0 0
    %3950 = vmatprep.subr.bf16.mxu0 0
    %3951 = vmatpush1.bf16.msra.mxu0 0
    %3952 = vmatprep.subr.bf16.mxu0 0
    %3953 = vmatpush1.bf16.msra.mxu0 0
    %3954 = vmatprep.subr.bf16.mxu0 0
    %3955 = vmatpush1.bf16.msra.mxu0 0
    %3956 = vmatprep.subr.bf16.mxu0 0
    %3957 = vmatpush1.bf16.msra.mxu0 0
    %3958 = vmatprep.subr.bf16.mxu0 0
    %3959 = vmatpush1.bf16.msra.mxu0 0
    %3960 = vmatprep.subr.bf16.mxu0 0
    %3961 = vmatpush1.bf16.msra.mxu0 0
    %3962 = vmatprep.subr.bf16.mxu0 0
    %3963 = vmatpush1.bf16.msra.mxu0 0
    %3964 = vmatprep.subr.bf16.mxu0 0
    %3965 = vmatpush1.bf16.msra.mxu0 0
    %3966 = vmatprep.mubr.bf16.mxu0 0
    %3967 = vmatmul.mubr.bf16.gmra.mrb[0].mxu0 %v3929
    %v3968 = vpop.f32.mrb[0].mxu0
    %v3969 = vadd.f32 0.0, %v3968
    %v3970 = vpop.f32.mrb[0].mxu0
    %v3971 = vpop.f32.mrb[0].mxu0
    %v3972 = vpop.f32.mrb[0].mxu0
    %3973 = vdwg.mxu0
    %v3975 = vsel %vm1030, %v3913, 0
    %v3978 = vsel %vm1506, %v3921, 0
    %3980 = vmatprep.subr.bf16.mxu0 0
    %3981 = vmatpush1.bf16.msra.mxu0 %v3978
    %3982 = vmatprep.subr.bf16.mxu0 0
    %3983 = vmatpush1.bf16.msra.mxu0 0
    %3984 = vmatprep.subr.bf16.mxu0 0
    %3985 = vmatpush1.bf16.msra.mxu0 0
    %3986 = vmatprep.subr.bf16.mxu0 0
    %3987 = vmatpush1.bf16.msra.mxu0 0
    %3988 = vmatprep.subr.bf16.mxu0 0
    %3989 = vmatpush1.bf16.msra.mxu0 0
    %3990 = vmatprep.subr.bf16.mxu0 0
    %3991 = vmatpush1.bf16.msra.mxu0 0
    %3992 = vmatprep.subr.bf16.mxu0 0
    %3993 = vmatpush1.bf16.msra.mxu0 0
    %3994 = vmatprep.subr.bf16.mxu0 0
    %3995 = vmatpush1.bf16.msra.mxu0 0
    %3996 = vmatprep.subr.bf16.mxu0 0
    %3997 = vmatpush1.bf16.msra.mxu0 0
    %3998 = vmatprep.subr.bf16.mxu0 0
    %3999 = vmatpush1.bf16.msra.mxu0 0
    %4000 = vmatprep.subr.bf16.mxu0 0
    %4001 = vmatpush1.bf16.msra.mxu0 0
    %4002 = vmatprep.subr.bf16.mxu0 0
    %4003 = vmatpush1.bf16.msra.mxu0 0
    %4004 = vmatprep.subr.bf16.mxu0 0
    %4005 = vmatpush1.bf16.msra.mxu0 0
    %4006 = vmatprep.subr.bf16.mxu0 0
    %4007 = vmatpush1.bf16.msra.mxu0 0
    %4008 = vmatprep.subr.bf16.mxu0 0
    %4009 = vmatpush1.bf16.msra.mxu0 0
    %4010 = vmatprep.subr.bf16.mxu0 0
    %4011 = vmatpush1.bf16.msra.mxu0 0
    %4012 = vmatprep.mubr.bf16.mxu0 0
    %4013 = vmatmul.mubr.bf16.gmra.mrb[0].mxu0 %v3975
    %v4014 = vpop.f32.mrb[0].mxu0
    %v4015 = vadd.f32 0.0, %v4014
    %v4016 = vpop.f32.mrb[0].mxu0
    %v4017 = vpop.f32.mrb[0].mxu0
    %v4018 = vpop.f32.mrb[0].mxu0
    %4019 = vdwg.mxu0
    %v4021 = vsel %vm1030, %v3914, 0
    %v4024 = vsel %vm1506, %v3922, 0
    %4026 = vmatprep.subr.bf16.mxu0 0
    %4027 = vmatpush1.bf16.msra.mxu0 %v4024
    %4028 = vmatprep.subr.bf16.mxu0 0
    %4029 = vmatpush1.bf16.msra.mxu0 0
    %4030 = vmatprep.subr.bf16.mxu0 0
    %4031 = vmatpush1.bf16.msra.mxu0 0
    %4032 = vmatprep.subr.bf16.mxu0 0
    %4033 = vmatpush1.bf16.msra.mxu0 0
    %4034 = vmatprep.subr.bf16.mxu0 0
    %4035 = vmatpush1.bf16.msra.mxu0 0
    %4036 = vmatprep.subr.bf16.mxu0 0
    %4037 = vmatpush1.bf16.msra.mxu0 0
    %4038 = vmatprep.subr.bf16.mxu0 0
    %4039 = vmatpush1.bf16.msra.mxu0 0
    %4040 = vmatprep.subr.bf16.mxu0 0
    %4041 = vmatpush1.bf16.msra.mxu0 0
    %4042 = vmatprep.subr.bf16.mxu0 0
    %4043 = vmatpush1.bf16.msra.mxu0 0
    %4044 = vmatprep.subr.bf16.mxu0 0
    %4045 = vmatpush1.bf16.msra.mxu0 0
    %4046 = vmatprep.subr.bf16.mxu0 0
    %4047 = vmatpush1.bf16.msra.mxu0 0
    %4048 = vmatprep.subr.bf16.mxu0 0
    %4049 = vmatpush1.bf16.msra.mxu0 0
    %4050 = vmatprep.subr.bf16.mxu0 0
    %4051 = vmatpush1.bf16.msra.mxu0 0
    %4052 = vmatprep.subr.bf16.mxu0 0
    %4053 = vmatpush1.bf16.msra.mxu0 0
    %4054 = vmatprep.subr.bf16.mxu0 0
    %4055 = vmatpush1.bf16.msra.mxu0 0
    %4056 = vmatprep.subr.bf16.mxu0 0
    %4057 = vmatpush1.bf16.msra.mxu0 0
    %4058 = vmatprep.mubr.bf16.mxu0 0
    %4059 = vmatmul.mubr.bf16.gmra.mrb[0].mxu0 %v4021
    %v4060 = vpop.f32.mrb[0].mxu0
    %v4061 = vadd.f32 0.0, %v4060
    %v4062 = vpop.f32.mrb[0].mxu0
    %v4063 = vpop.f32.mrb[0].mxu0
    %v4064 = vpop.f32.mrb[0].mxu0
    %4065 = vdwg.mxu0
    %v4067 = vsel %vm1030, %v3915, 0
    %v4070 = vsel %vm1506, %v3923, 0
    %4072 = vmatprep.subr.bf16.mxu0 0
    %4073 = vmatpush1.bf16.msra.mxu0 %v4070
    %4074 = vmatprep.subr.bf16.mxu0 0
    %4075 = vmatpush1.bf16.msra.mxu0 0
    %4076 = vmatprep.subr.bf16.mxu0 0
    %4077 = vmatpush1.bf16.msra.mxu0 0
    %4078 = vmatprep.subr.bf16.mxu0 0
    %4079 = vmatpush1.bf16.msra.mxu0 0
    %4080 = vmatprep.subr.bf16.mxu0 0
    %4081 = vmatpush1.bf16.msra.mxu0 0
    %4082 = vmatprep.subr.bf16.mxu0 0
    %4083 = vmatpush1.bf16.msra.mxu0 0
    %4084 = vmatprep.subr.bf16.mxu0 0
    %4085 = vmatpush1.bf16.msra.mxu0 0
    %4086 = vmatprep.subr.bf16.mxu0 0
    %4087 = vmatpush1.bf16.msra.mxu0 0
    %4088 = vmatprep.subr.bf16.mxu0 0
    %4089 = vmatpush1.bf16.msra.mxu0 0
    %4090 = vmatprep.subr.bf16.mxu0 0
    %4091 = vmatpush1.bf16.msra.mxu0 0
    %4092 = vmatprep.subr.bf16.mxu0 0
    %4093 = vmatpush1.bf16.msra.mxu0 0
    %4094 = vmatprep.subr.bf16.mxu0 0
    %4095 = vmatpush1.bf16.msra.mxu0 0
    %4096 = vmatprep.subr.bf16.mxu0 0
    %4097 = vmatpush1.bf16.msra.mxu0 0
    %4098 = vmatprep.subr.bf16.mxu0 0
    %4099 = vmatpush1.bf16.msra.mxu0 0
    %4100 = vmatprep.subr.bf16.mxu0 0
    %4101 = vmatpush1.bf16.msra.mxu0 0
    %4102 = vmatprep.subr.bf16.mxu0 0
    %4103 = vmatpush1.bf16.msra.mxu0 0
    %4104 = vmatprep.mubr.bf16.mxu0 0
    %4105 = vmatmul.mubr.bf16.gmra.mrb[0].mxu0 %v4067
    %v4106 = vpop.f32.mrb[0].mxu0
    %v4107 = vadd.f32 0.0, %v4106
    %v4108 = vpop.f32.mrb[0].mxu0
    %v4109 = vpop.f32.mrb[0].mxu0
    %v4110 = vpop.f32.mrb[0].mxu0
    %4111 = vdwg.mxu0
    %v4113 = vsel %vm1030, %v3916, 0
    %v4116 = vsel %vm1506, %v3924, 0
    %4118 = vmatprep.subr.bf16.mxu0 0
    %4119 = vmatpush1.bf16.msra.mxu0 %v4116
    %4120 = vmatprep.subr.bf16.mxu0 0
    %4121 = vmatpush1.bf16.msra.mxu0 0
    %4122 = vmatprep.subr.bf16.mxu0 0
    %4123 = vmatpush1.bf16.msra.mxu0 0
    %4124 = vmatprep.subr.bf16.mxu0 0
    %4125 = vmatpush1.bf16.msra.mxu0 0
    %4126 = vmatprep.subr.bf16.mxu0 0
    %4127 = vmatpush1.bf16.msra.mxu0 0
    %4128 = vmatprep.subr.bf16.mxu0 0
    %4129 = vmatpush1.bf16.msra.mxu0 0
    %4130 = vmatprep.subr.bf16.mxu0 0
    %4131 = vmatpush1.bf16.msra.mxu0 0
    %4132 = vmatprep.subr.bf16.mxu0 0
    %4133 = vmatpush1.bf16.msra.mxu0 0
    %4134 = vmatprep.subr.bf16.mxu0 0
    %4135 = vmatpush1.bf16.msra.mxu0 0
    %4136 = vmatprep.subr.bf16.mxu0 0
    %4137 = vmatpush1.bf16.msra.mxu0 0
    %4138 = vmatprep.subr.bf16.mxu0 0
    %4139 = vmatpush1.bf16.msra.mxu0 0
    %4140 = vmatprep.subr.bf16.mxu0 0
    %4141 = vmatpush1.bf16.msra.mxu0 0
    %4142 = vmatprep.subr.bf16.mxu0 0
    %4143 = vmatpush1.bf16.msra.mxu0 0
    %4144 = vmatprep.subr.bf16.mxu0 0
    %4145 = vmatpush1.bf16.msra.mxu0 0
    %4146 = vmatprep.subr.bf16.mxu0 0
    %4147 = vmatpush1.bf16.msra.mxu0 0
    %4148 = vmatprep.subr.bf16.mxu0 0
    %4149 = vmatpush1.bf16.msra.mxu0 0
    %4150 = vmatprep.mubr.bf16.mxu0 0
    %4151 = vmatmul.mubr.bf16.gmra.mrb[0].mxu0 %v4113
    %v4152 = vpop.f32.mrb[0].mxu0
    %v4153 = vadd.f32 0.0, %v4152
    %v4154 = vpop.f32.mrb[0].mxu0
    %v4155 = vpop.f32.mrb[0].mxu0
    %v4156 = vpop.f32.mrb[0].mxu0
    %4157 = vdwg.mxu0
    %v4159 = vsel %vm1030, %v3917, 0
    %v4162 = vsel %vm1506, %v3925, 0
    %4164 = vmatprep.subr.bf16.mxu0 0
    %4165 = vmatpush1.bf16.msra.mxu0 %v4162
    %4166 = vmatprep.subr.bf16.mxu0 0
    %4167 = vmatpush1.bf16.msra.mxu0 0
    %4168 = vmatprep.subr.bf16.mxu0 0
    %4169 = vmatpush1.bf16.msra.mxu0 0
    %4170 = vmatprep.subr.bf16.mxu0 0
    %4171 = vmatpush1.bf16.msra.mxu0 0
    %4172 = vmatprep.subr.bf16.mxu0 0
    %4173 = vmatpush1.bf16.msra.mxu0 0
    %4174 = vmatprep.subr.bf16.mxu0 0
    %4175 = vmatpush1.bf16.msra.mxu0 0
    %4176 = vmatprep.subr.bf16.mxu0 0
    %4177 = vmatpush1.bf16.msra.mxu0 0
    %4178 = vmatprep.subr.bf16.mxu0 0
    %4179 = vmatpush1.bf16.msra.mxu0 0
    %4180 = vmatprep.subr.bf16.mxu0 0
    %4181 = vmatpush1.bf16.msra.mxu0 0
    %4182 = vmatprep.subr.bf16.mxu0 0
    %4183 = vmatpush1.bf16.msra.mxu0 0
    %4184 = vmatprep.subr.bf16.mxu0 0
    %4185 = vmatpush1.bf16.msra.mxu0 0
    %4186 = vmatprep.subr.bf16.mxu0 0
    %4187 = vmatpush1.bf16.msra.mxu0 0
    %4188 = vmatprep.subr.bf16.mxu0 0
    %4189 = vmatpush1.bf16.msra.mxu0 0
    %4190 = vmatprep.subr.bf16.mxu0 0
    %4191 = vmatpush1.bf16.msra.mxu0 0
    %4192 = vmatprep.subr.bf16.mxu0 0
    %4193 = vmatpush1.bf16.msra.mxu0 0
    %4194 = vmatprep.subr.bf16.mxu0 0
    %4195 = vmatpush1.bf16.msra.mxu0 0
    %4196 = vmatprep.mubr.bf16.mxu0 0
    %4197 = vmatmul.mubr.bf16.gmra.mrb[0].mxu0 %v4159
    %v4198 = vpop.f32.mrb[0].mxu0
    %v4199 = vadd.f32 0.0, %v4198
    %v4200 = vpop.f32.mrb[0].mxu0
    %v4201 = vpop.f32.mrb[0].mxu0
    %v4202 = vpop.f32.mrb[0].mxu0
    %4203 = vdwg.mxu0
    %v4205 = vsel %vm1030, %v3918, 0
    %v4208 = vsel %vm1506, %v3926, 0
    %4210 = vmatprep.subr.bf16.mxu0 0
    %4211 = vmatpush1.bf16.msra.mxu0 %v4208
    %4212 = vmatprep.subr.bf16.mxu0 0
    %4213 = vmatpush1.bf16.msra.mxu0 0
    %4214 = vmatprep.subr.bf16.mxu0 0
    %4215 = vmatpush1.bf16.msra.mxu0 0
    %4216 = vmatprep.subr.bf16.mxu0 0
    %4217 = vmatpush1.bf16.msra.mxu0 0
    %4218 = vmatprep.subr.bf16.mxu0 0
    %4219 = vmatpush1.bf16.msra.mxu0 0
    %4220 = vmatprep.subr.bf16.mxu0 0
    %4221 = vmatpush1.bf16.msra.mxu0 0
    %4222 = vmatprep.subr.bf16.mxu0 0
    %4223 = vmatpush1.bf16.msra.mxu0 0
    %4224 = vmatprep.subr.bf16.mxu0 0
    %4225 = vmatpush1.bf16.msra.mxu0 0
    %4226 = vmatprep.subr.bf16.mxu0 0
    %4227 = vmatpush1.bf16.msra.mxu0 0
    %4228 = vmatprep.subr.bf16.mxu0 0
    %4229 = vmatpush1.bf16.msra.mxu0 0
    %4230 = vmatprep.subr.bf16.mxu0 0
    %4231 = vmatpush1.bf16.msra.mxu0 0
    %4232 = vmatprep.subr.bf16.mxu0 0
    %4233 = vmatpush1.bf16.msra.mxu0 0
    %4234 = vmatprep.subr.bf16.mxu0 0
    %4235 = vmatpush1.bf16.msra.mxu0 0
    %4236 = vmatprep.subr.bf16.mxu0 0
    %4237 = vmatpush1.bf16.msra.mxu0 0
    %4238 = vmatprep.subr.bf16.mxu0 0
    %4239 = vmatpush1.bf16.msra.mxu0 0
    %4240 = vmatprep.subr.bf16.mxu0 0
    %4241 = vmatpush1.bf16.msra.mxu0 0
    %4242 = vmatprep.mubr.bf16.mxu0 0
    %4243 = vmatmul.mubr.bf16.gmra.mrb[0].mxu0 %v4205
    %v4244 = vpop.f32.mrb[0].mxu0
    %v4245 = vadd.f32 0.0, %v4244
    %v4246 = vpop.f32.mrb[0].mxu0
    %v4247 = vpop.f32.mrb[0].mxu0
    %v4248 = vpop.f32.mrb[0].mxu0
    %4249 = vdwg.mxu0
    %v4251 = vsel %vm1030, %v3919, 0
    %v4254 = vsel %vm1506, %v3927, 0
    %4256 = vmatprep.subr.bf16.mxu0 0
    %4257 = vmatpush1.bf16.msra.mxu0 %v4254
    %4258 = vmatprep.subr.bf16.mxu0 0
    %4259 = vmatpush1.bf16.msra.mxu0 0
    %4260 = vmatprep.subr.bf16.mxu0 0
    %4261 = vmatpush1.bf16.msra.mxu0 0
    %4262 = vmatprep.subr.bf16.mxu0 0
    %4263 = vmatpush1.bf16.msra.mxu0 0
    %4264 = vmatprep.subr.bf16.mxu0 0
    %4265 = vmatpush1.bf16.msra.mxu0 0
    %4266 = vmatprep.subr.bf16.mxu0 0
    %4267 = vmatpush1.bf16.msra.mxu0 0
    %4268 = vmatprep.subr.bf16.mxu0 0
    %4269 = vmatpush1.bf16.msra.mxu0 0
    %4270 = vmatprep.subr.bf16.mxu0 0
    %4271 = vmatpush1.bf16.msra.mxu0 0
    %4272 = vmatprep.subr.bf16.mxu0 0
    %4273 = vmatpush1.bf16.msra.mxu0 0
    %4274 = vmatprep.subr.bf16.mxu0 0
    %4275 = vmatpush1.bf16.msra.mxu0 0
    %4276 = vmatprep.subr.bf16.mxu0 0
    %4277 = vmatpush1.bf16.msra.mxu0 0
    %4278 = vmatprep.subr.bf16.mxu0 0
    %4279 = vmatpush1.bf16.msra.mxu0 0
    %4280 = vmatprep.subr.bf16.mxu0 0
    %4281 = vmatpush1.bf16.msra.mxu0 0
    %4282 = vmatprep.subr.bf16.mxu0 0
    %4283 = vmatpush1.bf16.msra.mxu0 0
    %4284 = vmatprep.subr.bf16.mxu0 0
    %4285 = vmatpush1.bf16.msra.mxu0 0
    %4286 = vmatprep.subr.bf16.mxu0 0
    %4287 = vmatpush1.bf16.msra.mxu0 0
    %4288 = vmatprep.mubr.bf16.mxu0 0
    %4289 = vmatmul.mubr.bf16.gmra.mrb[0].mxu0 %v4251
    %v4290 = vpop.f32.mrb[0].mxu0
    %v4291 = vadd.f32 0.0, %v4290
    %v4292 = vpop.f32.mrb[0].mxu0
    %v4293 = vpop.f32.mrb[0].mxu0
    %v4294 = vpop.f32.mrb[0].mxu0
    %4295 = vdwg.mxu0
    %v4296 = vcombine.low %v3969, %v4061
    %v4297 = vcombine.high %v3969, %v4061
    %v4299 = vunpack.c.l.s4 1983009808
    %v4300 = vunpack.c.0.s8 %v4299
    %v4301 = vlaneseq
    %v4302 = vshrl.u32 %v4301, 7
    %v4303 = vsub.s32 %v4300, %v4302
    %v4304 = vrot.slane %v4296, %v4303
    %v4306 = vunpack.c.l.s4 1983009808
    %v4307 = vunpack.c.0.s8 %v4306
    %v4308 = vlaneseq
    %v4309 = vshrl.u32 %v4308, 7
    %v4310 = vsub.s32 %v4307, %v4309
    %v4311 = vrot.slane %v4297, %v4310
    %v4312 = vcombine.low %v4015, %v4107
    %v4313 = vcombine.high %v4015, %v4107
    %v4315 = vunpack.c.l.s4 1983009808
    %v4316 = vunpack.c.0.s8 %v4315
    %v4317 = vlaneseq
    %v4318 = vshrl.u32 %v4317, 7
    %v4319 = vsub.s32 %v4316, %v4318
    %v4320 = vrot.slane %v4312, %v4319
    %v4322 = vunpack.c.l.s4 1983009808
    %v4323 = vunpack.c.0.s8 %v4322
    %v4324 = vlaneseq
    %v4325 = vshrl.u32 %v4324, 7
    %v4326 = vsub.s32 %v4323, %v4325
    %v4327 = vrot.slane %v4313, %v4326
    %v4328 = vcombine.low %v4304, %v4320
    %v4329 = vcombine.high %v4304, %v4320
    %v4331 = vunpack.c.l.s4 1934713408
    %v4332 = vunpack.c.0.s8 %v4331
    %v4333 = vlaneseq
    %v4334 = vshrl.u32 %v4333, 7
    %v4335 = vsub.s32 %v4332, %v4334
    %v4336 = vrot.slane %v4328, %v4335
    %v4338 = vunpack.c.l.s4 1934713408
    %v4339 = vunpack.c.0.s8 %v4338
    %v4340 = vlaneseq
    %v4341 = vshrl.u32 %v4340, 7
    %v4342 = vsub.s32 %v4339, %v4341
    %v4343 = vrot.slane %v4329, %v4342
    %v4344 = vcombine.low %v4311, %v4327
    %v4345 = vcombine.high %v4311, %v4327
    %v4347 = vunpack.c.l.s4 1934713408
    %v4348 = vunpack.c.0.s8 %v4347
    %v4349 = vlaneseq
    %v4350 = vshrl.u32 %v4349, 7
    %v4351 = vsub.s32 %v4348, %v4350
    %v4352 = vrot.slane %v4344, %v4351
    %v4354 = vunpack.c.l.s4 1934713408
    %v4355 = vunpack.c.0.s8 %v4354
    %v4356 = vlaneseq
    %v4357 = vshrl.u32 %v4356, 7
    %v4358 = vsub.s32 %v4355, %v4357
    %v4359 = vrot.slane %v4345, %v4358
    %v4360 = vcombine.high %v4336, 0.0
    %v4361 = vcombine.high %v4343, 0.0
    %v4362 = vcombine.high %v4352, 0.0
    %v4363 = vcombine.high %v4359, 0.0
    %v4364 = vcombine.low %v4153, %v4245
    %v4365 = vcombine.high %v4153, %v4245
    %v4367 = vunpack.c.l.s4 1983009808
    %v4368 = vunpack.c.0.s8 %v4367
    %v4369 = vlaneseq
    %v4370 = vshrl.u32 %v4369, 7
    %v4371 = vsub.s32 %v4368, %v4370
    %v4372 = vrot.slane %v4364, %v4371
    %v4374 = vunpack.c.l.s4 1983009808
    %v4375 = vunpack.c.0.s8 %v4374
    %v4376 = vlaneseq
    %v4377 = vshrl.u32 %v4376, 7
    %v4378 = vsub.s32 %v4375, %v4377
    %v4379 = vrot.slane %v4365, %v4378
    %v4380 = vcombine.low %v4199, %v4291
    %v4381 = vcombine.high %v4199, %v4291
    %v4383 = vunpack.c.l.s4 1983009808
    %v4384 = vunpack.c.0.s8 %v4383
    %v4385 = vlaneseq
    %v4386 = vshrl.u32 %v4385, 7
    %v4387 = vsub.s32 %v4384, %v4386
    %v4388 = vrot.slane %v4380, %v4387
    %v4390 = vunpack.c.l.s4 1983009808
    %v4391 = vunpack.c.0.s8 %v4390
    %v4392 = vlaneseq
    %v4393 = vshrl.u32 %v4392, 7
    %v4394 = vsub.s32 %v4391, %v4393
    %v4395 = vrot.slane %v4381, %v4394
    %v4396 = vcombine.low %v4372, %v4388
    %v4397 = vcombine.high %v4372, %v4388
    %v4399 = vunpack.c.l.s4 1934713408
    %v4400 = vunpack.c.0.s8 %v4399
    %v4401 = vlaneseq
    %v4402 = vshrl.u32 %v4401, 7
    %v4403 = vsub.s32 %v4400, %v4402
    %v4404 = vrot.slane %v4396, %v4403
    %v4406 = vunpack.c.l.s4 1934713408
    %v4407 = vunpack.c.0.s8 %v4406
    %v4408 = vlaneseq
    %v4409 = vshrl.u32 %v4408, 7
    %v4410 = vsub.s32 %v4407, %v4409
    %v4411 = vrot.slane %v4397, %v4410
    %v4412 = vcombine.low %v4379, %v4395
    %v4413 = vcombine.high %v4379, %v4395
    %v4415 = vunpack.c.l.s4 1934713408
    %v4416 = vunpack.c.0.s8 %v4415
    %v4417 = vlaneseq
    %v4418 = vshrl.u32 %v4417, 7
    %v4419 = vsub.s32 %v4416, %v4418
    %v4420 = vrot.slane %v4412, %v4419
    %v4422 = vunpack.c.l.s4 1934713408
    %v4423 = vunpack.c.0.s8 %v4422
    %v4424 = vlaneseq
    %v4425 = vshrl.u32 %v4424, 7
    %v4426 = vsub.s32 %v4423, %v4425
    %v4427 = vrot.slane %v4413, %v4426
    %v4428 = vcombine.high %v4404, 0.0
    %v4429 = vcombine.high %v4411, 0.0
    %v4430 = vcombine.high %v4420, 0.0
    %v4431 = vcombine.high %v4427, 0.0
    %v4432 = vcombine.low %v4336, %v4343
    %v4434 = vunpack.c.l.s4 1983009808
    %v4435 = vunpack.c.0.s8 %v4434
    %v4436 = vlaneseq
    %v4437 = vshrl.u32 %v4436, 7
    %v4438 = vsub.s32 %v4435, %v4437
    %v4439 = vrot.slane %v4432, %v4438
    %v4440 = vcombine.low %v4360, %v4361
    %v4442 = vunpack.c.l.s4 1983009808
    %v4443 = vunpack.c.0.s8 %v4442
    %v4444 = vlaneseq
    %v4445 = vshrl.u32 %v4444, 7
    %v4446 = vsub.s32 %v4443, %v4445
    %v4447 = vrot.slane %v4440, %v4446
    %v4448 = vcombine.low %v4352, %v4359
    %v4450 = vunpack.c.l.s4 1983009808
    %v4451 = vunpack.c.0.s8 %v4450
    %v4452 = vlaneseq
    %v4453 = vshrl.u32 %v4452, 7
    %v4454 = vsub.s32 %v4451, %v4453
    %v4455 = vrot.slane %v4448, %v4454
    %v4456 = vcombine.low %v4362, %v4363
    %v4458 = vunpack.c.l.s4 1983009808
    %v4459 = vunpack.c.0.s8 %v4458
    %v4460 = vlaneseq
    %v4461 = vshrl.u32 %v4460, 7
    %v4462 = vsub.s32 %v4459, %v4461
    %v4463 = vrot.slane %v4456, %v4462
    %v4464 = vcombine.low %v4439, %v4447
    %v4465 = vcombine.high %v4439, %v4447
    %v4467 = vunpack.c.l.s4 1934713408
    %v4468 = vunpack.c.0.s8 %v4467
    %v4469 = vlaneseq
    %v4470 = vshrl.u32 %v4469, 7
    %v4471 = vsub.s32 %v4468, %v4470
    %v4472 = vrot.slane %v4464, %v4471
    %v4474 = vunpack.c.l.s4 1934713408
    %v4475 = vunpack.c.0.s8 %v4474
    %v4476 = vlaneseq
    %v4477 = vshrl.u32 %v4476, 7
    %v4478 = vsub.s32 %v4475, %v4477
    %v4479 = vrot.slane %v4465, %v4478
    %v4480 = vcombine.low %v4455, %v4463
    %v4481 = vcombine.high %v4455, %v4463
    %v4483 = vunpack.c.l.s4 1934713408
    %v4484 = vunpack.c.0.s8 %v4483
    %v4485 = vlaneseq
    %v4486 = vshrl.u32 %v4485, 7
    %v4487 = vsub.s32 %v4484, %v4486
    %v4488 = vrot.slane %v4480, %v4487
    %v4490 = vunpack.c.l.s4 1934713408
    %v4491 = vunpack.c.0.s8 %v4490
    %v4492 = vlaneseq
    %v4493 = vshrl.u32 %v4492, 7
    %v4494 = vsub.s32 %v4491, %v4493
    %v4495 = vrot.slane %v4481, %v4494
    %v4496 = vcombine.low %v4472, %v4488
    %v4497 = vcombine.high %v4472, %v4488
    %v4498 = vcombine.low %v4479, %v4495
    %v4499 = vcombine.high %v4479, %v4495
    %v4500 = vcombine.low %v4404, %v4411
    %v4502 = vunpack.c.l.s4 1983009808
    %v4503 = vunpack.c.0.s8 %v4502
    %v4504 = vlaneseq
    %v4505 = vshrl.u32 %v4504, 7
    %v4506 = vsub.s32 %v4503, %v4505
    %v4507 = vrot.slane %v4500, %v4506
    %v4508 = vcombine.low %v4428, %v4429
    %v4510 = vunpack.c.l.s4 1983009808
    %v4511 = vunpack.c.0.s8 %v4510
    %v4512 = vlaneseq
    %v4513 = vshrl.u32 %v4512, 7
    %v4514 = vsub.s32 %v4511, %v4513
    %v4515 = vrot.slane %v4508, %v4514
    %v4516 = vcombine.low %v4420, %v4427
    %v4518 = vunpack.c.l.s4 1983009808
    %v4519 = vunpack.c.0.s8 %v4518
    %v4520 = vlaneseq
    %v4521 = vshrl.u32 %v4520, 7
    %v4522 = vsub.s32 %v4519, %v4521
    %v4523 = vrot.slane %v4516, %v4522
    %v4524 = vcombine.low %v4430, %v4431
    %v4526 = vunpack.c.l.s4 1983009808
    %v4527 = vunpack.c.0.s8 %v4526
    %v4528 = vlaneseq
    %v4529 = vshrl.u32 %v4528, 7
    %v4530 = vsub.s32 %v4527, %v4529
    %v4531 = vrot.slane %v4524, %v4530
    %v4532 = vcombine.low %v4507, %v4515
    %v4533 = vcombine.high %v4507, %v4515
    %v4535 = vunpack.c.l.s4 1934713408
    %v4536 = vunpack.c.0.s8 %v4535
    %v4537 = vlaneseq
    %v4538 = vshrl.u32 %v4537, 7
    %v4539 = vsub.s32 %v4536, %v4538
    %v4540 = vrot.slane %v4532, %v4539
    %v4542 = vunpack.c.l.s4 1934713408
    %v4543 = vunpack.c.0.s8 %v4542
    %v4544 = vlaneseq
    %v4545 = vshrl.u32 %v4544, 7
    %v4546 = vsub.s32 %v4543, %v4545
    %v4547 = vrot.slane %v4533, %v4546
    %v4548 = vcombine.low %v4523, %v4531
    %v4549 = vcombine.high %v4523, %v4531
    %v4551 = vunpack.c.l.s4 1934713408
    %v4552 = vunpack.c.0.s8 %v4551
    %v4553 = vlaneseq
    %v4554 = vshrl.u32 %v4553, 7
    %v4555 = vsub.s32 %v4552, %v4554
    %v4556 = vrot.slane %v4548, %v4555
    %v4558 = vunpack.c.l.s4 1934713408
    %v4559 = vunpack.c.0.s8 %v4558
    %v4560 = vlaneseq
    %v4561 = vshrl.u32 %v4560, 7
    %v4562 = vsub.s32 %v4559, %v4561
    %v4563 = vrot.slane %v4549, %v4562
    %v4564 = vcombine.low %v4540, %v4556
    %v4565 = vcombine.high %v4540, %v4556
    %v4566 = vcombine.low %v4547, %v4563
    %v4567 = vcombine.high %v4547, %v4563
    %4570 = vrot.lane.b32.xlu0 %v4497, 8
    %v4571 = vpop.permute.xlu0 %4570
    %4572 = vrot.lane.b32.xlu0 %v4565, 8
    %v4573 = vpop.permute.xlu0 %4572
    %4578 = vrot.lane.b32.xlu0 %v4498, 16
    %v4579 = vpop.permute.xlu0 %4578
    %4580 = vrot.lane.b32.xlu0 %v4566, 16
    %v4581 = vpop.permute.xlu0 %4580
    %4586 = vrot.lane.b32.xlu0 %v4499, 24
    %v4587 = vpop.permute.xlu0 %4586
    %4588 = vrot.lane.b32.xlu0 %v4567, 24
    %v4589 = vpop.permute.xlu0 %4588
    %v4592 = vsel %vm1030, %v4496, %v4571
    %v4593 = vsel %vm1030, %v4564, %v4573
    %v4594 = vsel %vm2170, %v4592, %v4579
    %v4595 = vsel %vm2170, %v4593, %v4581
    %v4596 = vsel %vm2173, %v4594, %v4587
    %v4597 = vsel %vm2173, %v4595, %v4589
    %v4598 = vpack.c.bf16 %v4597, %v4596
    %v4603 = vunpack.c.l.b16 %v2487
    %v4604 = vunpack.c.l.b16 %v2488
    %v4605 = vunpack.c.l.b16 %v2489
    %v4606 = vunpack.c.l.b16 %v2490
    %v4607 = vpack.c.b16 %v4604, %v4603
    %v4608 = vpack.c.b16 %v4606, %v4605
    %v4612 = vsel %vm77, %v4598, 0
    %4614 = vmatprep.subr.bf16.mxu0 0
    %4615 = vmatpush1.bf16.msra.mxu0 %v4607
    %4616 = vmatprep.subr.bf16.mxu0 0
    %4617 = vmatpush1.bf16.msra.mxu0 %v4608
    %4618 = vmatprep.subr.bf16.mxu0 0
    %4619 = vmatpush1.bf16.msra.mxu0 0
    %4620 = vmatprep.subr.bf16.mxu0 0
    %4621 = vmatpush1.bf16.msra.mxu0 0
    %4622 = vmatprep.subr.bf16.mxu0 0
    %4623 = vmatpush1.bf16.msra.mxu0 0
    %4624 = vmatprep.subr.bf16.mxu0 0
    %4625 = vmatpush1.bf16.msra.mxu0 0
    %4626 = vmatprep.subr.bf16.mxu0 0
    %4627 = vmatpush1.bf16.msra.mxu0 0
    %4628 = vmatprep.subr.bf16.mxu0 0
    %4629 = vmatpush1.bf16.msra.mxu0 0
    %4630 = vmatprep.subr.bf16.mxu0 0
    %4631 = vmatpush1.bf16.msra.mxu0 0
    %4632 = vmatprep.subr.bf16.mxu0 0
    %4633 = vmatpush1.bf16.msra.mxu0 0
    %4634 = vmatprep.subr.bf16.mxu0 0
    %4635 = vmatpush1.bf16.msra.mxu0 0
    %4636 = vmatprep.subr.bf16.mxu0 0
    %4637 = vmatpush1.bf16.msra.mxu0 0
    %4638 = vmatprep.subr.bf16.mxu0 0
    %4639 = vmatpush1.bf16.msra.mxu0 0
    %4640 = vmatprep.subr.bf16.mxu0 0
    %4641 = vmatpush1.bf16.msra.mxu0 0
    %4642 = vmatprep.subr.bf16.mxu0 0
    %4643 = vmatpush1.bf16.msra.mxu0 0
    %4644 = vmatprep.subr.bf16.mxu0 0
    %4645 = vmatpush1.bf16.msra.mxu0 0
    %4646 = vmatprep.mubr.bf16.mxu0 0
    %4647 = vmatmul.mubr.bf16.gmra.mrb[0].mxu0 %v4612
    %v4648 = vpop.f32.mrb[0].mxu0
    %v4649 = vadd.f32 0.0, %v4648
    %v4650 = vpop.f32.mrb[0].mxu0
    %v4651 = vpop.f32.mrb[0].mxu0
    %v4652 = vadd.f32 0.0, %v4651
    %v4653 = vpop.f32.mrb[0].mxu0
    %4654 = vdwg.mxu0
    %v4655 = vadd.f32 %v2479, %v4649
    %v4656 = vadd.f32 %v2480, %v4652
    %s4657 = scalar_lea.vmem %s3, 1
    %v4658 = vld [vmem:[%s4657] sm:$0x1]
    %s4659 = scalar_lea.vmem %s4, 1
    %v4660 = vld [vmem:[%s4659] sm:$0x1]
    %v4661 = vsel %vm77, %v4655, 0.0
    %4662 = vadd.xlane.f32.xlu0 %v4661
    %v4663 = vpop.xlane.xlu0 %4662
    %v4664 = vsel %vm77, %v4656, 0.0
    %4665 = vadd.xlane.f32.xlu0 %v4664
    %v4666 = vpop.xlane.xlu0 %4665
    %v4667 = vmul.f32 %v4663, %v2243
    %v4668 = vmul.f32 %v4666, %v2243
    %v4669 = vsub.f32 %v4655, %v4667
    %v4670 = vsub.f32 %v4656, %v4668
    %v4671 = vmul.f32 %v4669, %v4669
    %v4672 = vmul.f32 %v4670, %v4670
    %v4673 = vsel %vm77, %v4671, 0.0
    %4674 = vadd.xlane.f32.xlu0 %v4673
    %v4675 = vpop.xlane.xlu0 %4674
    %v4676 = vsel %vm77, %v4672, 0.0
    %4677 = vadd.xlane.f32.xlu0 %v4676
    %v4678 = vpop.xlane.xlu0 %4677
    %v4679 = vmul.f32 %v4675, %v2243
    %v4680 = vmul.f32 %v4678, %v2243
    %v4681 = vadd.f32 %v4679, 1e-05
    %v4682 = vadd.f32 %v4680, 1e-05
    %v4683 = vrsqrt.pop %v4681
    %v4684 = vrsqrt.pop %v4682
    %v4685 = vmul.f32 %v4669, %v4683
    %v4686 = vmul.f32 %v4670, %v4684
    %v4688 = vlaneseq
    %v4689 = vshrl.u32 %v4688, 7
    %v4690 = vsub.s32 0, %v4689
    %v4691 = vrot.slane %v4658, %v4690
    %v4693 = vmul.f32 %v4685, %v4691
    %v4694 = vmul.f32 %v4686, %v4691
    %v4696 = vlaneseq
    %v4697 = vshrl.u32 %v4696, 7
    %v4698 = vsub.s32 0, %v4697
    %v4699 = vrot.slane %v4660, %v4698
    %v4701 = vadd.f32 %v4693, %v4699
    %v4702 = vadd.f32 %v4694, %v4699
    %v4703 = vpack.c.bf16 %v4702, %v4701
    %s4704 = scalar_lea.vmem %s5, 16
    %v4705 = vld [vmem:[%s4704] sm:$0xf]
    %v4706 = vld [vmem:[%s4704 + $0x4] sm:$0xf]
    %v4707 = vld [vmem:[%s4704 + $0x8] sm:$0xf]
    %v4708 = vld [vmem:[%s4704 + $0xc] sm:$0xf]
    %s4709 = scalar_lea.vmem %s6, 1
    %v4710 = vld [vmem:[%s4709] sm:$0x1]
    %v4712 = vlaneseq
    %v4713 = vshrl.u32 %v4712, 7
    %v4714 = vsub.s32 0, %v4713
    %v4715 = vrot.slane %v4710, %v4714
    %v4721 = vunpack.c.l.b16 %v4705
    %v4722 = vunpack.c.l.b16 %v4706
    %v4723 = vunpack.c.l.b16 %v4707
    %v4724 = vunpack.c.l.b16 %v4708
    %v4725 = vpack.c.b16 %v4722, %v4721
    %v4726 = vpack.c.b16 %v4724, %v4723
    %v4730 = vsel %vm77, %v4703, 0
    %4732 = vmatprep.subr.bf16.mxu0 0
    %4733 = vmatpush1.bf16.msra.mxu0 %v4725
    %4734 = vmatprep.subr.bf16.mxu0 0
    %4735 = vmatpush1.bf16.msra.mxu0 %v4726
    %4736 = vmatprep.subr.bf16.mxu0 0
    %4737 = vmatpush1.bf16.msra.mxu0 0
    %4738 = vmatprep.subr.bf16.mxu0 0
    %4739 = vmatpush1.bf16.msra.mxu0 0
    %4740 = vmatprep.subr.bf16.mxu0 0
    %4741 = vmatpush1.bf16.msra.mxu0 0
    %4742 = vmatprep.subr.bf16.mxu0 0
    %4743 = vmatpush1.bf16.msra.mxu0 0
    %4744 = vmatprep.subr.bf16.mxu0 0
    %4745 = vmatpush1.bf16.msra.mxu0 0
    %4746 = vmatprep.subr.bf16.mxu0 0
    %4747 = vmatpush1.bf16.msra.mxu0 0
    %4748 = vmatprep.subr.bf16.mxu0 0
    %4749 = vmatpush1.bf16.msra.mxu0 0
    %4750 = vmatprep.subr.bf16.mxu0 0
    %4751 = vmatpush1.bf16.msra.mxu0 0
    %4752 = vmatprep.subr.bf16.mxu0 0
    %4753 = vmatpush1.bf16.msra.mxu0 0
    %4754 = vmatprep.subr.bf16.mxu0 0
    %4755 = vmatpush1.bf16.msra.mxu0 0
    %4756 = vmatprep.subr.bf16.mxu0 0
    %4757 = vmatpush1.bf16.msra.mxu0 0
    %4758 = vmatprep.subr.bf16.mxu0 0
    %4759 = vmatpush1.bf16.msra.mxu0 0
    %4760 = vmatprep.subr.bf16.mxu0 0
    %4761 = vmatpush1.bf16.msra.mxu0 0
    %4762 = vmatprep.subr.bf16.mxu0 0
    %4763 = vmatpush1.bf16.msra.mxu0 0
    %4764 = vmatprep.mubr.bf16.mxu0 0
    %4765 = vmatmul.mubr.bf16.gmra.mrb[0].mxu0 %v4730
    %v4766 = vpop.f32.mrb[0].mxu0
    %v4767 = vadd.f32 %v4715, %v4766
    %v4768 = vpop.f32.mrb[0].mxu0
    %v4769 = vpop.f32.mrb[0].mxu0
    %v4770 = vadd.f32 %v4715, %v4769
    %v4771 = vpop.f32.mrb[0].mxu0
    %4772 = vdwg.mxu0
    %v4773 = vmax.f32 %v4767, 0.0
    %v4774 = vmax.f32 %v4770, 0.0
    %v4775 = vpack.c.bf16 %v4774, %v4773
    %s4776 = scalar_lea.vmem %s7, 32
    %v4777 = vld [vmem:[%s4776] sm:$0xf]
    %v4778 = vld [vmem:[%s4776 + $0x4] sm:$0xf]
    %v4779 = vld [vmem:[%s4776 + $0x8] sm:$0xf]
    %v4780 = vld [vmem:[%s4776 + $0xc] sm:$0xf]
    %v4781 = vld [vmem:[%s4776 + $0x10] sm:$0xf]
    %v4782 = vld [vmem:[%s4776 + $0x14] sm:$0xf]
    %v4783 = vld [vmem:[%s4776 + $0x18] sm:$0xf]
    %v4784 = vld [vmem:[%s4776 + $0x1c] sm:$0xf]
    %s4785 = scalar_lea.vmem %s8, 1
    %v4786 = vld [vmem:[%s4785] sm:$0x1]
    %v4788 = vlaneseq
    %v4789 = vshrl.u32 %v4788, 7
    %v4790 = vsub.s32 0, %v4789
    %v4791 = vrot.slane %v4786, %v4790
    %v4801 = vunpack.c.l.b16 %v4777
    %v4802 = vunpack.c.l.b16 %v4778
    %v4803 = vunpack.c.l.b16 %v4779
    %v4804 = vunpack.c.l.b16 %v4780
    %v4805 = vunpack.c.l.b16 %v4781
    %v4806 = vunpack.c.l.b16 %v4782
    %v4807 = vunpack.c.l.b16 %v4783
    %v4808 = vunpack.c.l.b16 %v4784
    %v4809 = vpack.c.b16 %v4802, %v4801
    %v4810 = vpack.c.b16 %v4804, %v4803
    %v4811 = vpack.c.b16 %v4806, %v4805
    %v4812 = vpack.c.b16 %v4808, %v4807
    %v4818 = vsel %vm2390, %v4775, 0
    %4820 = vmatprep.subr.bf16.mxu0 0
    %4821 = vmatpush1.bf16.msra.mxu0 %v4809
    %4822 = vmatprep.subr.bf16.mxu0 0
    %4823 = vmatpush1.bf16.msra.mxu0 %v4810
    %4824 = vmatprep.subr.bf16.mxu0 0
    %4825 = vmatpush1.bf16.msra.mxu0 %v4811
    %4826 = vmatprep.subr.bf16.mxu0 0
    %4827 = vmatpush1.bf16.msra.mxu0 %v4812
    %4828 = vmatprep.subr.bf16.mxu0 0
    %4829 = vmatpush1.bf16.msra.mxu0 0
    %4830 = vmatprep.subr.bf16.mxu0 0
    %4831 = vmatpush1.bf16.msra.mxu0 0
    %4832 = vmatprep.subr.bf16.mxu0 0
    %4833 = vmatpush1.bf16.msra.mxu0 0
    %4834 = vmatprep.subr.bf16.mxu0 0
    %4835 = vmatpush1.bf16.msra.mxu0 0
    %4836 = vmatprep.subr.bf16.mxu0 0
    %4837 = vmatpush1.bf16.msra.mxu0 0
    %4838 = vmatprep.subr.bf16.mxu0 0
    %4839 = vmatpush1.bf16.msra.mxu0 0
    %4840 = vmatprep.subr.bf16.mxu0 0
    %4841 = vmatpush1.bf16.msra.mxu0 0
    %4842 = vmatprep.subr.bf16.mxu0 0
    %4843 = vmatpush1.bf16.msra.mxu0 0
    %4844 = vmatprep.subr.bf16.mxu0 0
    %4845 = vmatpush1.bf16.msra.mxu0 0
    %4846 = vmatprep.subr.bf16.mxu0 0
    %4847 = vmatpush1.bf16.msra.mxu0 0
    %4848 = vmatprep.subr.bf16.mxu0 0
    %4849 = vmatpush1.bf16.msra.mxu0 0
    %4850 = vmatprep.subr.bf16.mxu0 0
    %4851 = vmatpush1.bf16.msra.mxu0 0
    %4852 = vmatprep.mubr.bf16.mxu0 0
    %4853 = vmatmul.mubr.bf16.gmra.mrb[0].mxu0 %v4818
    %v4854 = vpop.f32.mrb[0].mxu0
    %v4855 = vadd.f32 %v4791, %v4854
    %v4856 = vpop.f32.mrb[0].mxu0
    %v4857 = vpop.f32.mrb[0].mxu0
    %v4858 = vadd.f32 %v4791, %v4857
    %v4859 = vpop.f32.mrb[0].mxu0
    %4860 = vdwg.mxu0
    %v4861 = vadd.f32 %v4701, %v4855
    %v4862 = vadd.f32 %v4702, %v4858
    %s4863 = scalar_lea.vmem %s9, 1
    %v4864 = vld [vmem:[%s4863] sm:$0x1]
    %s4865 = scalar_lea.vmem %s10, 1
    %v4866 = vld [vmem:[%s4865] sm:$0x1]
    %v4867 = vsel %vm77, %v4861, 0.0
    %4868 = vadd.xlane.f32.xlu0 %v4867
    %v4869 = vpop.xlane.xlu0 %4868
    %v4870 = vsel %vm77, %v4862, 0.0
    %4871 = vadd.xlane.f32.xlu0 %v4870
    %v4872 = vpop.xlane.xlu0 %4871
    %v4873 = vmul.f32 %v4869, %v2243
    %v4874 = vmul.f32 %v4872, %v2243
    %v4875 = vsub.f32 %v4861, %v4873
    %v4876 = vsub.f32 %v4862, %v4874
    %v4877 = vmul.f32 %v4875, %v4875
    %v4878 = vmul.f32 %v4876, %v4876
    %v4879 = vsel %vm77, %v4877, 0.0
    %4880 = vadd.xlane.f32.xlu0 %v4879
    %v4881 = vpop.xlane.xlu0 %4880
    %v4882 = vsel %vm77, %v4878, 0.0
    %4883 = vadd.xlane.f32.xlu0 %v4882
    %v4884 = vpop.xlane.xlu0 %4883
    %v4885 = vmul.f32 %v4881, %v2243
    %v4886 = vmul.f32 %v4884, %v2243
    %v4887 = vadd.f32 %v4885, 1e-05
    %v4888 = vadd.f32 %v4886, 1e-05
    %v4889 = vrsqrt.pop %v4887
    %v4890 = vrsqrt.pop %v4888
    %v4891 = vmul.f32 %v4875, %v4889
    %v4892 = vmul.f32 %v4876, %v4890
    %v4894 = vlaneseq
    %v4895 = vshrl.u32 %v4894, 7
    %v4896 = vsub.s32 0, %v4895
    %v4897 = vrot.slane %v4864, %v4896
    %v4899 = vmul.f32 %v4891, %v4897
    %v4900 = vmul.f32 %v4892, %v4897
    %v4902 = vlaneseq
    %v4903 = vshrl.u32 %v4902, 7
    %v4904 = vsub.s32 0, %v4903
    %v4905 = vrot.slane %v4866, %v4904
    %v4907 = vadd.f32 %v4899, %v4905
    %v4908 = vadd.f32 %v4900, %v4905
    %4909 = vst.msk [vmem:[#allocation5] sm:$0xff] %vm77, %v4907
    %4910 = vst.msk [vmem:[#allocation5 + $0x8] sm:$0xff] %vm77, %v4908
    // Predicated region
    $region50: #{tpu_custom_call.1} parent=1 // pred_check
      _
    $region51: #{tpu_custom_call.1} parent=1 // pred_check_branch
      %4912 = sbr.rel (0) target = $region53
    $region52: #{tpu_custom_call.1} parent=1 // pred_region
      %s4914 = ssub.s32 256, 256
      %4915 = vsyncadd [#allocation4], %s4914
      %s4916 = sshll.u32 [#allocation5], 4
      %s4917 = int_to_ptr.vmem [resolvable:$true] %s4916
      %4922 = dma.vmem_to_hbm [thread:$0]  %s4917, 256, %s11, [#allocation4], 128, 128, 8
    $region53: #{tpu_custom_call.1} parent=1 // pred_fallthru
      _
    // Predicated region
    $region54: #{tpu_custom_call.1} parent=1 // pred_check
      _
    $region55: #{tpu_custom_call.1} parent=1 // pred_check_branch
      %4924 = sbr.rel (0) target = $region57
    $region56: #{tpu_custom_call.1} parent=1 // pred_region
      %4925 = dma.done [#allocation4], 256
    $region57: #{tpu_custom_call.1} parent=1 // pred_fallthru
      _
    %4926 = vsyncpa [#allocation3], 1
    %4927 = vsyncpa [#allocation4], 1

</llo_original>
